<compile_context>
chip_gen: v5e
topology: v5e:2x2
jax: 0.10.0
libtpu: 0.0.40
codegen_flags: <defaults>
</compile_context>

<pallas_src>
import jax
import jax.numpy as jnp
from jax.experimental import pallas as pl
from jax.experimental.pallas import tpu as pltpu


# ---------------------------------------------------------------------------
# Kernels
# ---------------------------------------------------------------------------
def _kernel_f32_out(a_ref, b_ref, o_ref):
    """f32 output: accumulate directly into the resident output block."""
    @pl.when(pl.program_id(2) == 0)
    def _():
        o_ref[...] = jnp.zeros_like(o_ref)

    # a_ref: (tk, tm) slab of A, b_ref: (tk, tn) slab of B.  Contract over K
    # (axis 0 of both) -> (tm, tn) partial product.  This is a native
    # transposed-LHS MXU matmul; no XLU transpose is emitted.
    o_ref[...] += jax.lax.dot_general(
        a_ref[...], b_ref[...],
        dimension_numbers=(((0,), (0,)), ((), ())),
        preferred_element_type=jnp.float32,
    )


def _kernel_generic_out(a_ref, b_ref, o_ref, acc_ref):
    """Non-f32 output dtype: accumulate in f32 VMEM scratch, cast at the end."""
    @pl.when(pl.program_id(2) == 0)
    def _():
        acc_ref[...] = jnp.zeros_like(acc_ref)

    acc_ref[...] += jax.lax.dot_general(
        a_ref[...], b_ref[...],
        dimension_numbers=(((0,), (0,)), ((), ())),
        preferred_element_type=jnp.float32,
    )

    @pl.when(pl.program_id(2) == pl.num_programs(2) - 1)
    def _():
        o_ref[...] = acc_ref[...].astype(o_ref.dtype)


# ---------------------------------------------------------------------------
# Tiling helpers
# ---------------------------------------------------------------------------
_LANE_CANDIDATES = (1024, 512, 256, 128)


def _round_up(x, m):
    return ((x + m - 1) // m) * m


def _pick_tile(dim, candidates):
    """Largest candidate evenly dividing `dim`; otherwise the largest whose
    padding waste is small (< one 128-lane tile, or <= dim/8)."""
    for c in candidates:
        if c <= dim and dim % c == 0:
            return c
    best = None
    for c in candidates:
        padded = _round_up(dim, c)
        waste = padded - dim
        if waste < 128 or waste * 8 <= dim:
            return c
        if best is None or padded < best[0] or (padded == best[0] and c > best[1]):
            best = (padded, c)
    return best[1]


# ---------------------------------------------------------------------------
# Wrapper
# ---------------------------------------------------------------------------
def matmul_transposed_a(A, B, *, use_bf16_inputs=False):
    """C = A^T @ B where A is (K, M) and B is (K, N)."""
    K, M = A.shape
    K2, N = B.shape
    if K != K2:
        raise ValueError(f"inner dims must match, got A {A.shape}, B {B.shape}")

    out_dtype = jnp.result_type(A.dtype, B.dtype)
    compute_dtype = jnp.bfloat16 if use_bf16_inputs else out_dtype
    if A.dtype != compute_dtype:
        A = A.astype(compute_dtype)
    if B.dtype != compute_dtype:
        B = B.astype(compute_dtype)

    in_itemsize = jnp.dtype(compute_dtype).itemsize
    out_itemsize = jnp.dtype(out_dtype).itemsize
    sub_min = max(8, 32 // in_itemsize)        # sublane tile: 8 f32, 16 bf16, 32 int8/fp8
    out_is_f32 = jnp.dtype(out_dtype) == jnp.dtype(jnp.float32)

    # ---- tile selection ----------------------------------------------------
    tm = _pick_tile(M, _LANE_CANDIDATES)       # lane dim of A block + sublane of C
    tn = _pick_tile(N, _LANE_CANDIDATES)       # lane dim of B and C blocks
    if K <= 1024:
        # Single K step: the resident accumulator is written exactly once.
        tk = _round_up(K, sub_min)
    else:
        tk = max(_pick_tile(K, (1024, 512, 256, 128)), sub_min)

    # Dual-TensorCore (v7x) / megacore: keep the parallel block count even.
    Mp, Np = _round_up(M, tm), _round_up(N, tn)
    if ((Mp // tm) * (Np // tn)) % 2 == 1:
        if tm >= 256:
            tm //= 2
        elif tn >= 256:
            tn //= 2
        Mp, Np = _round_up(M, tm), _round_up(N, tn)
    Kp = _round_up(K, tk)

    # ---- VMEM budget ---------------------------------------------------------
    def _footprint(tm_, tn_, tk_):
        f = 2 * (tk_ * tm_ + tk_ * tn_) * in_itemsize      # double-buffered A, B
        f += 2 * tm_ * tn_ * out_itemsize                   # double-buffered C
        if not out_is_f32:
            f += tm_ * tn_ * 4                               # f32 accumulator scratch
        return f

    # Max config (tm=tn=tk=1024 f32) is 24 MiB; this loop is a safety net only.
    while _footprint(tm, tn, tk) > 28 * 1024 * 1024 and tk > max(128, sub_min):
        tk = max(tk // 2, max(128, sub_min))
        Kp = _round_up(K, tk)

    vmem_limit = int(min(max(32 * 1024 * 1024,
                             _footprint(tm, tn, tk) + 12 * 1024 * 1024),
                         48 * 1024 * 1024))

    # ---- zero padding to tile-aligned shapes (zeros don't affect the matmul) --
    if (Kp, Mp) != (K, M):
        A = jnp.pad(A, ((0, Kp - K), (0, Mp - M)))
    if (Kp, Np) != (K, N):
        B = jnp.pad(B, ((0, Kp - K), (0, Np - N)))

    grid = (Mp // tm, Np // tn, Kp // tk)
    kernel = _kernel_f32_out if out_is_f32 else _kernel_generic_out
    scratch_shapes = [] if out_is_f32 else [pltpu.VMEM((tm, tn), jnp.float32)]

    out = pl.pallas_call(
        kernel,
        out_shape=jax.ShapeDtypeStruct((Mp, Np), out_dtype),
        grid_spec=pltpu.PrefetchScalarGridSpec(
            num_scalar_prefetch=0,
            grid=grid,
            in_specs=[
                pl.BlockSpec((tk, tm), lambda i, j, k: (k, i)),   # A slab (K, M)
                pl.BlockSpec((tk, tn), lambda i, j, k: (k, j)),   # B slab (K, N)
            ],
            out_specs=pl.BlockSpec((tm, tn), lambda i, j, k: (i, j)),
            scratch_shapes=scratch_shapes,
        ),
        compiler_params=pltpu.CompilerParams(
            dimension_semantics=("parallel", "parallel", "arbitrary"),
            vmem_limit_bytes=vmem_limit,
        ),
    )(A, B)

    if (Mp, Np) != (M, N):
        out = out[:M, :N]
    return out


# ---------------------------------------------------------------------------
# Self-test
# ---------------------------------------------------------------------------
if __name__ == "__main__":
    key = jax.random.PRNGKey(0)
    k1, k2, k3, k4 = jax.random.split(key, 4)

    # Case 1: aligned shapes.  Tile picker -> tm=256 (after even-split), tn=256,
    # tk=1024, grid (2, 1, 2): exercises both parallel axes and K accumulation.
    K, M, N = 2048, 512, 256
    A = jax.random.normal(k1, (K, M), dtype=jnp.float32)
    B = jax.random.normal(k2, (K, N), dtype=jnp.float32)
    C = jax.block_until_ready(matmul_transposed_a(A, B))
    C_ref = jnp.matmul(A.T, B, precision=jax.lax.Precision.HIGHEST)
    assert C.shape == (M, N)
    assert jnp.allclose(C, C_ref, atol=2e-2, rtol=2e-3), "mismatch (aligned case)"

    # Case 2: odd / non-aligned shapes -> exercises the padding + slicing path.
    K2_, M2_, N2_ = 300, 130, 70
    A2 = jax.random.normal(k3, (K2_, M2_), dtype=jnp.float32)
    B2 = jax.random.normal(k4, (K2_, N2_), dtype=jnp.float32)
    C2 = jax.block_until_ready(matmul_transposed_a(A2, B2))
    C2_ref = jnp.matmul(A2.T, B2, precision=jax.lax.Precision.HIGHEST)
    assert C2.shape == (M2_, N2_)
    assert jnp.allclose(C2, C2_ref, atol=2e-2, rtol=2e-3), "mismatch (padded case)"

    print("KERNEL_OK")
</pallas_src>

<mosaic_0001>
module attributes {stable_mosaic.version = 11 : i64} {
  func.func @_kernel_f32_out(%arg0: i32, %arg1: i32, %arg2: i32, %arg3: memref<1024x256xf32, #tpu.memory_space<vmem>>, %arg4: memref<1024x256xf32, #tpu.memory_space<vmem>>, %arg5: memref<256x256xf32, #tpu.memory_space<vmem>>) attributes {dimension_semantics = [#tpu.dimension_semantics<parallel>, #tpu.dimension_semantics<parallel>, #tpu.dimension_semantics<arbitrary>], iteration_bounds = array<i64: 2, 1, 2>, scalar_prefetch = 0 : i64, scratch_operands = 0 : i64, tpu.core_type = #tpu.core_type<tc>, window_params = [{transform_indices = @transform_0, window_bounds = array<i64: 1024, 256>}, {transform_indices = @transform_1, window_bounds = array<i64: 1024, 256>}, {transform_indices = @transform_2, window_bounds = array<i64: 256, 256>}]} {
    %c0_i32 = arith.constant 0 : i32
    %0 = arith.cmpi eq, %arg2, %c0_i32 : i32
    %1 = arith.extui %0 : i1 to i32
    %c0_i32_0 = arith.constant 0 : i32
    %2 = arith.cmpi ne, %1, %c0_i32_0 : i32
    scf.if %2 {
      %cst_8 = arith.constant 0.000000e+00 : f32
      %9 = vector.broadcast %cst_8 : f32 to vector<256x256xf32>
      %c0_9 = arith.constant 0 : index
      %c0_10 = arith.constant 0 : index
      %10 = vector.load %arg5[%c0_9, %c0_10] : memref<256x256xf32, #tpu.memory_space<vmem>>, vector<256x256xf32>
      tpu.vector_store %arg5[%c0_9, %c0_10], %9 {strides = array<i32>} : memref<256x256xf32, #tpu.memory_space<vmem>>, vector<256x256xf32>,
    } else {
    }
    %c0 = arith.constant 0 : index
    %c0_1 = arith.constant 0 : index
    %3 = vector.load %arg5[%c0, %c0_1] : memref<256x256xf32, #tpu.memory_space<vmem>>, vector<256x256xf32>
    %c0_2 = arith.constant 0 : index
    %c0_3 = arith.constant 0 : index
    %4 = vector.load %arg3[%c0_2, %c0_3] : memref<1024x256xf32, #tpu.memory_space<vmem>>, vector<1024x256xf32>
    %c0_4 = arith.constant 0 : index
    %c0_5 = arith.constant 0 : index
    %5 = vector.load %arg4[%c0_4, %c0_5] : memref<1024x256xf32, #tpu.memory_space<vmem>>, vector<1024x256xf32>
    %cst = arith.constant dense<0.000000e+00> : vector<256x256xf32>
    %6 = tpu.matmul %4, %5, %cst {dimension_numbers = #tpu.dot_dimension_numbers<[0], [0], [1], [1], [0, 1, 1, 1], [], []>} : vector<1024x256xf32>, vector<1024x256xf32>, vector<256x256xf32> -> vector<256x256xf32>
    %7 = arith.addf %3, %6 : vector<256x256xf32>
    %c0_6 = arith.constant 0 : index
    %c0_7 = arith.constant 0 : index
    %8 = vector.load %arg5[%c0_6, %c0_7] : memref<256x256xf32, #tpu.memory_space<vmem>>, vector<256x256xf32>
    tpu.vector_store %arg5[%c0_6, %c0_7], %7 {strides = array<i32>} : memref<256x256xf32, #tpu.memory_space<vmem>>, vector<256x256xf32>,
    return
  }
  func.func @transform_0(%arg0: i32, %arg1: i32, %arg2: i32) -> (i32, i32) {
    %c0_i32 = arith.constant 0 : i32
    return %arg2, %arg0 : i32, i32
  }
  func.func @transform_1(%arg0: i32, %arg1: i32, %arg2: i32) -> (i32, i32) {
    %c0_i32 = arith.constant 0 : i32
    return %arg2, %arg1 : i32, i32
  }
  func.func @transform_2(%arg0: i32, %arg1: i32, %arg2: i32) -> (i32, i32) {
    %c0_i32 = arith.constant 0 : i32
    return %arg0, %arg1 : i32, i32
  }
}

</mosaic_0001>

<llo_original>
// kernel: tpu_custom_call.1
$region0: #{tpu_custom_call.1}
  #allocation0 [shape = 'u32[]', space=smem, size = 0x4, offset = 0x4, fixed_abs, tag = 'smem constant byte address 0x4 - core index']
  #allocation1 [shape = 'u32[72,128]{1,0:T(1,128)}', space=vmem, size = 0x9000, scoped, tag = 'internal scratch']
  %s0 = inlined_call_operand.hbm [shape: f32[2048,512], index: 0, kind: input, shape index: {}]
  %s1 = inlined_call_operand.hbm [shape: f32[2048,256], index: 1, kind: input, shape index: {}]
  %s2 = inlined_call_operand.hbm [shape: f32[512,256], index: 2, kind: output, shape index: {}]
  %s3 = sld [smem:[#allocation0]]
  $region53: #{tpu_custom_call.1} parent=0
    _
  %s5 = ssub.s32 1, %s3
  %s6 = scalar_select 0, %s5, %s3
  $region1: #{tpu_custom_call.1} parent=0
    #allocation2 [shape = 'u8[2097152]{0}', space=vmem, size = 0x200000, scoped, tag = 'input window, operand 0']
    #allocation3 [shape = 's32[2]{0}', space=sflag, size = 0x8, scoped, tag = 'scoped memory for tpu_custom_call.1']
    #allocation4 [shape = 's32[2]{0}', space=sflag, size = 0x8, scoped, tag = 'scoped memory for tpu_custom_call.1']
    #allocation5 [shape = 'u8[2097152]{0}', space=vmem, size = 0x200000, scoped, tag = 'input window, operand 1']
    #allocation6 [shape = 's32[2]{0}', space=sflag, size = 0x8, scoped, tag = 'scoped memory for tpu_custom_call.1']
    #allocation7 [shape = 'u8[524288]{0}', space=vmem, size = 0x80000, scoped, tag = 'output window, operand 0']
    %7 = vsyncpa [#allocation3], 0
    %s8 = scalar_lea.sflag [#allocation3], 1
    %9 = vsyncpa %s8, 0
    %10 = vsyncpa [#allocation6], 0
    %s11 = scalar_lea.sflag [#allocation6], 1
    %12 = vsyncpa %s11, 0
    %13 = vsyncpa [#allocation4], 0
    %s14 = scalar_lea.sflag [#allocation4], 1
    %15 = vsyncpa %s14, 0
    loop: start=0, step=1, limit=6
    $region2: #{tpu_custom_call.1} parent=1 // loop_pre_header
      _
    $region3: #{tpu_custom_call.1} parent=1 // loop_header
      %s17 = sphi 0, %s21
      %p18 = scmp.ge.s32.totalorder %s17, 6
      %s24 = sphi 0, %s43
      %s25 = sphi 0, %s39
      %s26 = sphi 0, %s35
      %s27 = sphi 0, %s24
      %s28 = sphi 0, %s25
      %s29 = sphi 0, %s26
      %s30 = sphi 0, %s27
      %s31 = sphi 0, %s28
      %s32 = sphi 0, %s29
      %s48 = sphi 0, %s50
      %s51 = sphi 0, %s48
      %s52 = sphi 0, %s51
      %s68 = sphi 0, %s52
      %s76 = sphi 0, %s78
      %s79 = sphi 0, %s76
      %s80 = sphi 0, %s79
      %s96 = sphi 0, %s80
      %s104 = sphi 0, %s106
      %s107 = sphi 0, %s104
      %s108 = sphi 0, %s107
      %s124 = sphi 0, %s108
    $region4: #{tpu_custom_call.1} parent=1 // loop_header_branch
      %20 = sbr.rel (%p18) target = $region8
    $region5: #{tpu_custom_call.1} parent=1 // loop_body
      %s22 = ssub.s32 %s17, 1
      %s23 = ssub.s32 %s17, 2
      %s33 = sadd.s32 1, %s26
      %p34 = scmp.ge.s32.totalorder %s33, 2
      %s35 = scalar_select %p34, 0, %s33
      %s36 = sadd.s32 1, %s25
      %s37 = scalar_select %p34, %s36, %s25
      %p38 = scmp.ge.s32.totalorder %s37, 1
      %s39 = scalar_select %p38, 0, %s37
      %s40 = sadd.s32 1, %s24
      %s41 = scalar_select %p38, %s40, %s24
      %p42 = scmp.ge.s32.totalorder %s41, 2
      %s43 = scalar_select %p42, 0, %s41
      %s44 = ssub.s32 %s26, %s35
      %s45 = ssub.s32 %s24, %s43
      %s46 = sor.u32 %s44, %s45
      %p47 = scmp.eq.s32.totalorder %s46, 0
      %s49 = sadd.s32 %s48, 1
      %s50 = scalar_select %p47, %s48, %s49
      %p53 = pneg %p47
      %p54 = scmp.eq.s32.totalorder %s17, 3
      %p55 = por %p53, %p54
      %p56 = scmp.ne.s32.totalorder %s48, %s51
      %p57 = scmp.eq.s32.totalorder %s17, 0
      %p58 = por %p56, %p57
      %p59 = scmp.ne.s32.totalorder %s48, %s51
      %p60 = scmp.eq.s32.totalorder %s22, 3
      %p61 = por %p59, %p60
      %p62 = scmp.ne.s32.totalorder %s51, %s52
      %p63 = scmp.eq.s32.totalorder %s22, 0
      %p64 = por %p62, %p63
      %p65 = scmp.ne.s32.totalorder %s51, %s52
      %p66 = scmp.eq.s32.totalorder %s23, 3
      %p67 = por %p65, %p66
      %p69 = scmp.ne.s32.totalorder %s52, %s68
      %p70 = scmp.eq.s32.totalorder %s23, 0
      %p71 = por %p69, %p70
      %s72 = ssub.s32 %s26, %s35
      %s73 = ssub.s32 %s25, %s39
      %s74 = sor.u32 %s72, %s73
      %p75 = scmp.eq.s32.totalorder %s74, 0
      %s77 = sadd.s32 %s76, 1
      %s78 = scalar_select %p75, %s76, %s77
      %p81 = pneg %p75
      %p82 = scmp.eq.s32.totalorder %s17, 3
      %p83 = por %p81, %p82
      %p84 = scmp.ne.s32.totalorder %s76, %s79
      %p85 = scmp.eq.s32.totalorder %s17, 0
      %p86 = por %p84, %p85
      %p87 = scmp.ne.s32.totalorder %s76, %s79
      %p88 = scmp.eq.s32.totalorder %s22, 3
      %p89 = por %p87, %p88
      %p90 = scmp.ne.s32.totalorder %s79, %s80
      %p91 = scmp.eq.s32.totalorder %s22, 0
      %p92 = por %p90, %p91
      %p93 = scmp.ne.s32.totalorder %s79, %s80
      %p94 = scmp.eq.s32.totalorder %s23, 3
      %p95 = por %p93, %p94
      %p97 = scmp.ne.s32.totalorder %s80, %s96
      %p98 = scmp.eq.s32.totalorder %s23, 0
      %p99 = por %p97, %p98
      %s100 = ssub.s32 %s24, %s43
      %s101 = ssub.s32 %s25, %s39
      %s102 = sor.u32 %s100, %s101
      %p103 = scmp.eq.s32.totalorder %s102, 0
      %s105 = sadd.s32 %s104, 1
      %s106 = scalar_select %p103, %s104, %s105
      %p109 = pneg %p103
      %p110 = scmp.eq.s32.totalorder %s17, 3
      %p111 = por %p109, %p110
      %p112 = scmp.ne.s32.totalorder %s104, %s107
      %p113 = scmp.eq.s32.totalorder %s17, 0
      %p114 = por %p112, %p113
      %p115 = scmp.ne.s32.totalorder %s104, %s107
      %p116 = scmp.eq.s32.totalorder %s22, 3
      %p117 = por %p115, %p116
      %p118 = scmp.ne.s32.totalorder %s107, %s108
      %p119 = scmp.eq.s32.totalorder %s22, 0
      %p120 = por %p118, %p119
      %p121 = scmp.ne.s32.totalorder %s107, %s108
      %p122 = scmp.eq.s32.totalorder %s23, 3
      %p123 = por %p121, %p122
      %p125 = scmp.ne.s32.totalorder %s108, %s124
      %p126 = scmp.eq.s32.totalorder %s23, 0
      %p127 = por %p125, %p126
      %p128 = scmp.le.s32.totalorder 1, %s17
      %p129 = scmp.lt.s32.totalorder %s17, 5
      %p130 = pnand %p128, %p129
      %p131 = pneg %p130
      // Predicated region
      $region9: #{tpu_custom_call.1} parent=5 // pred_check
        _
      $region10: #{tpu_custom_call.1} parent=5 // pred_check_branch
        %133 = sbr.rel (%p130) target = $region12
      $region11: #{tpu_custom_call.1} parent=5 // pred_region
        %s134 = ssub.s32 %s17, 1
      $region12: #{tpu_custom_call.1} parent=5 // pred_fallthru
        _
      %p135 = scmp.lt.s32.totalorder %s17, 4
      // Predicated region
      $region13: #{tpu_custom_call.1} parent=5 // pred_check
        %p136 = pneg %p135
      $region14: #{tpu_custom_call.1} parent=5 // pred_check_branch
        %138 = sbr.rel (%p136) target = $region16
      $region15: #{tpu_custom_call.1} parent=5 // pred_region
        // Predicated region
        $region17: #{tpu_custom_call.1} parent=15 // pred_check
          %p139 = pneg %p58
        $region18: #{tpu_custom_call.1} parent=15 // pred_check_branch
          %141 = sbr.rel (%p139) target = $region20
        $region19: #{tpu_custom_call.1} parent=15 // pred_region
          %s142 = sand.u32 %s48, 1
          %s143 = scalar_lea.sflag [#allocation3], %s142
          %s144 = sand.u32 %s48, 1
          %s145 = smul.addr %s144, 2048
          %s146 = scalar_lea.vmem [#allocation2], %s145
          %s147 = smul.u32 128, %s26
          %s148 = smul.u32 2, %s24
          %150 = vsyncadd %s143, 0
          %s151 = smul.addr %s147, 4
          %s152 = sadd.s32 %s148, %s151
          %s153 = smul.addr %s152, 8
          %s154 = scalar_lea.hbm %s0, %s153
          %s155 = sshll.u32 %s154, 4
          %s156 = int_to_ptr.hbm [resolvable:$true] %s155
          %s157 = sshll.u32 %s146, 4
          %s158 = int_to_ptr.vmem [resolvable:$true] %s157
          %163 = dma.hbm_to_vmem [thread:$0]  %s156, 32768, %s158, %s143, 512, 256, 16
        $region20: #{tpu_custom_call.1} parent=15 // pred_fallthru
          _
        // Predicated region
        $region21: #{tpu_custom_call.1} parent=15 // pred_check
          %p164 = pneg %p86
        $region22: #{tpu_custom_call.1} parent=15 // pred_check_branch
          %166 = sbr.rel (%p164) target = $region24
        $region23: #{tpu_custom_call.1} parent=15 // pred_region
          %s167 = sand.u32 %s76, 1
          %s168 = scalar_lea.sflag [#allocation6], %s167
          %s169 = sand.u32 %s76, 1
          %s170 = smul.addr %s169, 2048
          %s171 = scalar_lea.vmem [#allocation5], %s170
          %s172 = smul.u32 128, %s26
          %s173 = smul.u32 2, %s25
          %175 = vsyncadd %s168, 0
          %s176 = smul.addr %s172, 2
          %s177 = sadd.s32 %s173, %s176
          %s178 = smul.addr %s177, 8
          %s179 = scalar_lea.hbm %s1, %s178
          %s180 = sshll.u32 %s179, 4
          %s181 = int_to_ptr.hbm [resolvable:$true] %s180
          %s182 = sshll.u32 %s171, 4
          %s183 = int_to_ptr.vmem [resolvable:$true] %s182
          %188 = dma.hbm_to_vmem [thread:$0]  %s181, 32768, %s183, %s168, 256, 256, 16
        $region24: #{tpu_custom_call.1} parent=15 // pred_fallthru
          _
      $region16: #{tpu_custom_call.1} parent=5 // pred_fallthru
        _
      %p189 = scmp.le.s32.totalorder 1, %s17
      %p190 = scmp.lt.s32.totalorder %s17, 5
      %p191 = pnand %p189, %p190
      %p192 = pneg %p191
      // Predicated region
      $region25: #{tpu_custom_call.1} parent=5 // pred_check
        _
      $region26: #{tpu_custom_call.1} parent=5 // pred_check_branch
        %194 = sbr.rel (%p191) target = $region28
      $region27: #{tpu_custom_call.1} parent=5 // pred_region
        %s195 = ssub.s32 %s17, 1
        %s196 = sand.u32 %s51, 1
        %s197 = scalar_lea.sflag [#allocation3], %s196
        %s198 = sand.u32 %s51, 1
        %s199 = smul.addr %s198, 2048
        %s200 = scalar_lea.vmem [#allocation2], %s199
        // Predicated region
        $region29: #{tpu_custom_call.1} parent=27 // pred_check
          %p201 = pneg %p64
        $region30: #{tpu_custom_call.1} parent=27 // pred_check_branch
          %203 = sbr.rel (%p201) target = $region32
        $region31: #{tpu_custom_call.1} parent=27 // pred_region
          %205 = dma.done %s197, 32768
        $region32: #{tpu_custom_call.1} parent=27 // pred_fallthru
          _
        %s206 = sand.u32 %s79, 1
        %s207 = scalar_lea.sflag [#allocation6], %s206
        %s208 = sand.u32 %s79, 1
        %s209 = smul.addr %s208, 2048
        %s210 = scalar_lea.vmem [#allocation5], %s209
        // Predicated region
        $region33: #{tpu_custom_call.1} parent=27 // pred_check
          %p211 = pneg %p92
        $region34: #{tpu_custom_call.1} parent=27 // pred_check_branch
          %213 = sbr.rel (%p211) target = $region36
        $region35: #{tpu_custom_call.1} parent=27 // pred_region
          %215 = dma.done %s207, 32768
        $region36: #{tpu_custom_call.1} parent=27 // pred_fallthru
          _
        %s216 = sand.u32 %s51, 1
        %s217 = scalar_lea.sflag [#allocation3], %s216
        %s218 = sand.u32 %s51, 1
        %s219 = smul.addr %s218, 2048
        %s220 = scalar_lea.vmem [#allocation2], %s219
        %p221 = pneg %p64
        %p222 = pneg %p61
        %s223 = sand.u32 %s79, 1
        %s224 = scalar_lea.sflag [#allocation6], %s223
        %s225 = sand.u32 %s79, 1
        %s226 = smul.addr %s225, 2048
        %s227 = scalar_lea.vmem [#allocation5], %s226
        %p228 = pneg %p92
        %p229 = pneg %p89
        %p230 = pneg %p120
        %p231 = pneg %p117
        %s232 = sand.u32 %s107, 1
        %s233 = scalar_lea.sflag [#allocation4], %s232
        %s234 = sand.u32 %s107, 1
        %s235 = smul.addr %s234, 512
        %s236 = scalar_lea.vmem [#allocation7], %s235
        %s237 = smul.u32 128, %s29
        %s238 = smul.u32 2, %s27
        %s239 = smul.u32 128, %s29
        %s240 = smul.u32 2, %s28
        %s241 = smul.u32 32, %s27
        %s242 = smul.u32 2, %s28
        %p243 = scmp.eq.s32.totalorder %s29, 0
        // Predicated region
        $region37: #{tpu_custom_call.1} parent=27 // pred_check
          %p244 = pneg %p243
        $region38: #{tpu_custom_call.1} parent=27 // pred_check_branch
          %246 = sbr.rel (%p244) target = $region40
        $region39: #{tpu_custom_call.1} parent=27 // pred_region
          %247 = vst [vmem:[%s236] sm:$0xff] 0.0
          %248 = vst [vmem:[%s236 + $0x8] sm:$0xff] 0.0
          %249 = vst [vmem:[%s236 + $0x10] sm:$0xff] 0.0
          %250 = vst [vmem:[%s236 + $0x18] sm:$0xff] 0.0
          %251 = vst [vmem:[%s236 + $0x20] sm:$0xff] 0.0
          %252 = vst [vmem:[%s236 + $0x28] sm:$0xff] 0.0
          %253 = vst [vmem:[%s236 + $0x30] sm:$0xff] 0.0
          %254 = vst [vmem:[%s236 + $0x38] sm:$0xff] 0.0
          %255 = vst [vmem:[%s236 + $0x40] sm:$0xff] 0.0
          %256 = vst [vmem:[%s236 + $0x48] sm:$0xff] 0.0
          %257 = vst [vmem:[%s236 + $0x50] sm:$0xff] 0.0
          %258 = vst [vmem:[%s236 + $0x58] sm:$0xff] 0.0
          %259 = vst [vmem:[%s236 + $0x60] sm:$0xff] 0.0
          %260 = vst [vmem:[%s236 + $0x68] sm:$0xff] 0.0
          %261 = vst [vmem:[%s236 + $0x70] sm:$0xff] 0.0
          %262 = vst [vmem:[%s236 + $0x78] sm:$0xff] 0.0
          %263 = vst [vmem:[%s236 + $0x80] sm:$0xff] 0.0
          %264 = vst [vmem:[%s236 + $0x88] sm:$0xff] 0.0
          %265 = vst [vmem:[%s236 + $0x90] sm:$0xff] 0.0
          %266 = vst [vmem:[%s236 + $0x98] sm:$0xff] 0.0
          %267 = vst [vmem:[%s236 + $0xa0] sm:$0xff] 0.0
          %268 = vst [vmem:[%s236 + $0xa8] sm:$0xff] 0.0
          %269 = vst [vmem:[%s236 + $0xb0] sm:$0xff] 0.0
          %270 = vst [vmem:[%s236 + $0xb8] sm:$0xff] 0.0
          %271 = vst [vmem:[%s236 + $0xc0] sm:$0xff] 0.0
          %272 = vst [vmem:[%s236 + $0xc8] sm:$0xff] 0.0
          %273 = vst [vmem:[%s236 + $0xd0] sm:$0xff] 0.0
          %274 = vst [vmem:[%s236 + $0xd8] sm:$0xff] 0.0
          %275 = vst [vmem:[%s236 + $0xe0] sm:$0xff] 0.0
          %276 = vst [vmem:[%s236 + $0xe8] sm:$0xff] 0.0
          %277 = vst [vmem:[%s236 + $0xf0] sm:$0xff] 0.0
          %278 = vst [vmem:[%s236 + $0xf8] sm:$0xff] 0.0
          %279 = vst [vmem:[%s236 + $0x100] sm:$0xff] 0.0
          %280 = vst [vmem:[%s236 + $0x108] sm:$0xff] 0.0
          %281 = vst [vmem:[%s236 + $0x110] sm:$0xff] 0.0
          %282 = vst [vmem:[%s236 + $0x118] sm:$0xff] 0.0
          %283 = vst [vmem:[%s236 + $0x120] sm:$0xff] 0.0
          %284 = vst [vmem:[%s236 + $0x128] sm:$0xff] 0.0
          %285 = vst [vmem:[%s236 + $0x130] sm:$0xff] 0.0
          %286 = vst [vmem:[%s236 + $0x138] sm:$0xff] 0.0
          %287 = vst [vmem:[%s236 + $0x140] sm:$0xff] 0.0
          %288 = vst [vmem:[%s236 + $0x148] sm:$0xff] 0.0
          %289 = vst [vmem:[%s236 + $0x150] sm:$0xff] 0.0
          %290 = vst [vmem:[%s236 + $0x158] sm:$0xff] 0.0
          %291 = vst [vmem:[%s236 + $0x160] sm:$0xff] 0.0
          %292 = vst [vmem:[%s236 + $0x168] sm:$0xff] 0.0
          %293 = vst [vmem:[%s236 + $0x170] sm:$0xff] 0.0
          %294 = vst [vmem:[%s236 + $0x178] sm:$0xff] 0.0
          %295 = vst [vmem:[%s236 + $0x180] sm:$0xff] 0.0
          %296 = vst [vmem:[%s236 + $0x188] sm:$0xff] 0.0
          %297 = vst [vmem:[%s236 + $0x190] sm:$0xff] 0.0
          %298 = vst [vmem:[%s236 + $0x198] sm:$0xff] 0.0
          %299 = vst [vmem:[%s236 + $0x1a0] sm:$0xff] 0.0
          %300 = vst [vmem:[%s236 + $0x1a8] sm:$0xff] 0.0
          %301 = vst [vmem:[%s236 + $0x1b0] sm:$0xff] 0.0
          %302 = vst [vmem:[%s236 + $0x1b8] sm:$0xff] 0.0
          %303 = vst [vmem:[%s236 + $0x1c0] sm:$0xff] 0.0
          %304 = vst [vmem:[%s236 + $0x1c8] sm:$0xff] 0.0
          %305 = vst [vmem:[%s236 + $0x1d0] sm:$0xff] 0.0
          %306 = vst [vmem:[%s236 + $0x1d8] sm:$0xff] 0.0
          %307 = vst [vmem:[%s236 + $0x1e0] sm:$0xff] 0.0
          %308 = vst [vmem:[%s236 + $0x1e8] sm:$0xff] 0.0
          %309 = vst [vmem:[%s236 + $0x1f0] sm:$0xff] 0.0
          %310 = vst [vmem:[%s236 + $0x1f8] sm:$0xff] 0.0
        $region40: #{tpu_custom_call.1} parent=27 // pred_fallthru
          _
        %v311 = vld [vmem:[%s236] sm:$0xff]
        %v312 = vld [vmem:[%s236 + $0x8] sm:$0xff]
        %v313 = vld [vmem:[%s236 + $0x10] sm:$0xff]
        %v314 = vld [vmem:[%s236 + $0x18] sm:$0xff]
        %v315 = vld [vmem:[%s236 + $0x20] sm:$0xff]
        %v316 = vld [vmem:[%s236 + $0x28] sm:$0xff]
        %v317 = vld [vmem:[%s236 + $0x30] sm:$0xff]
        %v318 = vld [vmem:[%s236 + $0x38] sm:$0xff]
        %v319 = vld [vmem:[%s236 + $0x40] sm:$0xff]
        %v320 = vld [vmem:[%s236 + $0x48] sm:$0xff]
        %v321 = vld [vmem:[%s236 + $0x50] sm:$0xff]
        %v322 = vld [vmem:[%s236 + $0x58] sm:$0xff]
        %v323 = vld [vmem:[%s236 + $0x60] sm:$0xff]
        %v324 = vld [vmem:[%s236 + $0x68] sm:$0xff]
        %v325 = vld [vmem:[%s236 + $0x70] sm:$0xff]
        %v326 = vld [vmem:[%s236 + $0x78] sm:$0xff]
        %v327 = vld [vmem:[%s236 + $0x80] sm:$0xff]
        %v328 = vld [vmem:[%s236 + $0x88] sm:$0xff]
        %v329 = vld [vmem:[%s236 + $0x90] sm:$0xff]
        %v330 = vld [vmem:[%s236 + $0x98] sm:$0xff]
        %v331 = vld [vmem:[%s236 + $0xa0] sm:$0xff]
        %v332 = vld [vmem:[%s236 + $0xa8] sm:$0xff]
        %v333 = vld [vmem:[%s236 + $0xb0] sm:$0xff]
        %v334 = vld [vmem:[%s236 + $0xb8] sm:$0xff]
        %v335 = vld [vmem:[%s236 + $0xc0] sm:$0xff]
        %v336 = vld [vmem:[%s236 + $0xc8] sm:$0xff]
        %v337 = vld [vmem:[%s236 + $0xd0] sm:$0xff]
        %v338 = vld [vmem:[%s236 + $0xd8] sm:$0xff]
        %v339 = vld [vmem:[%s236 + $0xe0] sm:$0xff]
        %v340 = vld [vmem:[%s236 + $0xe8] sm:$0xff]
        %v341 = vld [vmem:[%s236 + $0xf0] sm:$0xff]
        %v342 = vld [vmem:[%s236 + $0xf8] sm:$0xff]
        %v343 = vld [vmem:[%s236 + $0x100] sm:$0xff]
        %v344 = vld [vmem:[%s236 + $0x108] sm:$0xff]
        %v345 = vld [vmem:[%s236 + $0x110] sm:$0xff]
        %v346 = vld [vmem:[%s236 + $0x118] sm:$0xff]
        %v347 = vld [vmem:[%s236 + $0x120] sm:$0xff]
        %v348 = vld [vmem:[%s236 + $0x128] sm:$0xff]
        %v349 = vld [vmem:[%s236 + $0x130] sm:$0xff]
        %v350 = vld [vmem:[%s236 + $0x138] sm:$0xff]
        %v351 = vld [vmem:[%s236 + $0x140] sm:$0xff]
        %v352 = vld [vmem:[%s236 + $0x148] sm:$0xff]
        %v353 = vld [vmem:[%s236 + $0x150] sm:$0xff]
        %v354 = vld [vmem:[%s236 + $0x158] sm:$0xff]
        %v355 = vld [vmem:[%s236 + $0x160] sm:$0xff]
        %v356 = vld [vmem:[%s236 + $0x168] sm:$0xff]
        %v357 = vld [vmem:[%s236 + $0x170] sm:$0xff]
        %v358 = vld [vmem:[%s236 + $0x178] sm:$0xff]
        %v359 = vld [vmem:[%s236 + $0x180] sm:$0xff]
        %v360 = vld [vmem:[%s236 + $0x188] sm:$0xff]
        %v361 = vld [vmem:[%s236 + $0x190] sm:$0xff]
        %v362 = vld [vmem:[%s236 + $0x198] sm:$0xff]
        %v363 = vld [vmem:[%s236 + $0x1a0] sm:$0xff]
        %v364 = vld [vmem:[%s236 + $0x1a8] sm:$0xff]
        %v365 = vld [vmem:[%s236 + $0x1b0] sm:$0xff]
        %v366 = vld [vmem:[%s236 + $0x1b8] sm:$0xff]
        %v367 = vld [vmem:[%s236 + $0x1c0] sm:$0xff]
        %v368 = vld [vmem:[%s236 + $0x1c8] sm:$0xff]
        %v369 = vld [vmem:[%s236 + $0x1d0] sm:$0xff]
        %v370 = vld [vmem:[%s236 + $0x1d8] sm:$0xff]
        %v371 = vld [vmem:[%s236 + $0x1e0] sm:$0xff]
        %v372 = vld [vmem:[%s236 + $0x1e8] sm:$0xff]
        %v373 = vld [vmem:[%s236 + $0x1f0] sm:$0xff]
        %v374 = vld [vmem:[%s236 + $0x1f8] sm:$0xff]
        %v375 = vld [vmem:[%s200] sm:$0xff]
        %v376 = vld [vmem:[%s200 + $0x8] sm:$0xff]
        %v377 = vld [vmem:[%s200 + $0x10] sm:$0xff]
        %v378 = vld [vmem:[%s200 + $0x18] sm:$0xff]
        %v379 = vld [vmem:[%s200 + $0x20] sm:$0xff]
        %v380 = vld [vmem:[%s200 + $0x28] sm:$0xff]
        %v381 = vld [vmem:[%s200 + $0x30] sm:$0xff]
        %v382 = vld [vmem:[%s200 + $0x38] sm:$0xff]
        %v383 = vld [vmem:[%s200 + $0x40] sm:$0xff]
        %v384 = vld [vmem:[%s200 + $0x48] sm:$0xff]
        %v385 = vld [vmem:[%s200 + $0x50] sm:$0xff]
        %v386 = vld [vmem:[%s200 + $0x58] sm:$0xff]
        %v387 = vld [vmem:[%s200 + $0x60] sm:$0xff]
        %v388 = vld [vmem:[%s200 + $0x68] sm:$0xff]
        %v389 = vld [vmem:[%s200 + $0x70] sm:$0xff]
        %v390 = vld [vmem:[%s200 + $0x78] sm:$0xff]
        %v391 = vld [vmem:[%s200 + $0x80] sm:$0xff]
        %v392 = vld [vmem:[%s200 + $0x88] sm:$0xff]
        %v393 = vld [vmem:[%s200 + $0x90] sm:$0xff]
        %v394 = vld [vmem:[%s200 + $0x98] sm:$0xff]
        %v395 = vld [vmem:[%s200 + $0xa0] sm:$0xff]
        %v396 = vld [vmem:[%s200 + $0xa8] sm:$0xff]
        %v397 = vld [vmem:[%s200 + $0xb0] sm:$0xff]
        %v398 = vld [vmem:[%s200 + $0xb8] sm:$0xff]
        %v399 = vld [vmem:[%s200 + $0xc0] sm:$0xff]
        %v400 = vld [vmem:[%s200 + $0xc8] sm:$0xff]
        %v401 = vld [vmem:[%s200 + $0xd0] sm:$0xff]
        %v402 = vld [vmem:[%s200 + $0xd8] sm:$0xff]
        %v403 = vld [vmem:[%s200 + $0xe0] sm:$0xff]
        %v404 = vld [vmem:[%s200 + $0xe8] sm:$0xff]
        %v405 = vld [vmem:[%s200 + $0xf0] sm:$0xff]
        %v406 = vld [vmem:[%s200 + $0xf8] sm:$0xff]
        %v407 = vld [vmem:[%s200 + $0x100] sm:$0xff]
        %v408 = vld [vmem:[%s200 + $0x108] sm:$0xff]
        %v409 = vld [vmem:[%s200 + $0x110] sm:$0xff]
        %v410 = vld [vmem:[%s200 + $0x118] sm:$0xff]
        %v411 = vld [vmem:[%s200 + $0x120] sm:$0xff]
        %v412 = vld [vmem:[%s200 + $0x128] sm:$0xff]
        %v413 = vld [vmem:[%s200 + $0x130] sm:$0xff]
        %v414 = vld [vmem:[%s200 + $0x138] sm:$0xff]
        %v415 = vld [vmem:[%s200 + $0x140] sm:$0xff]
        %v416 = vld [vmem:[%s200 + $0x148] sm:$0xff]
        %v417 = vld [vmem:[%s200 + $0x150] sm:$0xff]
        %v418 = vld [vmem:[%s200 + $0x158] sm:$0xff]
        %v419 = vld [vmem:[%s200 + $0x160] sm:$0xff]
        %v420 = vld [vmem:[%s200 + $0x168] sm:$0xff]
        %v421 = vld [vmem:[%s200 + $0x170] sm:$0xff]
        %v422 = vld [vmem:[%s200 + $0x178] sm:$0xff]
        %v423 = vld [vmem:[%s200 + $0x180] sm:$0xff]
        %v424 = vld [vmem:[%s200 + $0x188] sm:$0xff]
        %v425 = vld [vmem:[%s200 + $0x190] sm:$0xff]
        %v426 = vld [vmem:[%s200 + $0x198] sm:$0xff]
        %v427 = vld [vmem:[%s200 + $0x1a0] sm:$0xff]
        %v428 = vld [vmem:[%s200 + $0x1a8] sm:$0xff]
        %v429 = vld [vmem:[%s200 + $0x1b0] sm:$0xff]
        %v430 = vld [vmem:[%s200 + $0x1b8] sm:$0xff]
        %v431 = vld [vmem:[%s200 + $0x1c0] sm:$0xff]
        %v432 = vld [vmem:[%s200 + $0x1c8] sm:$0xff]
        %v433 = vld [vmem:[%s200 + $0x1d0] sm:$0xff]
        %v434 = vld [vmem:[%s200 + $0x1d8] sm:$0xff]
        %v435 = vld [vmem:[%s200 + $0x1e0] sm:$0xff]
        %v436 = vld [vmem:[%s200 + $0x1e8] sm:$0xff]
        %v437 = vld [vmem:[%s200 + $0x1f0] sm:$0xff]
        %v438 = vld [vmem:[%s200 + $0x1f8] sm:$0xff]
        %v439 = vld [vmem:[%s200 + $0x200] sm:$0xff]
        %v440 = vld [vmem:[%s200 + $0x208] sm:$0xff]
        %v441 = vld [vmem:[%s200 + $0x210] sm:$0xff]
        %v442 = vld [vmem:[%s200 + $0x218] sm:$0xff]
        %v443 = vld [vmem:[%s200 + $0x220] sm:$0xff]
        %v444 = vld [vmem:[%s200 + $0x228] sm:$0xff]
        %v445 = vld [vmem:[%s200 + $0x230] sm:$0xff]
        %v446 = vld [vmem:[%s200 + $0x238] sm:$0xff]
        %v447 = vld [vmem:[%s200 + $0x240] sm:$0xff]
        %v448 = vld [vmem:[%s200 + $0x248] sm:$0xff]
        %v449 = vld [vmem:[%s200 + $0x250] sm:$0xff]
        %v450 = vld [vmem:[%s200 + $0x258] sm:$0xff]
        %v451 = vld [vmem:[%s200 + $0x260] sm:$0xff]
        %v452 = vld [vmem:[%s200 + $0x268] sm:$0xff]
        %v453 = vld [vmem:[%s200 + $0x270] sm:$0xff]
        %v454 = vld [vmem:[%s200 + $0x278] sm:$0xff]
        %v455 = vld [vmem:[%s200 + $0x280] sm:$0xff]
        %v456 = vld [vmem:[%s200 + $0x288] sm:$0xff]
        %v457 = vld [vmem:[%s200 + $0x290] sm:$0xff]
        %v458 = vld [vmem:[%s200 + $0x298] sm:$0xff]
        %v459 = vld [vmem:[%s200 + $0x2a0] sm:$0xff]
        %v460 = vld [vmem:[%s200 + $0x2a8] sm:$0xff]
        %v461 = vld [vmem:[%s200 + $0x2b0] sm:$0xff]
        %v462 = vld [vmem:[%s200 + $0x2b8] sm:$0xff]
        %v463 = vld [vmem:[%s200 + $0x2c0] sm:$0xff]
        %v464 = vld [vmem:[%s200 + $0x2c8] sm:$0xff]
        %v465 = vld [vmem:[%s200 + $0x2d0] sm:$0xff]
        %v466 = vld [vmem:[%s200 + $0x2d8] sm:$0xff]
        %v467 = vld [vmem:[%s200 + $0x2e0] sm:$0xff]
        %v468 = vld [vmem:[%s200 + $0x2e8] sm:$0xff]
        %v469 = vld [vmem:[%s200 + $0x2f0] sm:$0xff]
        %v470 = vld [vmem:[%s200 + $0x2f8] sm:$0xff]
        %v471 = vld [vmem:[%s200 + $0x300] sm:$0xff]
        %v472 = vld [vmem:[%s200 + $0x308] sm:$0xff]
        %v473 = vld [vmem:[%s200 + $0x310] sm:$0xff]
        %v474 = vld [vmem:[%s200 + $0x318] sm:$0xff]
        %v475 = vld [vmem:[%s200 + $0x320] sm:$0xff]
        %v476 = vld [vmem:[%s200 + $0x328] sm:$0xff]
        %v477 = vld [vmem:[%s200 + $0x330] sm:$0xff]
        %v478 = vld [vmem:[%s200 + $0x338] sm:$0xff]
        %v479 = vld [vmem:[%s200 + $0x340] sm:$0xff]
        %v480 = vld [vmem:[%s200 + $0x348] sm:$0xff]
        %v481 = vld [vmem:[%s200 + $0x350] sm:$0xff]
        %v482 = vld [vmem:[%s200 + $0x358] sm:$0xff]
        %v483 = vld [vmem:[%s200 + $0x360] sm:$0xff]
        %v484 = vld [vmem:[%s200 + $0x368] sm:$0xff]
        %v485 = vld [vmem:[%s200 + $0x370] sm:$0xff]
        %v486 = vld [vmem:[%s200 + $0x378] sm:$0xff]
        %v487 = vld [vmem:[%s200 + $0x380] sm:$0xff]
        %v488 = vld [vmem:[%s200 + $0x388] sm:$0xff]
        %v489 = vld [vmem:[%s200 + $0x390] sm:$0xff]
        %v490 = vld [vmem:[%s200 + $0x398] sm:$0xff]
        %v491 = vld [vmem:[%s200 + $0x3a0] sm:$0xff]
        %v492 = vld [vmem:[%s200 + $0x3a8] sm:$0xff]
        %v493 = vld [vmem:[%s200 + $0x3b0] sm:$0xff]
        %v494 = vld [vmem:[%s200 + $0x3b8] sm:$0xff]
        %v495 = vld [vmem:[%s200 + $0x3c0] sm:$0xff]
        %v496 = vld [vmem:[%s200 + $0x3c8] sm:$0xff]
        %v497 = vld [vmem:[%s200 + $0x3d0] sm:$0xff]
        %v498 = vld [vmem:[%s200 + $0x3d8] sm:$0xff]
        %v499 = vld [vmem:[%s200 + $0x3e0] sm:$0xff]
        %v500 = vld [vmem:[%s200 + $0x3e8] sm:$0xff]
        %v501 = vld [vmem:[%s200 + $0x3f0] sm:$0xff]
        %v502 = vld [vmem:[%s200 + $0x3f8] sm:$0xff]
        %v503 = vld [vmem:[%s200 + $0x400] sm:$0xff]
        %v504 = vld [vmem:[%s200 + $0x408] sm:$0xff]
        %v505 = vld [vmem:[%s200 + $0x410] sm:$0xff]
        %v506 = vld [vmem:[%s200 + $0x418] sm:$0xff]
        %v507 = vld [vmem:[%s200 + $0x420] sm:$0xff]
        %v508 = vld [vmem:[%s200 + $0x428] sm:$0xff]
        %v509 = vld [vmem:[%s200 + $0x430] sm:$0xff]
        %v510 = vld [vmem:[%s200 + $0x438] sm:$0xff]
        %v511 = vld [vmem:[%s200 + $0x440] sm:$0xff]
        %v512 = vld [vmem:[%s200 + $0x448] sm:$0xff]
        %v513 = vld [vmem:[%s200 + $0x450] sm:$0xff]
        %v514 = vld [vmem:[%s200 + $0x458] sm:$0xff]
        %v515 = vld [vmem:[%s200 + $0x460] sm:$0xff]
        %v516 = vld [vmem:[%s200 + $0x468] sm:$0xff]
        %v517 = vld [vmem:[%s200 + $0x470] sm:$0xff]
        %v518 = vld [vmem:[%s200 + $0x478] sm:$0xff]
        %v519 = vld [vmem:[%s200 + $0x480] sm:$0xff]
        %v520 = vld [vmem:[%s200 + $0x488] sm:$0xff]
        %v521 = vld [vmem:[%s200 + $0x490] sm:$0xff]
        %v522 = vld [vmem:[%s200 + $0x498] sm:$0xff]
        %v523 = vld [vmem:[%s200 + $0x4a0] sm:$0xff]
        %v524 = vld [vmem:[%s200 + $0x4a8] sm:$0xff]
        %v525 = vld [vmem:[%s200 + $0x4b0] sm:$0xff]
        %v526 = vld [vmem:[%s200 + $0x4b8] sm:$0xff]
        %v527 = vld [vmem:[%s200 + $0x4c0] sm:$0xff]
        %v528 = vld [vmem:[%s200 + $0x4c8] sm:$0xff]
        %v529 = vld [vmem:[%s200 + $0x4d0] sm:$0xff]
        %v530 = vld [vmem:[%s200 + $0x4d8] sm:$0xff]
        %v531 = vld [vmem:[%s200 + $0x4e0] sm:$0xff]
        %v532 = vld [vmem:[%s200 + $0x4e8] sm:$0xff]
        %v533 = vld [vmem:[%s200 + $0x4f0] sm:$0xff]
        %v534 = vld [vmem:[%s200 + $0x4f8] sm:$0xff]
        %v535 = vld [vmem:[%s200 + $0x500] sm:$0xff]
        %v536 = vld [vmem:[%s200 + $0x508] sm:$0xff]
        %v537 = vld [vmem:[%s200 + $0x510] sm:$0xff]
        %v538 = vld [vmem:[%s200 + $0x518] sm:$0xff]
        %v539 = vld [vmem:[%s200 + $0x520] sm:$0xff]
        %v540 = vld [vmem:[%s200 + $0x528] sm:$0xff]
        %v541 = vld [vmem:[%s200 + $0x530] sm:$0xff]
        %v542 = vld [vmem:[%s200 + $0x538] sm:$0xff]
        %v543 = vld [vmem:[%s200 + $0x540] sm:$0xff]
        %v544 = vld [vmem:[%s200 + $0x548] sm:$0xff]
        %v545 = vld [vmem:[%s200 + $0x550] sm:$0xff]
        %v546 = vld [vmem:[%s200 + $0x558] sm:$0xff]
        %v547 = vld [vmem:[%s200 + $0x560] sm:$0xff]
        %v548 = vld [vmem:[%s200 + $0x568] sm:$0xff]
        %v549 = vld [vmem:[%s200 + $0x570] sm:$0xff]
        %v550 = vld [vmem:[%s200 + $0x578] sm:$0xff]
        %v551 = vld [vmem:[%s200 + $0x580] sm:$0xff]
        %v552 = vld [vmem:[%s200 + $0x588] sm:$0xff]
        %v553 = vld [vmem:[%s200 + $0x590] sm:$0xff]
        %v554 = vld [vmem:[%s200 + $0x598] sm:$0xff]
        %v555 = vld [vmem:[%s200 + $0x5a0] sm:$0xff]
        %v556 = vld [vmem:[%s200 + $0x5a8] sm:$0xff]
        %v557 = vld [vmem:[%s200 + $0x5b0] sm:$0xff]
        %v558 = vld [vmem:[%s200 + $0x5b8] sm:$0xff]
        %v559 = vld [vmem:[%s200 + $0x5c0] sm:$0xff]
        %v560 = vld [vmem:[%s200 + $0x5c8] sm:$0xff]
        %v561 = vld [vmem:[%s200 + $0x5d0] sm:$0xff]
        %v562 = vld [vmem:[%s200 + $0x5d8] sm:$0xff]
        %v563 = vld [vmem:[%s200 + $0x5e0] sm:$0xff]
        %v564 = vld [vmem:[%s200 + $0x5e8] sm:$0xff]
        %v565 = vld [vmem:[%s200 + $0x5f0] sm:$0xff]
        %v566 = vld [vmem:[%s200 + $0x5f8] sm:$0xff]
        %v567 = vld [vmem:[%s200 + $0x600] sm:$0xff]
        %v568 = vld [vmem:[%s200 + $0x608] sm:$0xff]
        %v569 = vld [vmem:[%s200 + $0x610] sm:$0xff]
        %v570 = vld [vmem:[%s200 + $0x618] sm:$0xff]
        %v571 = vld [vmem:[%s200 + $0x620] sm:$0xff]
        %v572 = vld [vmem:[%s200 + $0x628] sm:$0xff]
        %v573 = vld [vmem:[%s200 + $0x630] sm:$0xff]
        %v574 = vld [vmem:[%s200 + $0x638] sm:$0xff]
        %v575 = vld [vmem:[%s200 + $0x640] sm:$0xff]
        %v576 = vld [vmem:[%s200 + $0x648] sm:$0xff]
        %v577 = vld [vmem:[%s200 + $0x650] sm:$0xff]
        %v578 = vld [vmem:[%s200 + $0x658] sm:$0xff]
        %v579 = vld [vmem:[%s200 + $0x660] sm:$0xff]
        %v580 = vld [vmem:[%s200 + $0x668] sm:$0xff]
        %v581 = vld [vmem:[%s200 + $0x670] sm:$0xff]
        %v582 = vld [vmem:[%s200 + $0x678] sm:$0xff]
        %v583 = vld [vmem:[%s200 + $0x680] sm:$0xff]
        %v584 = vld [vmem:[%s200 + $0x688] sm:$0xff]
        %v585 = vld [vmem:[%s200 + $0x690] sm:$0xff]
        %v586 = vld [vmem:[%s200 + $0x698] sm:$0xff]
        %v587 = vld [vmem:[%s200 + $0x6a0] sm:$0xff]
        %v588 = vld [vmem:[%s200 + $0x6a8] sm:$0xff]
        %v589 = vld [vmem:[%s200 + $0x6b0] sm:$0xff]
        %v590 = vld [vmem:[%s200 + $0x6b8] sm:$0xff]
        %v591 = vld [vmem:[%s200 + $0x6c0] sm:$0xff]
        %v592 = vld [vmem:[%s200 + $0x6c8] sm:$0xff]
        %v593 = vld [vmem:[%s200 + $0x6d0] sm:$0xff]
        %v594 = vld [vmem:[%s200 + $0x6d8] sm:$0xff]
        %v595 = vld [vmem:[%s200 + $0x6e0] sm:$0xff]
        %v596 = vld [vmem:[%s200 + $0x6e8] sm:$0xff]
        %v597 = vld [vmem:[%s200 + $0x6f0] sm:$0xff]
        %v598 = vld [vmem:[%s200 + $0x6f8] sm:$0xff]
        %v599 = vld [vmem:[%s200 + $0x700] sm:$0xff]
        %v600 = vld [vmem:[%s200 + $0x708] sm:$0xff]
        %v601 = vld [vmem:[%s200 + $0x710] sm:$0xff]
        %v602 = vld [vmem:[%s200 + $0x718] sm:$0xff]
        %v603 = vld [vmem:[%s200 + $0x720] sm:$0xff]
        %v604 = vld [vmem:[%s200 + $0x728] sm:$0xff]
        %v605 = vld [vmem:[%s200 + $0x730] sm:$0xff]
        %v606 = vld [vmem:[%s200 + $0x738] sm:$0xff]
        %v607 = vld [vmem:[%s200 + $0x740] sm:$0xff]
        %v608 = vld [vmem:[%s200 + $0x748] sm:$0xff]
        %v609 = vld [vmem:[%s200 + $0x750] sm:$0xff]
        %v610 = vld [vmem:[%s200 + $0x758] sm:$0xff]
        %v611 = vld [vmem:[%s200 + $0x760] sm:$0xff]
        %v612 = vld [vmem:[%s200 + $0x768] sm:$0xff]
        %v613 = vld [vmem:[%s200 + $0x770] sm:$0xff]
        %v614 = vld [vmem:[%s200 + $0x778] sm:$0xff]
        %v615 = vld [vmem:[%s200 + $0x780] sm:$0xff]
        %v616 = vld [vmem:[%s200 + $0x788] sm:$0xff]
        %v617 = vld [vmem:[%s200 + $0x790] sm:$0xff]
        %v618 = vld [vmem:[%s200 + $0x798] sm:$0xff]
        %v619 = vld [vmem:[%s200 + $0x7a0] sm:$0xff]
        %v620 = vld [vmem:[%s200 + $0x7a8] sm:$0xff]
        %v621 = vld [vmem:[%s200 + $0x7b0] sm:$0xff]
        %v622 = vld [vmem:[%s200 + $0x7b8] sm:$0xff]
        %v623 = vld [vmem:[%s200 + $0x7c0] sm:$0xff]
        %v624 = vld [vmem:[%s200 + $0x7c8] sm:$0xff]
        %v625 = vld [vmem:[%s200 + $0x7d0] sm:$0xff]
        %v626 = vld [vmem:[%s200 + $0x7d8] sm:$0xff]
        %v627 = vld [vmem:[%s200 + $0x7e0] sm:$0xff]
        %v628 = vld [vmem:[%s200 + $0x7e8] sm:$0xff]
        %v629 = vld [vmem:[%s200 + $0x7f0] sm:$0xff]
        %v630 = vld [vmem:[%s200 + $0x7f8] sm:$0xff]
        %v631 = vld [vmem:[%s210] sm:$0xff]
        %v632 = vld [vmem:[%s210 + $0x8] sm:$0xff]
        %v633 = vld [vmem:[%s210 + $0x10] sm:$0xff]
        %v634 = vld [vmem:[%s210 + $0x18] sm:$0xff]
        %v635 = vld [vmem:[%s210 + $0x20] sm:$0xff]
        %v636 = vld [vmem:[%s210 + $0x28] sm:$0xff]
        %v637 = vld [vmem:[%s210 + $0x30] sm:$0xff]
        %v638 = vld [vmem:[%s210 + $0x38] sm:$0xff]
        %v639 = vld [vmem:[%s210 + $0x40] sm:$0xff]
        %v640 = vld [vmem:[%s210 + $0x48] sm:$0xff]
        %v641 = vld [vmem:[%s210 + $0x50] sm:$0xff]
        %v642 = vld [vmem:[%s210 + $0x58] sm:$0xff]
        %v643 = vld [vmem:[%s210 + $0x60] sm:$0xff]
        %v644 = vld [vmem:[%s210 + $0x68] sm:$0xff]
        %v645 = vld [vmem:[%s210 + $0x70] sm:$0xff]
        %v646 = vld [vmem:[%s210 + $0x78] sm:$0xff]
        %v647 = vld [vmem:[%s210 + $0x80] sm:$0xff]
        %v648 = vld [vmem:[%s210 + $0x88] sm:$0xff]
        %v649 = vld [vmem:[%s210 + $0x90] sm:$0xff]
        %v650 = vld [vmem:[%s210 + $0x98] sm:$0xff]
        %v651 = vld [vmem:[%s210 + $0xa0] sm:$0xff]
        %v652 = vld [vmem:[%s210 + $0xa8] sm:$0xff]
        %v653 = vld [vmem:[%s210 + $0xb0] sm:$0xff]
        %v654 = vld [vmem:[%s210 + $0xb8] sm:$0xff]
        %v655 = vld [vmem:[%s210 + $0xc0] sm:$0xff]
        %v656 = vld [vmem:[%s210 + $0xc8] sm:$0xff]
        %v657 = vld [vmem:[%s210 + $0xd0] sm:$0xff]
        %v658 = vld [vmem:[%s210 + $0xd8] sm:$0xff]
        %v659 = vld [vmem:[%s210 + $0xe0] sm:$0xff]
        %v660 = vld [vmem:[%s210 + $0xe8] sm:$0xff]
        %v661 = vld [vmem:[%s210 + $0xf0] sm:$0xff]
        %v662 = vld [vmem:[%s210 + $0xf8] sm:$0xff]
        %v663 = vld [vmem:[%s210 + $0x100] sm:$0xff]
        %v664 = vld [vmem:[%s210 + $0x108] sm:$0xff]
        %v665 = vld [vmem:[%s210 + $0x110] sm:$0xff]
        %v666 = vld [vmem:[%s210 + $0x118] sm:$0xff]
        %v667 = vld [vmem:[%s210 + $0x120] sm:$0xff]
        %v668 = vld [vmem:[%s210 + $0x128] sm:$0xff]
        %v669 = vld [vmem:[%s210 + $0x130] sm:$0xff]
        %v670 = vld [vmem:[%s210 + $0x138] sm:$0xff]
        %v671 = vld [vmem:[%s210 + $0x140] sm:$0xff]
        %v672 = vld [vmem:[%s210 + $0x148] sm:$0xff]
        %v673 = vld [vmem:[%s210 + $0x150] sm:$0xff]
        %v674 = vld [vmem:[%s210 + $0x158] sm:$0xff]
        %v675 = vld [vmem:[%s210 + $0x160] sm:$0xff]
        %v676 = vld [vmem:[%s210 + $0x168] sm:$0xff]
        %v677 = vld [vmem:[%s210 + $0x170] sm:$0xff]
        %v678 = vld [vmem:[%s210 + $0x178] sm:$0xff]
        %v679 = vld [vmem:[%s210 + $0x180] sm:$0xff]
        %v680 = vld [vmem:[%s210 + $0x188] sm:$0xff]
        %v681 = vld [vmem:[%s210 + $0x190] sm:$0xff]
        %v682 = vld [vmem:[%s210 + $0x198] sm:$0xff]
        %v683 = vld [vmem:[%s210 + $0x1a0] sm:$0xff]
        %v684 = vld [vmem:[%s210 + $0x1a8] sm:$0xff]
        %v685 = vld [vmem:[%s210 + $0x1b0] sm:$0xff]
        %v686 = vld [vmem:[%s210 + $0x1b8] sm:$0xff]
        %v687 = vld [vmem:[%s210 + $0x1c0] sm:$0xff]
        %v688 = vld [vmem:[%s210 + $0x1c8] sm:$0xff]
        %v689 = vld [vmem:[%s210 + $0x1d0] sm:$0xff]
        %v690 = vld [vmem:[%s210 + $0x1d8] sm:$0xff]
        %v691 = vld [vmem:[%s210 + $0x1e0] sm:$0xff]
        %v692 = vld [vmem:[%s210 + $0x1e8] sm:$0xff]
        %v693 = vld [vmem:[%s210 + $0x1f0] sm:$0xff]
        %v694 = vld [vmem:[%s210 + $0x1f8] sm:$0xff]
        %v695 = vld [vmem:[%s210 + $0x200] sm:$0xff]
        %v696 = vld [vmem:[%s210 + $0x208] sm:$0xff]
        %v697 = vld [vmem:[%s210 + $0x210] sm:$0xff]
        %v698 = vld [vmem:[%s210 + $0x218] sm:$0xff]
        %v699 = vld [vmem:[%s210 + $0x220] sm:$0xff]
        %v700 = vld [vmem:[%s210 + $0x228] sm:$0xff]
        %v701 = vld [vmem:[%s210 + $0x230] sm:$0xff]
        %v702 = vld [vmem:[%s210 + $0x238] sm:$0xff]
        %v703 = vld [vmem:[%s210 + $0x240] sm:$0xff]
        %v704 = vld [vmem:[%s210 + $0x248] sm:$0xff]
        %v705 = vld [vmem:[%s210 + $0x250] sm:$0xff]
        %v706 = vld [vmem:[%s210 + $0x258] sm:$0xff]
        %v707 = vld [vmem:[%s210 + $0x260] sm:$0xff]
        %v708 = vld [vmem:[%s210 + $0x268] sm:$0xff]
        %v709 = vld [vmem:[%s210 + $0x270] sm:$0xff]
        %v710 = vld [vmem:[%s210 + $0x278] sm:$0xff]
        %v711 = vld [vmem:[%s210 + $0x280] sm:$0xff]
        %v712 = vld [vmem:[%s210 + $0x288] sm:$0xff]
        %v713 = vld [vmem:[%s210 + $0x290] sm:$0xff]
        %v714 = vld [vmem:[%s210 + $0x298] sm:$0xff]
        %v715 = vld [vmem:[%s210 + $0x2a0] sm:$0xff]
        %v716 = vld [vmem:[%s210 + $0x2a8] sm:$0xff]
        %v717 = vld [vmem:[%s210 + $0x2b0] sm:$0xff]
        %v718 = vld [vmem:[%s210 + $0x2b8] sm:$0xff]
        %v719 = vld [vmem:[%s210 + $0x2c0] sm:$0xff]
        %v720 = vld [vmem:[%s210 + $0x2c8] sm:$0xff]
        %v721 = vld [vmem:[%s210 + $0x2d0] sm:$0xff]
        %v722 = vld [vmem:[%s210 + $0x2d8] sm:$0xff]
        %v723 = vld [vmem:[%s210 + $0x2e0] sm:$0xff]
        %v724 = vld [vmem:[%s210 + $0x2e8] sm:$0xff]
        %v725 = vld [vmem:[%s210 + $0x2f0] sm:$0xff]
        %v726 = vld [vmem:[%s210 + $0x2f8] sm:$0xff]
        %v727 = vld [vmem:[%s210 + $0x300] sm:$0xff]
        %v728 = vld [vmem:[%s210 + $0x308] sm:$0xff]
        %v729 = vld [vmem:[%s210 + $0x310] sm:$0xff]
        %v730 = vld [vmem:[%s210 + $0x318] sm:$0xff]
        %v731 = vld [vmem:[%s210 + $0x320] sm:$0xff]
        %v732 = vld [vmem:[%s210 + $0x328] sm:$0xff]
        %v733 = vld [vmem:[%s210 + $0x330] sm:$0xff]
        %v734 = vld [vmem:[%s210 + $0x338] sm:$0xff]
        %v735 = vld [vmem:[%s210 + $0x340] sm:$0xff]
        %v736 = vld [vmem:[%s210 + $0x348] sm:$0xff]
        %v737 = vld [vmem:[%s210 + $0x350] sm:$0xff]
        %v738 = vld [vmem:[%s210 + $0x358] sm:$0xff]
        %v739 = vld [vmem:[%s210 + $0x360] sm:$0xff]
        %v740 = vld [vmem:[%s210 + $0x368] sm:$0xff]
        %v741 = vld [vmem:[%s210 + $0x370] sm:$0xff]
        %v742 = vld [vmem:[%s210 + $0x378] sm:$0xff]
        %v743 = vld [vmem:[%s210 + $0x380] sm:$0xff]
        %v744 = vld [vmem:[%s210 + $0x388] sm:$0xff]
        %v745 = vld [vmem:[%s210 + $0x390] sm:$0xff]
        %v746 = vld [vmem:[%s210 + $0x398] sm:$0xff]
        %v747 = vld [vmem:[%s210 + $0x3a0] sm:$0xff]
        %v748 = vld [vmem:[%s210 + $0x3a8] sm:$0xff]
        %v749 = vld [vmem:[%s210 + $0x3b0] sm:$0xff]
        %v750 = vld [vmem:[%s210 + $0x3b8] sm:$0xff]
        %v751 = vld [vmem:[%s210 + $0x3c0] sm:$0xff]
        %v752 = vld [vmem:[%s210 + $0x3c8] sm:$0xff]
        %v753 = vld [vmem:[%s210 + $0x3d0] sm:$0xff]
        %v754 = vld [vmem:[%s210 + $0x3d8] sm:$0xff]
        %v755 = vld [vmem:[%s210 + $0x3e0] sm:$0xff]
        %v756 = vld [vmem:[%s210 + $0x3e8] sm:$0xff]
        %v757 = vld [vmem:[%s210 + $0x3f0] sm:$0xff]
        %v758 = vld [vmem:[%s210 + $0x3f8] sm:$0xff]
        %v759 = vld [vmem:[%s210 + $0x400] sm:$0xff]
        %v760 = vld [vmem:[%s210 + $0x408] sm:$0xff]
        %v761 = vld [vmem:[%s210 + $0x410] sm:$0xff]
        %v762 = vld [vmem:[%s210 + $0x418] sm:$0xff]
        %v763 = vld [vmem:[%s210 + $0x420] sm:$0xff]
        %v764 = vld [vmem:[%s210 + $0x428] sm:$0xff]
        %v765 = vld [vmem:[%s210 + $0x430] sm:$0xff]
        %v766 = vld [vmem:[%s210 + $0x438] sm:$0xff]
        %v767 = vld [vmem:[%s210 + $0x440] sm:$0xff]
        %v768 = vld [vmem:[%s210 + $0x448] sm:$0xff]
        %v769 = vld [vmem:[%s210 + $0x450] sm:$0xff]
        %v770 = vld [vmem:[%s210 + $0x458] sm:$0xff]
        %v771 = vld [vmem:[%s210 + $0x460] sm:$0xff]
        %v772 = vld [vmem:[%s210 + $0x468] sm:$0xff]
        %v773 = vld [vmem:[%s210 + $0x470] sm:$0xff]
        %v774 = vld [vmem:[%s210 + $0x478] sm:$0xff]
        %v775 = vld [vmem:[%s210 + $0x480] sm:$0xff]
        %v776 = vld [vmem:[%s210 + $0x488] sm:$0xff]
        %v777 = vld [vmem:[%s210 + $0x490] sm:$0xff]
        %v778 = vld [vmem:[%s210 + $0x498] sm:$0xff]
        %v779 = vld [vmem:[%s210 + $0x4a0] sm:$0xff]
        %v780 = vld [vmem:[%s210 + $0x4a8] sm:$0xff]
        %v781 = vld [vmem:[%s210 + $0x4b0] sm:$0xff]
        %v782 = vld [vmem:[%s210 + $0x4b8] sm:$0xff]
        %v783 = vld [vmem:[%s210 + $0x4c0] sm:$0xff]
        %v784 = vld [vmem:[%s210 + $0x4c8] sm:$0xff]
        %v785 = vld [vmem:[%s210 + $0x4d0] sm:$0xff]
        %v786 = vld [vmem:[%s210 + $0x4d8] sm:$0xff]
        %v787 = vld [vmem:[%s210 + $0x4e0] sm:$0xff]
        %v788 = vld [vmem:[%s210 + $0x4e8] sm:$0xff]
        %v789 = vld [vmem:[%s210 + $0x4f0] sm:$0xff]
        %v790 = vld [vmem:[%s210 + $0x4f8] sm:$0xff]
        %v791 = vld [vmem:[%s210 + $0x500] sm:$0xff]
        %v792 = vld [vmem:[%s210 + $0x508] sm:$0xff]
        %v793 = vld [vmem:[%s210 + $0x510] sm:$0xff]
        %v794 = vld [vmem:[%s210 + $0x518] sm:$0xff]
        %v795 = vld [vmem:[%s210 + $0x520] sm:$0xff]
        %v796 = vld [vmem:[%s210 + $0x528] sm:$0xff]
        %v797 = vld [vmem:[%s210 + $0x530] sm:$0xff]
        %v798 = vld [vmem:[%s210 + $0x538] sm:$0xff]
        %v799 = vld [vmem:[%s210 + $0x540] sm:$0xff]
        %v800 = vld [vmem:[%s210 + $0x548] sm:$0xff]
        %v801 = vld [vmem:[%s210 + $0x550] sm:$0xff]
        %v802 = vld [vmem:[%s210 + $0x558] sm:$0xff]
        %v803 = vld [vmem:[%s210 + $0x560] sm:$0xff]
        %v804 = vld [vmem:[%s210 + $0x568] sm:$0xff]
        %v805 = vld [vmem:[%s210 + $0x570] sm:$0xff]
        %v806 = vld [vmem:[%s210 + $0x578] sm:$0xff]
        %v807 = vld [vmem:[%s210 + $0x580] sm:$0xff]
        %v808 = vld [vmem:[%s210 + $0x588] sm:$0xff]
        %v809 = vld [vmem:[%s210 + $0x590] sm:$0xff]
        %v810 = vld [vmem:[%s210 + $0x598] sm:$0xff]
        %v811 = vld [vmem:[%s210 + $0x5a0] sm:$0xff]
        %v812 = vld [vmem:[%s210 + $0x5a8] sm:$0xff]
        %v813 = vld [vmem:[%s210 + $0x5b0] sm:$0xff]
        %v814 = vld [vmem:[%s210 + $0x5b8] sm:$0xff]
        %v815 = vld [vmem:[%s210 + $0x5c0] sm:$0xff]
        %v816 = vld [vmem:[%s210 + $0x5c8] sm:$0xff]
        %v817 = vld [vmem:[%s210 + $0x5d0] sm:$0xff]
        %v818 = vld [vmem:[%s210 + $0x5d8] sm:$0xff]
        %v819 = vld [vmem:[%s210 + $0x5e0] sm:$0xff]
        %v820 = vld [vmem:[%s210 + $0x5e8] sm:$0xff]
        %v821 = vld [vmem:[%s210 + $0x5f0] sm:$0xff]
        %v822 = vld [vmem:[%s210 + $0x5f8] sm:$0xff]
        %v823 = vld [vmem:[%s210 + $0x600] sm:$0xff]
        %v824 = vld [vmem:[%s210 + $0x608] sm:$0xff]
        %v825 = vld [vmem:[%s210 + $0x610] sm:$0xff]
        %v826 = vld [vmem:[%s210 + $0x618] sm:$0xff]
        %v827 = vld [vmem:[%s210 + $0x620] sm:$0xff]
        %v828 = vld [vmem:[%s210 + $0x628] sm:$0xff]
        %v829 = vld [vmem:[%s210 + $0x630] sm:$0xff]
        %v830 = vld [vmem:[%s210 + $0x638] sm:$0xff]
        %v831 = vld [vmem:[%s210 + $0x640] sm:$0xff]
        %v832 = vld [vmem:[%s210 + $0x648] sm:$0xff]
        %v833 = vld [vmem:[%s210 + $0x650] sm:$0xff]
        %v834 = vld [vmem:[%s210 + $0x658] sm:$0xff]
        %v835 = vld [vmem:[%s210 + $0x660] sm:$0xff]
        %v836 = vld [vmem:[%s210 + $0x668] sm:$0xff]
        %v837 = vld [vmem:[%s210 + $0x670] sm:$0xff]
        %v838 = vld [vmem:[%s210 + $0x678] sm:$0xff]
        %v839 = vld [vmem:[%s210 + $0x680] sm:$0xff]
        %v840 = vld [vmem:[%s210 + $0x688] sm:$0xff]
        %v841 = vld [vmem:[%s210 + $0x690] sm:$0xff]
        %v842 = vld [vmem:[%s210 + $0x698] sm:$0xff]
        %v843 = vld [vmem:[%s210 + $0x6a0] sm:$0xff]
        %v844 = vld [vmem:[%s210 + $0x6a8] sm:$0xff]
        %v845 = vld [vmem:[%s210 + $0x6b0] sm:$0xff]
        %v846 = vld [vmem:[%s210 + $0x6b8] sm:$0xff]
        %v847 = vld [vmem:[%s210 + $0x6c0] sm:$0xff]
        %v848 = vld [vmem:[%s210 + $0x6c8] sm:$0xff]
        %v849 = vld [vmem:[%s210 + $0x6d0] sm:$0xff]
        %v850 = vld [vmem:[%s210 + $0x6d8] sm:$0xff]
        %v851 = vld [vmem:[%s210 + $0x6e0] sm:$0xff]
        %v852 = vld [vmem:[%s210 + $0x6e8] sm:$0xff]
        %v853 = vld [vmem:[%s210 + $0x6f0] sm:$0xff]
        %v854 = vld [vmem:[%s210 + $0x6f8] sm:$0xff]
        %v855 = vld [vmem:[%s210 + $0x700] sm:$0xff]
        %v856 = vld [vmem:[%s210 + $0x708] sm:$0xff]
        %v857 = vld [vmem:[%s210 + $0x710] sm:$0xff]
        %v858 = vld [vmem:[%s210 + $0x718] sm:$0xff]
        %v859 = vld [vmem:[%s210 + $0x720] sm:$0xff]
        %v860 = vld [vmem:[%s210 + $0x728] sm:$0xff]
        %v861 = vld [vmem:[%s210 + $0x730] sm:$0xff]
        %v862 = vld [vmem:[%s210 + $0x738] sm:$0xff]
        %v863 = vld [vmem:[%s210 + $0x740] sm:$0xff]
        %v864 = vld [vmem:[%s210 + $0x748] sm:$0xff]
        %v865 = vld [vmem:[%s210 + $0x750] sm:$0xff]
        %v866 = vld [vmem:[%s210 + $0x758] sm:$0xff]
        %v867 = vld [vmem:[%s210 + $0x760] sm:$0xff]
        %v868 = vld [vmem:[%s210 + $0x768] sm:$0xff]
        %v869 = vld [vmem:[%s210 + $0x770] sm:$0xff]
        %v870 = vld [vmem:[%s210 + $0x778] sm:$0xff]
        %v871 = vld [vmem:[%s210 + $0x780] sm:$0xff]
        %v872 = vld [vmem:[%s210 + $0x788] sm:$0xff]
        %v873 = vld [vmem:[%s210 + $0x790] sm:$0xff]
        %v874 = vld [vmem:[%s210 + $0x798] sm:$0xff]
        %v875 = vld [vmem:[%s210 + $0x7a0] sm:$0xff]
        %v876 = vld [vmem:[%s210 + $0x7a8] sm:$0xff]
        %v877 = vld [vmem:[%s210 + $0x7b0] sm:$0xff]
        %v878 = vld [vmem:[%s210 + $0x7b8] sm:$0xff]
        %v879 = vld [vmem:[%s210 + $0x7c0] sm:$0xff]
        %v880 = vld [vmem:[%s210 + $0x7c8] sm:$0xff]
        %v881 = vld [vmem:[%s210 + $0x7d0] sm:$0xff]
        %v882 = vld [vmem:[%s210 + $0x7d8] sm:$0xff]
        %v883 = vld [vmem:[%s210 + $0x7e0] sm:$0xff]
        %v884 = vld [vmem:[%s210 + $0x7e8] sm:$0xff]
        %v885 = vld [vmem:[%s210 + $0x7f0] sm:$0xff]
        %v886 = vld [vmem:[%s210 + $0x7f8] sm:$0xff]
        %887 = vxpose.xlu0.b32.start [1/16] %v375, 128
        %888 = vxpose.xlu0.b32.cont [2/16] %v377, 128
        %889 = vxpose.xlu0.b32.cont [3/16] %v379, 128
        %890 = vxpose.xlu0.b32.cont [4/16] %v381, 128
        %891 = vxpose.xlu0.b32.cont [5/16] %v383, 128
        %892 = vxpose.xlu0.b32.cont [6/16] %v385, 128
        %893 = vxpose.xlu0.b32.cont [7/16] %v387, 128
        %894 = vxpose.xlu0.b32.cont [8/16] %v389, 128
        %895 = vxpose.xlu0.b32.cont [9/16] %v391, 128
        %896 = vxpose.xlu0.b32.cont [10/16] %v393, 128
        %897 = vxpose.xlu0.b32.cont [11/16] %v395, 128
        %898 = vxpose.xlu0.b32.cont [12/16] %v397, 128
        %899 = vxpose.xlu0.b32.cont [13/16] %v399, 128
        %900 = vxpose.xlu0.b32.cont [14/16] %v401, 128
        %901 = vxpose.xlu0.b32.cont [15/16] %v403, 128
        %902 = vxpose.xlu0.b32.end [16/16] %v405, 128
        %v903 = vpop.trf.xlu0
        %v904 = vpop.trf.xlu0
        %v905 = vpop.trf.xlu0
        %v906 = vpop.trf.xlu0
        %v907 = vpop.trf.xlu0
        %v908 = vpop.trf.xlu0
        %v909 = vpop.trf.xlu0
        %v910 = vpop.trf.xlu0
        %v911 = vpop.trf.xlu0
        %v912 = vpop.trf.xlu0
        %v913 = vpop.trf.xlu0
        %v914 = vpop.trf.xlu0
        %v915 = vpop.trf.xlu0
        %v916 = vpop.trf.xlu0
        %v917 = vpop.trf.xlu0
        %v918 = vpop.trf.xlu0
        %919 = vxpose.xlu0.b32.start [1/16] %v376, 128
        %920 = vxpose.xlu0.b32.cont [2/16] %v378, 128
        %921 = vxpose.xlu0.b32.cont [3/16] %v380, 128
        %922 = vxpose.xlu0.b32.cont [4/16] %v382, 128
        %923 = vxpose.xlu0.b32.cont [5/16] %v384, 128
        %924 = vxpose.xlu0.b32.cont [6/16] %v386, 128
        %925 = vxpose.xlu0.b32.cont [7/16] %v388, 128
        %926 = vxpose.xlu0.b32.cont [8/16] %v390, 128
        %927 = vxpose.xlu0.b32.cont [9/16] %v392, 128
        %928 = vxpose.xlu0.b32.cont [10/16] %v394, 128
        %929 = vxpose.xlu0.b32.cont [11/16] %v396, 128
        %930 = vxpose.xlu0.b32.cont [12/16] %v398, 128
        %931 = vxpose.xlu0.b32.cont [13/16] %v400, 128
        %932 = vxpose.xlu0.b32.cont [14/16] %v402, 128
        %933 = vxpose.xlu0.b32.cont [15/16] %v404, 128
        %934 = vxpose.xlu0.b32.end [16/16] %v406, 128
        %v935 = vpop.trf.xlu0
        %v936 = vpop.trf.xlu0
        %v937 = vpop.trf.xlu0
        %v938 = vpop.trf.xlu0
        %v939 = vpop.trf.xlu0
        %v940 = vpop.trf.xlu0
        %v941 = vpop.trf.xlu0
        %v942 = vpop.trf.xlu0
        %v943 = vpop.trf.xlu0
        %v944 = vpop.trf.xlu0
        %v945 = vpop.trf.xlu0
        %v946 = vpop.trf.xlu0
        %v947 = vpop.trf.xlu0
        %v948 = vpop.trf.xlu0
        %v949 = vpop.trf.xlu0
        %v950 = vpop.trf.xlu0
        %951 = vxpose.xlu0.b32.start [1/16] %v407, 128
        %952 = vxpose.xlu0.b32.cont [2/16] %v409, 128
        %953 = vxpose.xlu0.b32.cont [3/16] %v411, 128
        %954 = vxpose.xlu0.b32.cont [4/16] %v413, 128
        %955 = vxpose.xlu0.b32.cont [5/16] %v415, 128
        %956 = vxpose.xlu0.b32.cont [6/16] %v417, 128
        %957 = vxpose.xlu0.b32.cont [7/16] %v419, 128
        %958 = vxpose.xlu0.b32.cont [8/16] %v421, 128
        %959 = vxpose.xlu0.b32.cont [9/16] %v423, 128
        %960 = vxpose.xlu0.b32.cont [10/16] %v425, 128
        %961 = vxpose.xlu0.b32.cont [11/16] %v427, 128
        %962 = vxpose.xlu0.b32.cont [12/16] %v429, 128
        %963 = vxpose.xlu0.b32.cont [13/16] %v431, 128
        %964 = vxpose.xlu0.b32.cont [14/16] %v433, 128
        %965 = vxpose.xlu0.b32.cont [15/16] %v435, 128
        %966 = vxpose.xlu0.b32.end [16/16] %v437, 128
        %v967 = vpop.trf.xlu0
        %v968 = vpop.trf.xlu0
        %v969 = vpop.trf.xlu0
        %v970 = vpop.trf.xlu0
        %v971 = vpop.trf.xlu0
        %v972 = vpop.trf.xlu0
        %v973 = vpop.trf.xlu0
        %v974 = vpop.trf.xlu0
        %v975 = vpop.trf.xlu0
        %v976 = vpop.trf.xlu0
        %v977 = vpop.trf.xlu0
        %v978 = vpop.trf.xlu0
        %v979 = vpop.trf.xlu0
        %v980 = vpop.trf.xlu0
        %v981 = vpop.trf.xlu0
        %v982 = vpop.trf.xlu0
        %983 = vxpose.xlu0.b32.start [1/16] %v408, 128
        %984 = vxpose.xlu0.b32.cont [2/16] %v410, 128
        %985 = vxpose.xlu0.b32.cont [3/16] %v412, 128
        %986 = vxpose.xlu0.b32.cont [4/16] %v414, 128
        %987 = vxpose.xlu0.b32.cont [5/16] %v416, 128
        %988 = vxpose.xlu0.b32.cont [6/16] %v418, 128
        %989 = vxpose.xlu0.b32.cont [7/16] %v420, 128
        %990 = vxpose.xlu0.b32.cont [8/16] %v422, 128
        %991 = vxpose.xlu0.b32.cont [9/16] %v424, 128
        %992 = vxpose.xlu0.b32.cont [10/16] %v426, 128
        %993 = vxpose.xlu0.b32.cont [11/16] %v428, 128
        %994 = vxpose.xlu0.b32.cont [12/16] %v430, 128
        %995 = vxpose.xlu0.b32.cont [13/16] %v432, 128
        %996 = vxpose.xlu0.b32.cont [14/16] %v434, 128
        %997 = vxpose.xlu0.b32.cont [15/16] %v436, 128
        %998 = vxpose.xlu0.b32.end [16/16] %v438, 128
        %v999 = vpop.trf.xlu0
        %v1000 = vpop.trf.xlu0
        %v1001 = vpop.trf.xlu0
        %v1002 = vpop.trf.xlu0
        %v1003 = vpop.trf.xlu0
        %v1004 = vpop.trf.xlu0
        %v1005 = vpop.trf.xlu0
        %v1006 = vpop.trf.xlu0
        %v1007 = vpop.trf.xlu0
        %v1008 = vpop.trf.xlu0
        %v1009 = vpop.trf.xlu0
        %v1010 = vpop.trf.xlu0
        %v1011 = vpop.trf.xlu0
        %v1012 = vpop.trf.xlu0
        %v1013 = vpop.trf.xlu0
        %v1014 = vpop.trf.xlu0
        %1015 = vxpose.xlu0.b32.start [1/16] %v439, 128
        %1016 = vxpose.xlu0.b32.cont [2/16] %v441, 128
        %1017 = vxpose.xlu0.b32.cont [3/16] %v443, 128
        %1018 = vxpose.xlu0.b32.cont [4/16] %v445, 128
        %1019 = vxpose.xlu0.b32.cont [5/16] %v447, 128
        %1020 = vxpose.xlu0.b32.cont [6/16] %v449, 128
        %1021 = vxpose.xlu0.b32.cont [7/16] %v451, 128
        %1022 = vxpose.xlu0.b32.cont [8/16] %v453, 128
        %1023 = vxpose.xlu0.b32.cont [9/16] %v455, 128
        %1024 = vxpose.xlu0.b32.cont [10/16] %v457, 128
        %1025 = vxpose.xlu0.b32.cont [11/16] %v459, 128
        %1026 = vxpose.xlu0.b32.cont [12/16] %v461, 128
        %1027 = vxpose.xlu0.b32.cont [13/16] %v463, 128
        %1028 = vxpose.xlu0.b32.cont [14/16] %v465, 128
        %1029 = vxpose.xlu0.b32.cont [15/16] %v467, 128
        %1030 = vxpose.xlu0.b32.end [16/16] %v469, 128
        %v1031 = vpop.trf.xlu0
        %v1032 = vpop.trf.xlu0
        %v1033 = vpop.trf.xlu0
        %v1034 = vpop.trf.xlu0
        %v1035 = vpop.trf.xlu0
        %v1036 = vpop.trf.xlu0
        %v1037 = vpop.trf.xlu0
        %v1038 = vpop.trf.xlu0
        %v1039 = vpop.trf.xlu0
        %v1040 = vpop.trf.xlu0
        %v1041 = vpop.trf.xlu0
        %v1042 = vpop.trf.xlu0
        %v1043 = vpop.trf.xlu0
        %v1044 = vpop.trf.xlu0
        %v1045 = vpop.trf.xlu0
        %v1046 = vpop.trf.xlu0
        %1047 = vxpose.xlu0.b32.start [1/16] %v440, 128
        %1048 = vxpose.xlu0.b32.cont [2/16] %v442, 128
        %1049 = vxpose.xlu0.b32.cont [3/16] %v444, 128
        %1050 = vxpose.xlu0.b32.cont [4/16] %v446, 128
        %1051 = vxpose.xlu0.b32.cont [5/16] %v448, 128
        %1052 = vxpose.xlu0.b32.cont [6/16] %v450, 128
        %1053 = vxpose.xlu0.b32.cont [7/16] %v452, 128
        %1054 = vxpose.xlu0.b32.cont [8/16] %v454, 128
        %1055 = vxpose.xlu0.b32.cont [9/16] %v456, 128
        %1056 = vxpose.xlu0.b32.cont [10/16] %v458, 128
        %1057 = vxpose.xlu0.b32.cont [11/16] %v460, 128
        %1058 = vxpose.xlu0.b32.cont [12/16] %v462, 128
        %1059 = vxpose.xlu0.b32.cont [13/16] %v464, 128
        %1060 = vxpose.xlu0.b32.cont [14/16] %v466, 128
        %1061 = vxpose.xlu0.b32.cont [15/16] %v468, 128
        %1062 = vxpose.xlu0.b32.end [16/16] %v470, 128
        %v1063 = vpop.trf.xlu0
        %v1064 = vpop.trf.xlu0
        %v1065 = vpop.trf.xlu0
        %v1066 = vpop.trf.xlu0
        %v1067 = vpop.trf.xlu0
        %v1068 = vpop.trf.xlu0
        %v1069 = vpop.trf.xlu0
        %v1070 = vpop.trf.xlu0
        %v1071 = vpop.trf.xlu0
        %v1072 = vpop.trf.xlu0
        %v1073 = vpop.trf.xlu0
        %v1074 = vpop.trf.xlu0
        %v1075 = vpop.trf.xlu0
        %v1076 = vpop.trf.xlu0
        %v1077 = vpop.trf.xlu0
        %v1078 = vpop.trf.xlu0
        %1079 = vxpose.xlu0.b32.start [1/16] %v471, 128
        %1080 = vxpose.xlu0.b32.cont [2/16] %v473, 128
        %1081 = vxpose.xlu0.b32.cont [3/16] %v475, 128
        %1082 = vxpose.xlu0.b32.cont [4/16] %v477, 128
        %1083 = vxpose.xlu0.b32.cont [5/16] %v479, 128
        %1084 = vxpose.xlu0.b32.cont [6/16] %v481, 128
        %1085 = vxpose.xlu0.b32.cont [7/16] %v483, 128
        %1086 = vxpose.xlu0.b32.cont [8/16] %v485, 128
        %1087 = vxpose.xlu0.b32.cont [9/16] %v487, 128
        %1088 = vxpose.xlu0.b32.cont [10/16] %v489, 128
        %1089 = vxpose.xlu0.b32.cont [11/16] %v491, 128
        %1090 = vxpose.xlu0.b32.cont [12/16] %v493, 128
        %1091 = vxpose.xlu0.b32.cont [13/16] %v495, 128
        %1092 = vxpose.xlu0.b32.cont [14/16] %v497, 128
        %1093 = vxpose.xlu0.b32.cont [15/16] %v499, 128
        %1094 = vxpose.xlu0.b32.end [16/16] %v501, 128
        %v1095 = vpop.trf.xlu0
        %v1096 = vpop.trf.xlu0
        %v1097 = vpop.trf.xlu0
        %v1098 = vpop.trf.xlu0
        %v1099 = vpop.trf.xlu0
        %v1100 = vpop.trf.xlu0
        %v1101 = vpop.trf.xlu0
        %v1102 = vpop.trf.xlu0
        %v1103 = vpop.trf.xlu0
        %v1104 = vpop.trf.xlu0
        %v1105 = vpop.trf.xlu0
        %v1106 = vpop.trf.xlu0
        %v1107 = vpop.trf.xlu0
        %v1108 = vpop.trf.xlu0
        %v1109 = vpop.trf.xlu0
        %v1110 = vpop.trf.xlu0
        %1111 = vxpose.xlu0.b32.start [1/16] %v472, 128
        %1112 = vxpose.xlu0.b32.cont [2/16] %v474, 128
        %1113 = vxpose.xlu0.b32.cont [3/16] %v476, 128
        %1114 = vxpose.xlu0.b32.cont [4/16] %v478, 128
        %1115 = vxpose.xlu0.b32.cont [5/16] %v480, 128
        %1116 = vxpose.xlu0.b32.cont [6/16] %v482, 128
        %1117 = vxpose.xlu0.b32.cont [7/16] %v484, 128
        %1118 = vxpose.xlu0.b32.cont [8/16] %v486, 128
        %1119 = vxpose.xlu0.b32.cont [9/16] %v488, 128
        %1120 = vxpose.xlu0.b32.cont [10/16] %v490, 128
        %1121 = vxpose.xlu0.b32.cont [11/16] %v492, 128
        %1122 = vxpose.xlu0.b32.cont [12/16] %v494, 128
        %1123 = vxpose.xlu0.b32.cont [13/16] %v496, 128
        %1124 = vxpose.xlu0.b32.cont [14/16] %v498, 128
        %1125 = vxpose.xlu0.b32.cont [15/16] %v500, 128
        %1126 = vxpose.xlu0.b32.end [16/16] %v502, 128
        %v1127 = vpop.trf.xlu0
        %v1128 = vpop.trf.xlu0
        %v1129 = vpop.trf.xlu0
        %v1130 = vpop.trf.xlu0
        %v1131 = vpop.trf.xlu0
        %v1132 = vpop.trf.xlu0
        %v1133 = vpop.trf.xlu0
        %v1134 = vpop.trf.xlu0
        %v1135 = vpop.trf.xlu0
        %v1136 = vpop.trf.xlu0
        %v1137 = vpop.trf.xlu0
        %v1138 = vpop.trf.xlu0
        %v1139 = vpop.trf.xlu0
        %v1140 = vpop.trf.xlu0
        %v1141 = vpop.trf.xlu0
        %v1142 = vpop.trf.xlu0
        %1143 = vxpose.xlu0.b32.start [1/16] %v503, 128
        %1144 = vxpose.xlu0.b32.cont [2/16] %v505, 128
        %1145 = vxpose.xlu0.b32.cont [3/16] %v507, 128
        %1146 = vxpose.xlu0.b32.cont [4/16] %v509, 128
        %1147 = vxpose.xlu0.b32.cont [5/16] %v511, 128
        %1148 = vxpose.xlu0.b32.cont [6/16] %v513, 128
        %1149 = vxpose.xlu0.b32.cont [7/16] %v515, 128
        %1150 = vxpose.xlu0.b32.cont [8/16] %v517, 128
        %1151 = vxpose.xlu0.b32.cont [9/16] %v519, 128
        %1152 = vxpose.xlu0.b32.cont [10/16] %v521, 128
        %1153 = vxpose.xlu0.b32.cont [11/16] %v523, 128
        %1154 = vxpose.xlu0.b32.cont [12/16] %v525, 128
        %1155 = vxpose.xlu0.b32.cont [13/16] %v527, 128
        %1156 = vxpose.xlu0.b32.cont [14/16] %v529, 128
        %1157 = vxpose.xlu0.b32.cont [15/16] %v531, 128
        %1158 = vxpose.xlu0.b32.end [16/16] %v533, 128
        %v1159 = vpop.trf.xlu0
        %v1160 = vpop.trf.xlu0
        %v1161 = vpop.trf.xlu0
        %v1162 = vpop.trf.xlu0
        %v1163 = vpop.trf.xlu0
        %v1164 = vpop.trf.xlu0
        %v1165 = vpop.trf.xlu0
        %v1166 = vpop.trf.xlu0
        %v1167 = vpop.trf.xlu0
        %v1168 = vpop.trf.xlu0
        %v1169 = vpop.trf.xlu0
        %v1170 = vpop.trf.xlu0
        %v1171 = vpop.trf.xlu0
        %v1172 = vpop.trf.xlu0
        %v1173 = vpop.trf.xlu0
        %v1174 = vpop.trf.xlu0
        %1175 = vxpose.xlu0.b32.start [1/16] %v504, 128
        %1176 = vxpose.xlu0.b32.cont [2/16] %v506, 128
        %1177 = vxpose.xlu0.b32.cont [3/16] %v508, 128
        %1178 = vxpose.xlu0.b32.cont [4/16] %v510, 128
        %1179 = vxpose.xlu0.b32.cont [5/16] %v512, 128
        %1180 = vxpose.xlu0.b32.cont [6/16] %v514, 128
        %1181 = vxpose.xlu0.b32.cont [7/16] %v516, 128
        %1182 = vxpose.xlu0.b32.cont [8/16] %v518, 128
        %1183 = vxpose.xlu0.b32.cont [9/16] %v520, 128
        %1184 = vxpose.xlu0.b32.cont [10/16] %v522, 128
        %1185 = vxpose.xlu0.b32.cont [11/16] %v524, 128
        %1186 = vxpose.xlu0.b32.cont [12/16] %v526, 128
        %1187 = vxpose.xlu0.b32.cont [13/16] %v528, 128
        %1188 = vxpose.xlu0.b32.cont [14/16] %v530, 128
        %1189 = vxpose.xlu0.b32.cont [15/16] %v532, 128
        %1190 = vxpose.xlu0.b32.end [16/16] %v534, 128
        %v1191 = vpop.trf.xlu0
        %v1192 = vpop.trf.xlu0
        %v1193 = vpop.trf.xlu0
        %v1194 = vpop.trf.xlu0
        %v1195 = vpop.trf.xlu0
        %v1196 = vpop.trf.xlu0
        %v1197 = vpop.trf.xlu0
        %v1198 = vpop.trf.xlu0
        %v1199 = vpop.trf.xlu0
        %v1200 = vpop.trf.xlu0
        %v1201 = vpop.trf.xlu0
        %v1202 = vpop.trf.xlu0
        %v1203 = vpop.trf.xlu0
        %v1204 = vpop.trf.xlu0
        %v1205 = vpop.trf.xlu0
        %v1206 = vpop.trf.xlu0
        %1207 = vxpose.xlu0.b32.start [1/16] %v535, 128
        %1208 = vxpose.xlu0.b32.cont [2/16] %v537, 128
        %1209 = vxpose.xlu0.b32.cont [3/16] %v539, 128
        %1210 = vxpose.xlu0.b32.cont [4/16] %v541, 128
        %1211 = vxpose.xlu0.b32.cont [5/16] %v543, 128
        %1212 = vxpose.xlu0.b32.cont [6/16] %v545, 128
        %1213 = vxpose.xlu0.b32.cont [7/16] %v547, 128
        %1214 = vxpose.xlu0.b32.cont [8/16] %v549, 128
        %1215 = vxpose.xlu0.b32.cont [9/16] %v551, 128
        %1216 = vxpose.xlu0.b32.cont [10/16] %v553, 128
        %1217 = vxpose.xlu0.b32.cont [11/16] %v555, 128
        %1218 = vxpose.xlu0.b32.cont [12/16] %v557, 128
        %1219 = vxpose.xlu0.b32.cont [13/16] %v559, 128
        %1220 = vxpose.xlu0.b32.cont [14/16] %v561, 128
        %1221 = vxpose.xlu0.b32.cont [15/16] %v563, 128
        %1222 = vxpose.xlu0.b32.end [16/16] %v565, 128
        %v1223 = vpop.trf.xlu0
        %v1224 = vpop.trf.xlu0
        %v1225 = vpop.trf.xlu0
        %v1226 = vpop.trf.xlu0
        %v1227 = vpop.trf.xlu0
        %v1228 = vpop.trf.xlu0
        %v1229 = vpop.trf.xlu0
        %v1230 = vpop.trf.xlu0
        %v1231 = vpop.trf.xlu0
        %v1232 = vpop.trf.xlu0
        %v1233 = vpop.trf.xlu0
        %v1234 = vpop.trf.xlu0
        %v1235 = vpop.trf.xlu0
        %v1236 = vpop.trf.xlu0
        %v1237 = vpop.trf.xlu0
        %v1238 = vpop.trf.xlu0
        %1239 = vxpose.xlu0.b32.start [1/16] %v536, 128
        %1240 = vxpose.xlu0.b32.cont [2/16] %v538, 128
        %1241 = vxpose.xlu0.b32.cont [3/16] %v540, 128
        %1242 = vxpose.xlu0.b32.cont [4/16] %v542, 128
        %1243 = vxpose.xlu0.b32.cont [5/16] %v544, 128
        %1244 = vxpose.xlu0.b32.cont [6/16] %v546, 128
        %1245 = vxpose.xlu0.b32.cont [7/16] %v548, 128
        %1246 = vxpose.xlu0.b32.cont [8/16] %v550, 128
        %1247 = vxpose.xlu0.b32.cont [9/16] %v552, 128
        %1248 = vxpose.xlu0.b32.cont [10/16] %v554, 128
        %1249 = vxpose.xlu0.b32.cont [11/16] %v556, 128
        %1250 = vxpose.xlu0.b32.cont [12/16] %v558, 128
        %1251 = vxpose.xlu0.b32.cont [13/16] %v560, 128
        %1252 = vxpose.xlu0.b32.cont [14/16] %v562, 128
        %1253 = vxpose.xlu0.b32.cont [15/16] %v564, 128
        %1254 = vxpose.xlu0.b32.end [16/16] %v566, 128
        %v1255 = vpop.trf.xlu0
        %v1256 = vpop.trf.xlu0
        %v1257 = vpop.trf.xlu0
        %v1258 = vpop.trf.xlu0
        %v1259 = vpop.trf.xlu0
        %v1260 = vpop.trf.xlu0
        %v1261 = vpop.trf.xlu0
        %v1262 = vpop.trf.xlu0
        %v1263 = vpop.trf.xlu0
        %v1264 = vpop.trf.xlu0
        %v1265 = vpop.trf.xlu0
        %v1266 = vpop.trf.xlu0
        %v1267 = vpop.trf.xlu0
        %v1268 = vpop.trf.xlu0
        %v1269 = vpop.trf.xlu0
        %v1270 = vpop.trf.xlu0
        %1271 = vxpose.xlu0.b32.start [1/16] %v567, 128
        %1272 = vxpose.xlu0.b32.cont [2/16] %v569, 128
        %1273 = vxpose.xlu0.b32.cont [3/16] %v571, 128
        %1274 = vxpose.xlu0.b32.cont [4/16] %v573, 128
        %1275 = vxpose.xlu0.b32.cont [5/16] %v575, 128
        %1276 = vxpose.xlu0.b32.cont [6/16] %v577, 128
        %1277 = vxpose.xlu0.b32.cont [7/16] %v579, 128
        %1278 = vxpose.xlu0.b32.cont [8/16] %v581, 128
        %1279 = vxpose.xlu0.b32.cont [9/16] %v583, 128
        %1280 = vxpose.xlu0.b32.cont [10/16] %v585, 128
        %1281 = vxpose.xlu0.b32.cont [11/16] %v587, 128
        %1282 = vxpose.xlu0.b32.cont [12/16] %v589, 128
        %1283 = vxpose.xlu0.b32.cont [13/16] %v591, 128
        %1284 = vxpose.xlu0.b32.cont [14/16] %v593, 128
        %1285 = vxpose.xlu0.b32.cont [15/16] %v595, 128
        %1286 = vxpose.xlu0.b32.end [16/16] %v597, 128
        %v1287 = vpop.trf.xlu0
        %v1288 = vpop.trf.xlu0
        %v1289 = vpop.trf.xlu0
        %v1290 = vpop.trf.xlu0
        %v1291 = vpop.trf.xlu0
        %v1292 = vpop.trf.xlu0
        %v1293 = vpop.trf.xlu0
        %v1294 = vpop.trf.xlu0
        %v1295 = vpop.trf.xlu0
        %v1296 = vpop.trf.xlu0
        %v1297 = vpop.trf.xlu0
        %v1298 = vpop.trf.xlu0
        %v1299 = vpop.trf.xlu0
        %v1300 = vpop.trf.xlu0
        %v1301 = vpop.trf.xlu0
        %v1302 = vpop.trf.xlu0
        %1303 = vxpose.xlu0.b32.start [1/16] %v568, 128
        %1304 = vxpose.xlu0.b32.cont [2/16] %v570, 128
        %1305 = vxpose.xlu0.b32.cont [3/16] %v572, 128
        %1306 = vxpose.xlu0.b32.cont [4/16] %v574, 128
        %1307 = vxpose.xlu0.b32.cont [5/16] %v576, 128
        %1308 = vxpose.xlu0.b32.cont [6/16] %v578, 128
        %1309 = vxpose.xlu0.b32.cont [7/16] %v580, 128
        %1310 = vxpose.xlu0.b32.cont [8/16] %v582, 128
        %1311 = vxpose.xlu0.b32.cont [9/16] %v584, 128
        %1312 = vxpose.xlu0.b32.cont [10/16] %v586, 128
        %1313 = vxpose.xlu0.b32.cont [11/16] %v588, 128
        %1314 = vxpose.xlu0.b32.cont [12/16] %v590, 128
        %1315 = vxpose.xlu0.b32.cont [13/16] %v592, 128
        %1316 = vxpose.xlu0.b32.cont [14/16] %v594, 128
        %1317 = vxpose.xlu0.b32.cont [15/16] %v596, 128
        %1318 = vxpose.xlu0.b32.end [16/16] %v598, 128
        %v1319 = vpop.trf.xlu0
        %v1320 = vpop.trf.xlu0
        %v1321 = vpop.trf.xlu0
        %v1322 = vpop.trf.xlu0
        %v1323 = vpop.trf.xlu0
        %v1324 = vpop.trf.xlu0
        %v1325 = vpop.trf.xlu0
        %v1326 = vpop.trf.xlu0
        %v1327 = vpop.trf.xlu0
        %v1328 = vpop.trf.xlu0
        %v1329 = vpop.trf.xlu0
        %v1330 = vpop.trf.xlu0
        %v1331 = vpop.trf.xlu0
        %v1332 = vpop.trf.xlu0
        %v1333 = vpop.trf.xlu0
        %v1334 = vpop.trf.xlu0
        %1335 = vxpose.xlu0.b32.start [1/16] %v599, 128
        %1336 = vxpose.xlu0.b32.cont [2/16] %v601, 128
        %1337 = vxpose.xlu0.b32.cont [3/16] %v603, 128
        %1338 = vxpose.xlu0.b32.cont [4/16] %v605, 128
        %1339 = vxpose.xlu0.b32.cont [5/16] %v607, 128
        %1340 = vxpose.xlu0.b32.cont [6/16] %v609, 128
        %1341 = vxpose.xlu0.b32.cont [7/16] %v611, 128
        %1342 = vxpose.xlu0.b32.cont [8/16] %v613, 128
        %1343 = vxpose.xlu0.b32.cont [9/16] %v615, 128
        %1344 = vxpose.xlu0.b32.cont [10/16] %v617, 128
        %1345 = vxpose.xlu0.b32.cont [11/16] %v619, 128
        %1346 = vxpose.xlu0.b32.cont [12/16] %v621, 128
        %1347 = vxpose.xlu0.b32.cont [13/16] %v623, 128
        %1348 = vxpose.xlu0.b32.cont [14/16] %v625, 128
        %1349 = vxpose.xlu0.b32.cont [15/16] %v627, 128
        %1350 = vxpose.xlu0.b32.end [16/16] %v629, 128
        %v1351 = vpop.trf.xlu0
        %v1352 = vpop.trf.xlu0
        %v1353 = vpop.trf.xlu0
        %v1354 = vpop.trf.xlu0
        %v1355 = vpop.trf.xlu0
        %v1356 = vpop.trf.xlu0
        %v1357 = vpop.trf.xlu0
        %v1358 = vpop.trf.xlu0
        %v1359 = vpop.trf.xlu0
        %v1360 = vpop.trf.xlu0
        %v1361 = vpop.trf.xlu0
        %v1362 = vpop.trf.xlu0
        %v1363 = vpop.trf.xlu0
        %v1364 = vpop.trf.xlu0
        %v1365 = vpop.trf.xlu0
        %v1366 = vpop.trf.xlu0
        %1367 = vxpose.xlu0.b32.start [1/16] %v600, 128
        %1368 = vxpose.xlu0.b32.cont [2/16] %v602, 128
        %1369 = vxpose.xlu0.b32.cont [3/16] %v604, 128
        %1370 = vxpose.xlu0.b32.cont [4/16] %v606, 128
        %1371 = vxpose.xlu0.b32.cont [5/16] %v608, 128
        %1372 = vxpose.xlu0.b32.cont [6/16] %v610, 128
        %1373 = vxpose.xlu0.b32.cont [7/16] %v612, 128
        %1374 = vxpose.xlu0.b32.cont [8/16] %v614, 128
        %1375 = vxpose.xlu0.b32.cont [9/16] %v616, 128
        %1376 = vxpose.xlu0.b32.cont [10/16] %v618, 128
        %1377 = vxpose.xlu0.b32.cont [11/16] %v620, 128
        %1378 = vxpose.xlu0.b32.cont [12/16] %v622, 128
        %1379 = vxpose.xlu0.b32.cont [13/16] %v624, 128
        %1380 = vxpose.xlu0.b32.cont [14/16] %v626, 128
        %1381 = vxpose.xlu0.b32.cont [15/16] %v628, 128
        %1382 = vxpose.xlu0.b32.end [16/16] %v630, 128
        %v1383 = vpop.trf.xlu0
        %v1384 = vpop.trf.xlu0
        %v1385 = vpop.trf.xlu0
        %v1386 = vpop.trf.xlu0
        %v1387 = vpop.trf.xlu0
        %v1388 = vpop.trf.xlu0
        %v1389 = vpop.trf.xlu0
        %v1390 = vpop.trf.xlu0
        %v1391 = vpop.trf.xlu0
        %v1392 = vpop.trf.xlu0
        %v1393 = vpop.trf.xlu0
        %v1394 = vpop.trf.xlu0
        %v1395 = vpop.trf.xlu0
        %v1396 = vpop.trf.xlu0
        %v1397 = vpop.trf.xlu0
        %v1398 = vpop.trf.xlu0
        %1399 = vmatpush.msra.mxu0 %v661
        %1400 = vmatpush.msra.mxu0 %v659
        %1401 = vmatpush.msra.mxu0 %v657
        %1402 = vmatpush.msra.mxu0 %v655
        %1403 = vmatpush.msra.mxu0 %v653
        %1404 = vmatpush.msra.mxu0 %v651
        %1405 = vmatpush.msra.mxu0 %v649
        %1406 = vmatpush.msra.mxu0 %v647
        %1407 = vmatpush.msra.mxu0 %v645
        %1408 = vmatpush.msra.mxu0 %v643
        %1409 = vmatpush.msra.mxu0 %v641
        %1410 = vmatpush.msra.mxu0 %v639
        %1411 = vmatpush.msra.mxu0 %v637
        %1412 = vmatpush.msra.mxu0 %v635
        %1413 = vmatpush.msra.mxu0 %v633
        %1414 = vmatpush.msra.mxu0 %v631
        %1415 = vmatmul.f32.gmra.mxu0 %v903
        %v1416 = vpop.f32.mrf.mxu0
        %v1417 = vadd.f32 0.0, %v1416
        %1418 = vmatmul.f32.gmra.mxu0 %v904
        %v1419 = vpop.f32.mrf.mxu0
        %v1420 = vadd.f32 0.0, %v1419
        %1421 = vmatmul.f32.gmra.mxu0 %v905
        %v1422 = vpop.f32.mrf.mxu0
        %v1423 = vadd.f32 0.0, %v1422
        %1424 = vmatmul.f32.gmra.mxu0 %v906
        %v1425 = vpop.f32.mrf.mxu0
        %v1426 = vadd.f32 0.0, %v1425
        %1427 = vmatmul.f32.gmra.mxu0 %v907
        %v1428 = vpop.f32.mrf.mxu0
        %v1429 = vadd.f32 0.0, %v1428
        %1430 = vmatmul.f32.gmra.mxu0 %v908
        %v1431 = vpop.f32.mrf.mxu0
        %v1432 = vadd.f32 0.0, %v1431
        %1433 = vmatmul.f32.gmra.mxu0 %v909
        %v1434 = vpop.f32.mrf.mxu0
        %v1435 = vadd.f32 0.0, %v1434
        %1436 = vmatmul.f32.gmra.mxu0 %v910
        %v1437 = vpop.f32.mrf.mxu0
        %v1438 = vadd.f32 0.0, %v1437
        %1439 = vmatmul.f32.gmra.mxu0 %v911
        %v1440 = vpop.f32.mrf.mxu0
        %v1441 = vadd.f32 0.0, %v1440
        %1442 = vmatmul.f32.gmra.mxu0 %v912
        %v1443 = vpop.f32.mrf.mxu0
        %v1444 = vadd.f32 0.0, %v1443
        %1445 = vmatmul.f32.gmra.mxu0 %v913
        %v1446 = vpop.f32.mrf.mxu0
        %v1447 = vadd.f32 0.0, %v1446
        %1448 = vmatmul.f32.gmra.mxu0 %v914
        %v1449 = vpop.f32.mrf.mxu0
        %v1450 = vadd.f32 0.0, %v1449
        %1451 = vmatmul.f32.gmra.mxu0 %v915
        %v1452 = vpop.f32.mrf.mxu0
        %v1453 = vadd.f32 0.0, %v1452
        %1454 = vmatmul.f32.gmra.mxu0 %v916
        %v1455 = vpop.f32.mrf.mxu0
        %v1456 = vadd.f32 0.0, %v1455
        %1457 = vmatmul.f32.gmra.mxu0 %v917
        %v1458 = vpop.f32.mrf.mxu0
        %v1459 = vadd.f32 0.0, %v1458
        %1460 = vmatmul.f32.gmra.mxu0 %v918
        %v1461 = vpop.f32.mrf.mxu0
        %v1462 = vadd.f32 0.0, %v1461
        %1463 = vmatmul.f32.gmra.mxu0 %v935
        %v1464 = vpop.f32.mrf.mxu0
        %v1465 = vadd.f32 0.0, %v1464
        %1466 = vmatmul.f32.gmra.mxu0 %v936
        %v1467 = vpop.f32.mrf.mxu0
        %v1468 = vadd.f32 0.0, %v1467
        %1469 = vmatmul.f32.gmra.mxu0 %v937
        %v1470 = vpop.f32.mrf.mxu0
        %v1471 = vadd.f32 0.0, %v1470
        %1472 = vmatmul.f32.gmra.mxu0 %v938
        %v1473 = vpop.f32.mrf.mxu0
        %v1474 = vadd.f32 0.0, %v1473
        %1475 = vmatmul.f32.gmra.mxu0 %v939
        %v1476 = vpop.f32.mrf.mxu0
        %v1477 = vadd.f32 0.0, %v1476
        %1478 = vmatmul.f32.gmra.mxu0 %v940
        %v1479 = vpop.f32.mrf.mxu0
        %v1480 = vadd.f32 0.0, %v1479
        %1481 = vmatmul.f32.gmra.mxu0 %v941
        %v1482 = vpop.f32.mrf.mxu0
        %v1483 = vadd.f32 0.0, %v1482
        %1484 = vmatmul.f32.gmra.mxu0 %v942
        %v1485 = vpop.f32.mrf.mxu0
        %v1486 = vadd.f32 0.0, %v1485
        %1487 = vmatmul.f32.gmra.mxu0 %v943
        %v1488 = vpop.f32.mrf.mxu0
        %v1489 = vadd.f32 0.0, %v1488
        %1490 = vmatmul.f32.gmra.mxu0 %v944
        %v1491 = vpop.f32.mrf.mxu0
        %v1492 = vadd.f32 0.0, %v1491
        %1493 = vmatmul.f32.gmra.mxu0 %v945
        %v1494 = vpop.f32.mrf.mxu0
        %v1495 = vadd.f32 0.0, %v1494
        %1496 = vmatmul.f32.gmra.mxu0 %v946
        %v1497 = vpop.f32.mrf.mxu0
        %v1498 = vadd.f32 0.0, %v1497
        %1499 = vmatmul.f32.gmra.mxu0 %v947
        %v1500 = vpop.f32.mrf.mxu0
        %v1501 = vadd.f32 0.0, %v1500
        %1502 = vmatmul.f32.gmra.mxu0 %v948
        %v1503 = vpop.f32.mrf.mxu0
        %v1504 = vadd.f32 0.0, %v1503
        %1505 = vmatmul.f32.gmra.mxu0 %v949
        %v1506 = vpop.f32.mrf.mxu0
        %v1507 = vadd.f32 0.0, %v1506
        %1508 = vmatmul.f32.gmra.mxu0 %v950
        %v1509 = vpop.f32.mrf.mxu0
        %v1510 = vadd.f32 0.0, %v1509
        %1511 = vdwg.mxu0
        %1512 = vmatpush.msra.mxu0 %v693
        %1513 = vmatpush.msra.mxu0 %v691
        %1514 = vmatpush.msra.mxu0 %v689
        %1515 = vmatpush.msra.mxu0 %v687
        %1516 = vmatpush.msra.mxu0 %v685
        %1517 = vmatpush.msra.mxu0 %v683
        %1518 = vmatpush.msra.mxu0 %v681
        %1519 = vmatpush.msra.mxu0 %v679
        %1520 = vmatpush.msra.mxu0 %v677
        %1521 = vmatpush.msra.mxu0 %v675
        %1522 = vmatpush.msra.mxu0 %v673
        %1523 = vmatpush.msra.mxu0 %v671
        %1524 = vmatpush.msra.mxu0 %v669
        %1525 = vmatpush.msra.mxu0 %v667
        %1526 = vmatpush.msra.mxu0 %v665
        %1527 = vmatpush.msra.mxu0 %v663
        %1528 = vmatmul.f32.gmra.mxu0 %v967
        %v1529 = vpop.f32.mrf.mxu0
        %v1530 = vadd.f32 %v1417, %v1529
        %1531 = vmatmul.f32.gmra.mxu0 %v968
        %v1532 = vpop.f32.mrf.mxu0
        %v1533 = vadd.f32 %v1420, %v1532
        %1534 = vmatmul.f32.gmra.mxu0 %v969
        %v1535 = vpop.f32.mrf.mxu0
        %v1536 = vadd.f32 %v1423, %v1535
        %1537 = vmatmul.f32.gmra.mxu0 %v970
        %v1538 = vpop.f32.mrf.mxu0
        %v1539 = vadd.f32 %v1426, %v1538
        %1540 = vmatmul.f32.gmra.mxu0 %v971
        %v1541 = vpop.f32.mrf.mxu0
        %v1542 = vadd.f32 %v1429, %v1541
        %1543 = vmatmul.f32.gmra.mxu0 %v972
        %v1544 = vpop.f32.mrf.mxu0
        %v1545 = vadd.f32 %v1432, %v1544
        %1546 = vmatmul.f32.gmra.mxu0 %v973
        %v1547 = vpop.f32.mrf.mxu0
        %v1548 = vadd.f32 %v1435, %v1547
        %1549 = vmatmul.f32.gmra.mxu0 %v974
        %v1550 = vpop.f32.mrf.mxu0
        %v1551 = vadd.f32 %v1438, %v1550
        %1552 = vmatmul.f32.gmra.mxu0 %v975
        %v1553 = vpop.f32.mrf.mxu0
        %v1554 = vadd.f32 %v1441, %v1553
        %1555 = vmatmul.f32.gmra.mxu0 %v976
        %v1556 = vpop.f32.mrf.mxu0
        %v1557 = vadd.f32 %v1444, %v1556
        %1558 = vmatmul.f32.gmra.mxu0 %v977
        %v1559 = vpop.f32.mrf.mxu0
        %v1560 = vadd.f32 %v1447, %v1559
        %1561 = vmatmul.f32.gmra.mxu0 %v978
        %v1562 = vpop.f32.mrf.mxu0
        %v1563 = vadd.f32 %v1450, %v1562
        %1564 = vmatmul.f32.gmra.mxu0 %v979
        %v1565 = vpop.f32.mrf.mxu0
        %v1566 = vadd.f32 %v1453, %v1565
        %1567 = vmatmul.f32.gmra.mxu0 %v980
        %v1568 = vpop.f32.mrf.mxu0
        %v1569 = vadd.f32 %v1456, %v1568
        %1570 = vmatmul.f32.gmra.mxu0 %v981
        %v1571 = vpop.f32.mrf.mxu0
        %v1572 = vadd.f32 %v1459, %v1571
        %1573 = vmatmul.f32.gmra.mxu0 %v982
        %v1574 = vpop.f32.mrf.mxu0
        %v1575 = vadd.f32 %v1462, %v1574
        %1576 = vmatmul.f32.gmra.mxu0 %v999
        %v1577 = vpop.f32.mrf.mxu0
        %v1578 = vadd.f32 %v1465, %v1577
        %1579 = vmatmul.f32.gmra.mxu0 %v1000
        %v1580 = vpop.f32.mrf.mxu0
        %v1581 = vadd.f32 %v1468, %v1580
        %1582 = vmatmul.f32.gmra.mxu0 %v1001
        %v1583 = vpop.f32.mrf.mxu0
        %v1584 = vadd.f32 %v1471, %v1583
        %1585 = vmatmul.f32.gmra.mxu0 %v1002
        %v1586 = vpop.f32.mrf.mxu0
        %v1587 = vadd.f32 %v1474, %v1586
        %1588 = vmatmul.f32.gmra.mxu0 %v1003
        %v1589 = vpop.f32.mrf.mxu0
        %v1590 = vadd.f32 %v1477, %v1589
        %1591 = vmatmul.f32.gmra.mxu0 %v1004
        %v1592 = vpop.f32.mrf.mxu0
        %v1593 = vadd.f32 %v1480, %v1592
        %1594 = vmatmul.f32.gmra.mxu0 %v1005
        %v1595 = vpop.f32.mrf.mxu0
        %v1596 = vadd.f32 %v1483, %v1595
        %1597 = vmatmul.f32.gmra.mxu0 %v1006
        %v1598 = vpop.f32.mrf.mxu0
        %v1599 = vadd.f32 %v1486, %v1598
        %1600 = vmatmul.f32.gmra.mxu0 %v1007
        %v1601 = vpop.f32.mrf.mxu0
        %v1602 = vadd.f32 %v1489, %v1601
        %1603 = vmatmul.f32.gmra.mxu0 %v1008
        %v1604 = vpop.f32.mrf.mxu0
        %v1605 = vadd.f32 %v1492, %v1604
        %1606 = vmatmul.f32.gmra.mxu0 %v1009
        %v1607 = vpop.f32.mrf.mxu0
        %v1608 = vadd.f32 %v1495, %v1607
        %1609 = vmatmul.f32.gmra.mxu0 %v1010
        %v1610 = vpop.f32.mrf.mxu0
        %v1611 = vadd.f32 %v1498, %v1610
        %1612 = vmatmul.f32.gmra.mxu0 %v1011
        %v1613 = vpop.f32.mrf.mxu0
        %v1614 = vadd.f32 %v1501, %v1613
        %1615 = vmatmul.f32.gmra.mxu0 %v1012
        %v1616 = vpop.f32.mrf.mxu0
        %v1617 = vadd.f32 %v1504, %v1616
        %1618 = vmatmul.f32.gmra.mxu0 %v1013
        %v1619 = vpop.f32.mrf.mxu0
        %v1620 = vadd.f32 %v1507, %v1619
        %1621 = vmatmul.f32.gmra.mxu0 %v1014
        %v1622 = vpop.f32.mrf.mxu0
        %v1623 = vadd.f32 %v1510, %v1622
        %1624 = vdwg.mxu0
        %1625 = vmatpush.msra.mxu0 %v725
        %1626 = vmatpush.msra.mxu0 %v723
        %1627 = vmatpush.msra.mxu0 %v721
        %1628 = vmatpush.msra.mxu0 %v719
        %1629 = vmatpush.msra.mxu0 %v717
        %1630 = vmatpush.msra.mxu0 %v715
        %1631 = vmatpush.msra.mxu0 %v713
        %1632 = vmatpush.msra.mxu0 %v711
        %1633 = vmatpush.msra.mxu0 %v709
        %1634 = vmatpush.msra.mxu0 %v707
        %1635 = vmatpush.msra.mxu0 %v705
        %1636 = vmatpush.msra.mxu0 %v703
        %1637 = vmatpush.msra.mxu0 %v701
        %1638 = vmatpush.msra.mxu0 %v699
        %1639 = vmatpush.msra.mxu0 %v697
        %1640 = vmatpush.msra.mxu0 %v695
        %1641 = vmatmul.f32.gmra.mxu0 %v1031
        %v1642 = vpop.f32.mrf.mxu0
        %v1643 = vadd.f32 %v1530, %v1642
        %1644 = vmatmul.f32.gmra.mxu0 %v1032
        %v1645 = vpop.f32.mrf.mxu0
        %v1646 = vadd.f32 %v1533, %v1645
        %1647 = vmatmul.f32.gmra.mxu0 %v1033
        %v1648 = vpop.f32.mrf.mxu0
        %v1649 = vadd.f32 %v1536, %v1648
        %1650 = vmatmul.f32.gmra.mxu0 %v1034
        %v1651 = vpop.f32.mrf.mxu0
        %v1652 = vadd.f32 %v1539, %v1651
        %1653 = vmatmul.f32.gmra.mxu0 %v1035
        %v1654 = vpop.f32.mrf.mxu0
        %v1655 = vadd.f32 %v1542, %v1654
        %1656 = vmatmul.f32.gmra.mxu0 %v1036
        %v1657 = vpop.f32.mrf.mxu0
        %v1658 = vadd.f32 %v1545, %v1657
        %1659 = vmatmul.f32.gmra.mxu0 %v1037
        %v1660 = vpop.f32.mrf.mxu0
        %v1661 = vadd.f32 %v1548, %v1660
        %1662 = vmatmul.f32.gmra.mxu0 %v1038
        %v1663 = vpop.f32.mrf.mxu0
        %v1664 = vadd.f32 %v1551, %v1663
        %1665 = vmatmul.f32.gmra.mxu0 %v1039
        %v1666 = vpop.f32.mrf.mxu0
        %v1667 = vadd.f32 %v1554, %v1666
        %1668 = vmatmul.f32.gmra.mxu0 %v1040
        %v1669 = vpop.f32.mrf.mxu0
        %v1670 = vadd.f32 %v1557, %v1669
        %1671 = vmatmul.f32.gmra.mxu0 %v1041
        %v1672 = vpop.f32.mrf.mxu0
        %v1673 = vadd.f32 %v1560, %v1672
        %1674 = vmatmul.f32.gmra.mxu0 %v1042
        %v1675 = vpop.f32.mrf.mxu0
        %v1676 = vadd.f32 %v1563, %v1675
        %1677 = vmatmul.f32.gmra.mxu0 %v1043
        %v1678 = vpop.f32.mrf.mxu0
        %v1679 = vadd.f32 %v1566, %v1678
        %1680 = vmatmul.f32.gmra.mxu0 %v1044
        %v1681 = vpop.f32.mrf.mxu0
        %v1682 = vadd.f32 %v1569, %v1681
        %1683 = vmatmul.f32.gmra.mxu0 %v1045
        %v1684 = vpop.f32.mrf.mxu0
        %v1685 = vadd.f32 %v1572, %v1684
        %1686 = vmatmul.f32.gmra.mxu0 %v1046
        %v1687 = vpop.f32.mrf.mxu0
        %v1688 = vadd.f32 %v1575, %v1687
        %1689 = vmatmul.f32.gmra.mxu0 %v1063
        %v1690 = vpop.f32.mrf.mxu0
        %v1691 = vadd.f32 %v1578, %v1690
        %1692 = vmatmul.f32.gmra.mxu0 %v1064
        %v1693 = vpop.f32.mrf.mxu0
        %v1694 = vadd.f32 %v1581, %v1693
        %1695 = vmatmul.f32.gmra.mxu0 %v1065
        %v1696 = vpop.f32.mrf.mxu0
        %v1697 = vadd.f32 %v1584, %v1696
        %1698 = vmatmul.f32.gmra.mxu0 %v1066
        %v1699 = vpop.f32.mrf.mxu0
        %v1700 = vadd.f32 %v1587, %v1699
        %1701 = vmatmul.f32.gmra.mxu0 %v1067
        %v1702 = vpop.f32.mrf.mxu0
        %v1703 = vadd.f32 %v1590, %v1702
        %1704 = vmatmul.f32.gmra.mxu0 %v1068
        %v1705 = vpop.f32.mrf.mxu0
        %v1706 = vadd.f32 %v1593, %v1705
        %1707 = vmatmul.f32.gmra.mxu0 %v1069
        %v1708 = vpop.f32.mrf.mxu0
        %v1709 = vadd.f32 %v1596, %v1708
        %1710 = vmatmul.f32.gmra.mxu0 %v1070
        %v1711 = vpop.f32.mrf.mxu0
        %v1712 = vadd.f32 %v1599, %v1711
        %1713 = vmatmul.f32.gmra.mxu0 %v1071
        %v1714 = vpop.f32.mrf.mxu0
        %v1715 = vadd.f32 %v1602, %v1714
        %1716 = vmatmul.f32.gmra.mxu0 %v1072
        %v1717 = vpop.f32.mrf.mxu0
        %v1718 = vadd.f32 %v1605, %v1717
        %1719 = vmatmul.f32.gmra.mxu0 %v1073
        %v1720 = vpop.f32.mrf.mxu0
        %v1721 = vadd.f32 %v1608, %v1720
        %1722 = vmatmul.f32.gmra.mxu0 %v1074
        %v1723 = vpop.f32.mrf.mxu0
        %v1724 = vadd.f32 %v1611, %v1723
        %1725 = vmatmul.f32.gmra.mxu0 %v1075
        %v1726 = vpop.f32.mrf.mxu0
        %v1727 = vadd.f32 %v1614, %v1726
        %1728 = vmatmul.f32.gmra.mxu0 %v1076
        %v1729 = vpop.f32.mrf.mxu0
        %v1730 = vadd.f32 %v1617, %v1729
        %1731 = vmatmul.f32.gmra.mxu0 %v1077
        %v1732 = vpop.f32.mrf.mxu0
        %v1733 = vadd.f32 %v1620, %v1732
        %1734 = vmatmul.f32.gmra.mxu0 %v1078
        %v1735 = vpop.f32.mrf.mxu0
        %v1736 = vadd.f32 %v1623, %v1735
        %1737 = vdwg.mxu0
        %1738 = vmatpush.msra.mxu0 %v757
        %1739 = vmatpush.msra.mxu0 %v755
        %1740 = vmatpush.msra.mxu0 %v753
        %1741 = vmatpush.msra.mxu0 %v751
        %1742 = vmatpush.msra.mxu0 %v749
        %1743 = vmatpush.msra.mxu0 %v747
        %1744 = vmatpush.msra.mxu0 %v745
        %1745 = vmatpush.msra.mxu0 %v743
        %1746 = vmatpush.msra.mxu0 %v741
        %1747 = vmatpush.msra.mxu0 %v739
        %1748 = vmatpush.msra.mxu0 %v737
        %1749 = vmatpush.msra.mxu0 %v735
        %1750 = vmatpush.msra.mxu0 %v733
        %1751 = vmatpush.msra.mxu0 %v731
        %1752 = vmatpush.msra.mxu0 %v729
        %1753 = vmatpush.msra.mxu0 %v727
        %1754 = vmatmul.f32.gmra.mxu0 %v1095
        %v1755 = vpop.f32.mrf.mxu0
        %v1756 = vadd.f32 %v1643, %v1755
        %1757 = vmatmul.f32.gmra.mxu0 %v1096
        %v1758 = vpop.f32.mrf.mxu0
        %v1759 = vadd.f32 %v1646, %v1758
        %1760 = vmatmul.f32.gmra.mxu0 %v1097
        %v1761 = vpop.f32.mrf.mxu0
        %v1762 = vadd.f32 %v1649, %v1761
        %1763 = vmatmul.f32.gmra.mxu0 %v1098
        %v1764 = vpop.f32.mrf.mxu0
        %v1765 = vadd.f32 %v1652, %v1764
        %1766 = vmatmul.f32.gmra.mxu0 %v1099
        %v1767 = vpop.f32.mrf.mxu0
        %v1768 = vadd.f32 %v1655, %v1767
        %1769 = vmatmul.f32.gmra.mxu0 %v1100
        %v1770 = vpop.f32.mrf.mxu0
        %v1771 = vadd.f32 %v1658, %v1770
        %1772 = vmatmul.f32.gmra.mxu0 %v1101
        %v1773 = vpop.f32.mrf.mxu0
        %v1774 = vadd.f32 %v1661, %v1773
        %1775 = vmatmul.f32.gmra.mxu0 %v1102
        %v1776 = vpop.f32.mrf.mxu0
        %v1777 = vadd.f32 %v1664, %v1776
        %1778 = vmatmul.f32.gmra.mxu0 %v1103
        %v1779 = vpop.f32.mrf.mxu0
        %v1780 = vadd.f32 %v1667, %v1779
        %1781 = vmatmul.f32.gmra.mxu0 %v1104
        %v1782 = vpop.f32.mrf.mxu0
        %v1783 = vadd.f32 %v1670, %v1782
        %1784 = vmatmul.f32.gmra.mxu0 %v1105
        %v1785 = vpop.f32.mrf.mxu0
        %v1786 = vadd.f32 %v1673, %v1785
        %1787 = vmatmul.f32.gmra.mxu0 %v1106
        %v1788 = vpop.f32.mrf.mxu0
        %v1789 = vadd.f32 %v1676, %v1788
        %1790 = vmatmul.f32.gmra.mxu0 %v1107
        %v1791 = vpop.f32.mrf.mxu0
        %v1792 = vadd.f32 %v1679, %v1791
        %1793 = vmatmul.f32.gmra.mxu0 %v1108
        %v1794 = vpop.f32.mrf.mxu0
        %v1795 = vadd.f32 %v1682, %v1794
        %1796 = vmatmul.f32.gmra.mxu0 %v1109
        %v1797 = vpop.f32.mrf.mxu0
        %v1798 = vadd.f32 %v1685, %v1797
        %1799 = vmatmul.f32.gmra.mxu0 %v1110
        %v1800 = vpop.f32.mrf.mxu0
        %v1801 = vadd.f32 %v1688, %v1800
        %1802 = vmatmul.f32.gmra.mxu0 %v1127
        %v1803 = vpop.f32.mrf.mxu0
        %v1804 = vadd.f32 %v1691, %v1803
        %1805 = vmatmul.f32.gmra.mxu0 %v1128
        %v1806 = vpop.f32.mrf.mxu0
        %v1807 = vadd.f32 %v1694, %v1806
        %1808 = vmatmul.f32.gmra.mxu0 %v1129
        %v1809 = vpop.f32.mrf.mxu0
        %v1810 = vadd.f32 %v1697, %v1809
        %1811 = vmatmul.f32.gmra.mxu0 %v1130
        %v1812 = vpop.f32.mrf.mxu0
        %v1813 = vadd.f32 %v1700, %v1812
        %1814 = vmatmul.f32.gmra.mxu0 %v1131
        %v1815 = vpop.f32.mrf.mxu0
        %v1816 = vadd.f32 %v1703, %v1815
        %1817 = vmatmul.f32.gmra.mxu0 %v1132
        %v1818 = vpop.f32.mrf.mxu0
        %v1819 = vadd.f32 %v1706, %v1818
        %1820 = vmatmul.f32.gmra.mxu0 %v1133
        %v1821 = vpop.f32.mrf.mxu0
        %v1822 = vadd.f32 %v1709, %v1821
        %1823 = vmatmul.f32.gmra.mxu0 %v1134
        %v1824 = vpop.f32.mrf.mxu0
        %v1825 = vadd.f32 %v1712, %v1824
        %1826 = vmatmul.f32.gmra.mxu0 %v1135
        %v1827 = vpop.f32.mrf.mxu0
        %v1828 = vadd.f32 %v1715, %v1827
        %1829 = vmatmul.f32.gmra.mxu0 %v1136
        %v1830 = vpop.f32.mrf.mxu0
        %v1831 = vadd.f32 %v1718, %v1830
        %1832 = vmatmul.f32.gmra.mxu0 %v1137
        %v1833 = vpop.f32.mrf.mxu0
        %v1834 = vadd.f32 %v1721, %v1833
        %1835 = vmatmul.f32.gmra.mxu0 %v1138
        %v1836 = vpop.f32.mrf.mxu0
        %v1837 = vadd.f32 %v1724, %v1836
        %1838 = vmatmul.f32.gmra.mxu0 %v1139
        %v1839 = vpop.f32.mrf.mxu0
        %v1840 = vadd.f32 %v1727, %v1839
        %1841 = vmatmul.f32.gmra.mxu0 %v1140
        %v1842 = vpop.f32.mrf.mxu0
        %v1843 = vadd.f32 %v1730, %v1842
        %1844 = vmatmul.f32.gmra.mxu0 %v1141
        %v1845 = vpop.f32.mrf.mxu0
        %v1846 = vadd.f32 %v1733, %v1845
        %1847 = vmatmul.f32.gmra.mxu0 %v1142
        %v1848 = vpop.f32.mrf.mxu0
        %v1849 = vadd.f32 %v1736, %v1848
        %1850 = vdwg.mxu0
        %1851 = vmatpush.msra.mxu0 %v789
        %1852 = vmatpush.msra.mxu0 %v787
        %1853 = vmatpush.msra.mxu0 %v785
        %1854 = vmatpush.msra.mxu0 %v783
        %1855 = vmatpush.msra.mxu0 %v781
        %1856 = vmatpush.msra.mxu0 %v779
        %1857 = vmatpush.msra.mxu0 %v777
        %1858 = vmatpush.msra.mxu0 %v775
        %1859 = vmatpush.msra.mxu0 %v773
        %1860 = vmatpush.msra.mxu0 %v771
        %1861 = vmatpush.msra.mxu0 %v769
        %1862 = vmatpush.msra.mxu0 %v767
        %1863 = vmatpush.msra.mxu0 %v765
        %1864 = vmatpush.msra.mxu0 %v763
        %1865 = vmatpush.msra.mxu0 %v761
        %1866 = vmatpush.msra.mxu0 %v759
        %1867 = vmatmul.f32.gmra.mxu0 %v1159
        %v1868 = vpop.f32.mrf.mxu0
        %v1869 = vadd.f32 %v1756, %v1868
        %1870 = vmatmul.f32.gmra.mxu0 %v1160
        %v1871 = vpop.f32.mrf.mxu0
        %v1872 = vadd.f32 %v1759, %v1871
        %1873 = vmatmul.f32.gmra.mxu0 %v1161
        %v1874 = vpop.f32.mrf.mxu0
        %v1875 = vadd.f32 %v1762, %v1874
        %1876 = vmatmul.f32.gmra.mxu0 %v1162
        %v1877 = vpop.f32.mrf.mxu0
        %v1878 = vadd.f32 %v1765, %v1877
        %1879 = vmatmul.f32.gmra.mxu0 %v1163
        %v1880 = vpop.f32.mrf.mxu0
        %v1881 = vadd.f32 %v1768, %v1880
        %1882 = vmatmul.f32.gmra.mxu0 %v1164
        %v1883 = vpop.f32.mrf.mxu0
        %v1884 = vadd.f32 %v1771, %v1883
        %1885 = vmatmul.f32.gmra.mxu0 %v1165
        %v1886 = vpop.f32.mrf.mxu0
        %v1887 = vadd.f32 %v1774, %v1886
        %1888 = vmatmul.f32.gmra.mxu0 %v1166
        %v1889 = vpop.f32.mrf.mxu0
        %v1890 = vadd.f32 %v1777, %v1889
        %1891 = vmatmul.f32.gmra.mxu0 %v1167
        %v1892 = vpop.f32.mrf.mxu0
        %v1893 = vadd.f32 %v1780, %v1892
        %1894 = vmatmul.f32.gmra.mxu0 %v1168
        %v1895 = vpop.f32.mrf.mxu0
        %v1896 = vadd.f32 %v1783, %v1895
        %1897 = vmatmul.f32.gmra.mxu0 %v1169
        %v1898 = vpop.f32.mrf.mxu0
        %v1899 = vadd.f32 %v1786, %v1898
        %1900 = vmatmul.f32.gmra.mxu0 %v1170
        %v1901 = vpop.f32.mrf.mxu0
        %v1902 = vadd.f32 %v1789, %v1901
        %1903 = vmatmul.f32.gmra.mxu0 %v1171
        %v1904 = vpop.f32.mrf.mxu0
        %v1905 = vadd.f32 %v1792, %v1904
        %1906 = vmatmul.f32.gmra.mxu0 %v1172
        %v1907 = vpop.f32.mrf.mxu0
        %v1908 = vadd.f32 %v1795, %v1907
        %1909 = vmatmul.f32.gmra.mxu0 %v1173
        %v1910 = vpop.f32.mrf.mxu0
        %v1911 = vadd.f32 %v1798, %v1910
        %1912 = vmatmul.f32.gmra.mxu0 %v1174
        %v1913 = vpop.f32.mrf.mxu0
        %v1914 = vadd.f32 %v1801, %v1913
        %1915 = vmatmul.f32.gmra.mxu0 %v1191
        %v1916 = vpop.f32.mrf.mxu0
        %v1917 = vadd.f32 %v1804, %v1916
        %1918 = vmatmul.f32.gmra.mxu0 %v1192
        %v1919 = vpop.f32.mrf.mxu0
        %v1920 = vadd.f32 %v1807, %v1919
        %1921 = vmatmul.f32.gmra.mxu0 %v1193
        %v1922 = vpop.f32.mrf.mxu0
        %v1923 = vadd.f32 %v1810, %v1922
        %1924 = vmatmul.f32.gmra.mxu0 %v1194
        %v1925 = vpop.f32.mrf.mxu0
        %v1926 = vadd.f32 %v1813, %v1925
        %1927 = vmatmul.f32.gmra.mxu0 %v1195
        %v1928 = vpop.f32.mrf.mxu0
        %v1929 = vadd.f32 %v1816, %v1928
        %1930 = vmatmul.f32.gmra.mxu0 %v1196
        %v1931 = vpop.f32.mrf.mxu0
        %v1932 = vadd.f32 %v1819, %v1931
        %1933 = vmatmul.f32.gmra.mxu0 %v1197
        %v1934 = vpop.f32.mrf.mxu0
        %v1935 = vadd.f32 %v1822, %v1934
        %1936 = vmatmul.f32.gmra.mxu0 %v1198
        %v1937 = vpop.f32.mrf.mxu0
        %v1938 = vadd.f32 %v1825, %v1937
        %1939 = vmatmul.f32.gmra.mxu0 %v1199
        %v1940 = vpop.f32.mrf.mxu0
        %v1941 = vadd.f32 %v1828, %v1940
        %1942 = vmatmul.f32.gmra.mxu0 %v1200
        %v1943 = vpop.f32.mrf.mxu0
        %v1944 = vadd.f32 %v1831, %v1943
        %1945 = vmatmul.f32.gmra.mxu0 %v1201
        %v1946 = vpop.f32.mrf.mxu0
        %v1947 = vadd.f32 %v1834, %v1946
        %1948 = vmatmul.f32.gmra.mxu0 %v1202
        %v1949 = vpop.f32.mrf.mxu0
        %v1950 = vadd.f32 %v1837, %v1949
        %1951 = vmatmul.f32.gmra.mxu0 %v1203
        %v1952 = vpop.f32.mrf.mxu0
        %v1953 = vadd.f32 %v1840, %v1952
        %1954 = vmatmul.f32.gmra.mxu0 %v1204
        %v1955 = vpop.f32.mrf.mxu0
        %v1956 = vadd.f32 %v1843, %v1955
        %1957 = vmatmul.f32.gmra.mxu0 %v1205
        %v1958 = vpop.f32.mrf.mxu0
        %v1959 = vadd.f32 %v1846, %v1958
        %1960 = vmatmul.f32.gmra.mxu0 %v1206
        %v1961 = vpop.f32.mrf.mxu0
        %v1962 = vadd.f32 %v1849, %v1961
        %1963 = vdwg.mxu0
        %1964 = vmatpush.msra.mxu0 %v821
        %1965 = vmatpush.msra.mxu0 %v819
        %1966 = vmatpush.msra.mxu0 %v817
        %1967 = vmatpush.msra.mxu0 %v815
        %1968 = vmatpush.msra.mxu0 %v813
        %1969 = vmatpush.msra.mxu0 %v811
        %1970 = vmatpush.msra.mxu0 %v809
        %1971 = vmatpush.msra.mxu0 %v807
        %1972 = vmatpush.msra.mxu0 %v805
        %1973 = vmatpush.msra.mxu0 %v803
        %1974 = vmatpush.msra.mxu0 %v801
        %1975 = vmatpush.msra.mxu0 %v799
        %1976 = vmatpush.msra.mxu0 %v797
        %1977 = vmatpush.msra.mxu0 %v795
        %1978 = vmatpush.msra.mxu0 %v793
        %1979 = vmatpush.msra.mxu0 %v791
        %1980 = vmatmul.f32.gmra.mxu0 %v1223
        %v1981 = vpop.f32.mrf.mxu0
        %v1982 = vadd.f32 %v1869, %v1981
        %1983 = vmatmul.f32.gmra.mxu0 %v1224
        %v1984 = vpop.f32.mrf.mxu0
        %v1985 = vadd.f32 %v1872, %v1984
        %1986 = vmatmul.f32.gmra.mxu0 %v1225
        %v1987 = vpop.f32.mrf.mxu0
        %v1988 = vadd.f32 %v1875, %v1987
        %1989 = vmatmul.f32.gmra.mxu0 %v1226
        %v1990 = vpop.f32.mrf.mxu0
        %v1991 = vadd.f32 %v1878, %v1990
        %1992 = vmatmul.f32.gmra.mxu0 %v1227
        %v1993 = vpop.f32.mrf.mxu0
        %v1994 = vadd.f32 %v1881, %v1993
        %1995 = vmatmul.f32.gmra.mxu0 %v1228
        %v1996 = vpop.f32.mrf.mxu0
        %v1997 = vadd.f32 %v1884, %v1996
        %1998 = vmatmul.f32.gmra.mxu0 %v1229
        %v1999 = vpop.f32.mrf.mxu0
        %v2000 = vadd.f32 %v1887, %v1999
        %2001 = vmatmul.f32.gmra.mxu0 %v1230
        %v2002 = vpop.f32.mrf.mxu0
        %v2003 = vadd.f32 %v1890, %v2002
        %2004 = vmatmul.f32.gmra.mxu0 %v1231
        %v2005 = vpop.f32.mrf.mxu0
        %v2006 = vadd.f32 %v1893, %v2005
        %2007 = vmatmul.f32.gmra.mxu0 %v1232
        %v2008 = vpop.f32.mrf.mxu0
        %v2009 = vadd.f32 %v1896, %v2008
        %2010 = vmatmul.f32.gmra.mxu0 %v1233
        %v2011 = vpop.f32.mrf.mxu0
        %v2012 = vadd.f32 %v1899, %v2011
        %2013 = vmatmul.f32.gmra.mxu0 %v1234
        %v2014 = vpop.f32.mrf.mxu0
        %v2015 = vadd.f32 %v1902, %v2014
        %2016 = vmatmul.f32.gmra.mxu0 %v1235
        %v2017 = vpop.f32.mrf.mxu0
        %v2018 = vadd.f32 %v1905, %v2017
        %2019 = vmatmul.f32.gmra.mxu0 %v1236
        %v2020 = vpop.f32.mrf.mxu0
        %v2021 = vadd.f32 %v1908, %v2020
        %2022 = vmatmul.f32.gmra.mxu0 %v1237
        %v2023 = vpop.f32.mrf.mxu0
        %v2024 = vadd.f32 %v1911, %v2023
        %2025 = vmatmul.f32.gmra.mxu0 %v1238
        %v2026 = vpop.f32.mrf.mxu0
        %v2027 = vadd.f32 %v1914, %v2026
        %2028 = vmatmul.f32.gmra.mxu0 %v1255
        %v2029 = vpop.f32.mrf.mxu0
        %v2030 = vadd.f32 %v1917, %v2029
        %2031 = vmatmul.f32.gmra.mxu0 %v1256
        %v2032 = vpop.f32.mrf.mxu0
        %v2033 = vadd.f32 %v1920, %v2032
        %2034 = vmatmul.f32.gmra.mxu0 %v1257
        %v2035 = vpop.f32.mrf.mxu0
        %v2036 = vadd.f32 %v1923, %v2035
        %2037 = vmatmul.f32.gmra.mxu0 %v1258
        %v2038 = vpop.f32.mrf.mxu0
        %v2039 = vadd.f32 %v1926, %v2038
        %2040 = vmatmul.f32.gmra.mxu0 %v1259
        %v2041 = vpop.f32.mrf.mxu0
        %v2042 = vadd.f32 %v1929, %v2041
        %2043 = vmatmul.f32.gmra.mxu0 %v1260
        %v2044 = vpop.f32.mrf.mxu0
        %v2045 = vadd.f32 %v1932, %v2044
        %2046 = vmatmul.f32.gmra.mxu0 %v1261
        %v2047 = vpop.f32.mrf.mxu0
        %v2048 = vadd.f32 %v1935, %v2047
        %2049 = vmatmul.f32.gmra.mxu0 %v1262
        %v2050 = vpop.f32.mrf.mxu0
        %v2051 = vadd.f32 %v1938, %v2050
        %2052 = vmatmul.f32.gmra.mxu0 %v1263
        %v2053 = vpop.f32.mrf.mxu0
        %v2054 = vadd.f32 %v1941, %v2053
        %2055 = vmatmul.f32.gmra.mxu0 %v1264
        %v2056 = vpop.f32.mrf.mxu0
        %v2057 = vadd.f32 %v1944, %v2056
        %2058 = vmatmul.f32.gmra.mxu0 %v1265
        %v2059 = vpop.f32.mrf.mxu0
        %v2060 = vadd.f32 %v1947, %v2059
        %2061 = vmatmul.f32.gmra.mxu0 %v1266
        %v2062 = vpop.f32.mrf.mxu0
        %v2063 = vadd.f32 %v1950, %v2062
        %2064 = vmatmul.f32.gmra.mxu0 %v1267
        %v2065 = vpop.f32.mrf.mxu0
        %v2066 = vadd.f32 %v1953, %v2065
        %2067 = vmatmul.f32.gmra.mxu0 %v1268
        %v2068 = vpop.f32.mrf.mxu0
        %v2069 = vadd.f32 %v1956, %v2068
        %2070 = vmatmul.f32.gmra.mxu0 %v1269
        %v2071 = vpop.f32.mrf.mxu0
        %v2072 = vadd.f32 %v1959, %v2071
        %2073 = vmatmul.f32.gmra.mxu0 %v1270
        %v2074 = vpop.f32.mrf.mxu0
        %v2075 = vadd.f32 %v1962, %v2074
        %2076 = vdwg.mxu0
        %2077 = vmatpush.msra.mxu0 %v853
        %2078 = vmatpush.msra.mxu0 %v851
        %2079 = vmatpush.msra.mxu0 %v849
        %2080 = vmatpush.msra.mxu0 %v847
        %2081 = vmatpush.msra.mxu0 %v845
        %2082 = vmatpush.msra.mxu0 %v843
        %2083 = vmatpush.msra.mxu0 %v841
        %2084 = vmatpush.msra.mxu0 %v839
        %2085 = vmatpush.msra.mxu0 %v837
        %2086 = vmatpush.msra.mxu0 %v835
        %2087 = vmatpush.msra.mxu0 %v833
        %2088 = vmatpush.msra.mxu0 %v831
        %2089 = vmatpush.msra.mxu0 %v829
        %2090 = vmatpush.msra.mxu0 %v827
        %2091 = vmatpush.msra.mxu0 %v825
        %2092 = vmatpush.msra.mxu0 %v823
        %2093 = vmatmul.f32.gmra.mxu0 %v1287
        %v2094 = vpop.f32.mrf.mxu0
        %v2095 = vadd.f32 %v1982, %v2094
        %2096 = vmatmul.f32.gmra.mxu0 %v1288
        %v2097 = vpop.f32.mrf.mxu0
        %v2098 = vadd.f32 %v1985, %v2097
        %2099 = vmatmul.f32.gmra.mxu0 %v1289
        %v2100 = vpop.f32.mrf.mxu0
        %v2101 = vadd.f32 %v1988, %v2100
        %2102 = vmatmul.f32.gmra.mxu0 %v1290
        %v2103 = vpop.f32.mrf.mxu0
        %v2104 = vadd.f32 %v1991, %v2103
        %2105 = vmatmul.f32.gmra.mxu0 %v1291
        %v2106 = vpop.f32.mrf.mxu0
        %v2107 = vadd.f32 %v1994, %v2106
        %2108 = vmatmul.f32.gmra.mxu0 %v1292
        %v2109 = vpop.f32.mrf.mxu0
        %v2110 = vadd.f32 %v1997, %v2109
        %2111 = vmatmul.f32.gmra.mxu0 %v1293
        %v2112 = vpop.f32.mrf.mxu0
        %v2113 = vadd.f32 %v2000, %v2112
        %2114 = vmatmul.f32.gmra.mxu0 %v1294
        %v2115 = vpop.f32.mrf.mxu0
        %v2116 = vadd.f32 %v2003, %v2115
        %2117 = vmatmul.f32.gmra.mxu0 %v1295
        %v2118 = vpop.f32.mrf.mxu0
        %v2119 = vadd.f32 %v2006, %v2118
        %2120 = vmatmul.f32.gmra.mxu0 %v1296
        %v2121 = vpop.f32.mrf.mxu0
        %v2122 = vadd.f32 %v2009, %v2121
        %2123 = vmatmul.f32.gmra.mxu0 %v1297
        %v2124 = vpop.f32.mrf.mxu0
        %v2125 = vadd.f32 %v2012, %v2124
        %2126 = vmatmul.f32.gmra.mxu0 %v1298
        %v2127 = vpop.f32.mrf.mxu0
        %v2128 = vadd.f32 %v2015, %v2127
        %2129 = vmatmul.f32.gmra.mxu0 %v1299
        %v2130 = vpop.f32.mrf.mxu0
        %v2131 = vadd.f32 %v2018, %v2130
        %2132 = vmatmul.f32.gmra.mxu0 %v1300
        %v2133 = vpop.f32.mrf.mxu0
        %v2134 = vadd.f32 %v2021, %v2133
        %2135 = vmatmul.f32.gmra.mxu0 %v1301
        %v2136 = vpop.f32.mrf.mxu0
        %v2137 = vadd.f32 %v2024, %v2136
        %2138 = vmatmul.f32.gmra.mxu0 %v1302
        %v2139 = vpop.f32.mrf.mxu0
        %v2140 = vadd.f32 %v2027, %v2139
        %2141 = vmatmul.f32.gmra.mxu0 %v1319
        %v2142 = vpop.f32.mrf.mxu0
        %v2143 = vadd.f32 %v2030, %v2142
        %2144 = vmatmul.f32.gmra.mxu0 %v1320
        %v2145 = vpop.f32.mrf.mxu0
        %v2146 = vadd.f32 %v2033, %v2145
        %2147 = vmatmul.f32.gmra.mxu0 %v1321
        %v2148 = vpop.f32.mrf.mxu0
        %v2149 = vadd.f32 %v2036, %v2148
        %2150 = vmatmul.f32.gmra.mxu0 %v1322
        %v2151 = vpop.f32.mrf.mxu0
        %v2152 = vadd.f32 %v2039, %v2151
        %2153 = vmatmul.f32.gmra.mxu0 %v1323
        %v2154 = vpop.f32.mrf.mxu0
        %v2155 = vadd.f32 %v2042, %v2154
        %2156 = vmatmul.f32.gmra.mxu0 %v1324
        %v2157 = vpop.f32.mrf.mxu0
        %v2158 = vadd.f32 %v2045, %v2157
        %2159 = vmatmul.f32.gmra.mxu0 %v1325
        %v2160 = vpop.f32.mrf.mxu0
        %v2161 = vadd.f32 %v2048, %v2160
        %2162 = vmatmul.f32.gmra.mxu0 %v1326
        %v2163 = vpop.f32.mrf.mxu0
        %v2164 = vadd.f32 %v2051, %v2163
        %2165 = vmatmul.f32.gmra.mxu0 %v1327
        %v2166 = vpop.f32.mrf.mxu0
        %v2167 = vadd.f32 %v2054, %v2166
        %2168 = vmatmul.f32.gmra.mxu0 %v1328
        %v2169 = vpop.f32.mrf.mxu0
        %v2170 = vadd.f32 %v2057, %v2169
        %2171 = vmatmul.f32.gmra.mxu0 %v1329
        %v2172 = vpop.f32.mrf.mxu0
        %v2173 = vadd.f32 %v2060, %v2172
        %2174 = vmatmul.f32.gmra.mxu0 %v1330
        %v2175 = vpop.f32.mrf.mxu0
        %v2176 = vadd.f32 %v2063, %v2175
        %2177 = vmatmul.f32.gmra.mxu0 %v1331
        %v2178 = vpop.f32.mrf.mxu0
        %v2179 = vadd.f32 %v2066, %v2178
        %2180 = vmatmul.f32.gmra.mxu0 %v1332
        %v2181 = vpop.f32.mrf.mxu0
        %v2182 = vadd.f32 %v2069, %v2181
        %2183 = vmatmul.f32.gmra.mxu0 %v1333
        %v2184 = vpop.f32.mrf.mxu0
        %v2185 = vadd.f32 %v2072, %v2184
        %2186 = vmatmul.f32.gmra.mxu0 %v1334
        %v2187 = vpop.f32.mrf.mxu0
        %v2188 = vadd.f32 %v2075, %v2187
        %2189 = vdwg.mxu0
        %2190 = vmatpush.msra.mxu0 %v885
        %2191 = vmatpush.msra.mxu0 %v883
        %2192 = vmatpush.msra.mxu0 %v881
        %2193 = vmatpush.msra.mxu0 %v879
        %2194 = vmatpush.msra.mxu0 %v877
        %2195 = vmatpush.msra.mxu0 %v875
        %2196 = vmatpush.msra.mxu0 %v873
        %2197 = vmatpush.msra.mxu0 %v871
        %2198 = vmatpush.msra.mxu0 %v869
        %2199 = vmatpush.msra.mxu0 %v867
        %2200 = vmatpush.msra.mxu0 %v865
        %2201 = vmatpush.msra.mxu0 %v863
        %2202 = vmatpush.msra.mxu0 %v861
        %2203 = vmatpush.msra.mxu0 %v859
        %2204 = vmatpush.msra.mxu0 %v857
        %2205 = vmatpush.msra.mxu0 %v855
        %2206 = vmatmul.f32.gmra.mxu0 %v1351
        %v2207 = vpop.f32.mrf.mxu0
        %v2208 = vadd.f32 %v2095, %v2207
        %2209 = vmatmul.f32.gmra.mxu0 %v1352
        %v2210 = vpop.f32.mrf.mxu0
        %v2211 = vadd.f32 %v2098, %v2210
        %2212 = vmatmul.f32.gmra.mxu0 %v1353
        %v2213 = vpop.f32.mrf.mxu0
        %v2214 = vadd.f32 %v2101, %v2213
        %2215 = vmatmul.f32.gmra.mxu0 %v1354
        %v2216 = vpop.f32.mrf.mxu0
        %v2217 = vadd.f32 %v2104, %v2216
        %2218 = vmatmul.f32.gmra.mxu0 %v1355
        %v2219 = vpop.f32.mrf.mxu0
        %v2220 = vadd.f32 %v2107, %v2219
        %2221 = vmatmul.f32.gmra.mxu0 %v1356
        %v2222 = vpop.f32.mrf.mxu0
        %v2223 = vadd.f32 %v2110, %v2222
        %2224 = vmatmul.f32.gmra.mxu0 %v1357
        %v2225 = vpop.f32.mrf.mxu0
        %v2226 = vadd.f32 %v2113, %v2225
        %2227 = vmatmul.f32.gmra.mxu0 %v1358
        %v2228 = vpop.f32.mrf.mxu0
        %v2229 = vadd.f32 %v2116, %v2228
        %2230 = vmatmul.f32.gmra.mxu0 %v1359
        %v2231 = vpop.f32.mrf.mxu0
        %v2232 = vadd.f32 %v2119, %v2231
        %2233 = vmatmul.f32.gmra.mxu0 %v1360
        %v2234 = vpop.f32.mrf.mxu0
        %v2235 = vadd.f32 %v2122, %v2234
        %2236 = vmatmul.f32.gmra.mxu0 %v1361
        %v2237 = vpop.f32.mrf.mxu0
        %v2238 = vadd.f32 %v2125, %v2237
        %2239 = vmatmul.f32.gmra.mxu0 %v1362
        %v2240 = vpop.f32.mrf.mxu0
        %v2241 = vadd.f32 %v2128, %v2240
        %2242 = vmatmul.f32.gmra.mxu0 %v1363
        %v2243 = vpop.f32.mrf.mxu0
        %v2244 = vadd.f32 %v2131, %v2243
        %2245 = vmatmul.f32.gmra.mxu0 %v1364
        %v2246 = vpop.f32.mrf.mxu0
        %v2247 = vadd.f32 %v2134, %v2246
        %2248 = vmatmul.f32.gmra.mxu0 %v1365
        %v2249 = vpop.f32.mrf.mxu0
        %v2250 = vadd.f32 %v2137, %v2249
        %2251 = vmatmul.f32.gmra.mxu0 %v1366
        %v2252 = vpop.f32.mrf.mxu0
        %v2253 = vadd.f32 %v2140, %v2252
        %2254 = vmatmul.f32.gmra.mxu0 %v1383
        %v2255 = vpop.f32.mrf.mxu0
        %v2256 = vadd.f32 %v2143, %v2255
        %2257 = vmatmul.f32.gmra.mxu0 %v1384
        %v2258 = vpop.f32.mrf.mxu0
        %v2259 = vadd.f32 %v2146, %v2258
        %2260 = vmatmul.f32.gmra.mxu0 %v1385
        %v2261 = vpop.f32.mrf.mxu0
        %v2262 = vadd.f32 %v2149, %v2261
        %2263 = vmatmul.f32.gmra.mxu0 %v1386
        %v2264 = vpop.f32.mrf.mxu0
        %v2265 = vadd.f32 %v2152, %v2264
        %2266 = vmatmul.f32.gmra.mxu0 %v1387
        %v2267 = vpop.f32.mrf.mxu0
        %v2268 = vadd.f32 %v2155, %v2267
        %2269 = vmatmul.f32.gmra.mxu0 %v1388
        %v2270 = vpop.f32.mrf.mxu0
        %v2271 = vadd.f32 %v2158, %v2270
        %2272 = vmatmul.f32.gmra.mxu0 %v1389
        %v2273 = vpop.f32.mrf.mxu0
        %v2274 = vadd.f32 %v2161, %v2273
        %2275 = vmatmul.f32.gmra.mxu0 %v1390
        %v2276 = vpop.f32.mrf.mxu0
        %v2277 = vadd.f32 %v2164, %v2276
        %2278 = vmatmul.f32.gmra.mxu0 %v1391
        %v2279 = vpop.f32.mrf.mxu0
        %v2280 = vadd.f32 %v2167, %v2279
        %2281 = vmatmul.f32.gmra.mxu0 %v1392
        %v2282 = vpop.f32.mrf.mxu0
        %v2283 = vadd.f32 %v2170, %v2282
        %2284 = vmatmul.f32.gmra.mxu0 %v1393
        %v2285 = vpop.f32.mrf.mxu0
        %v2286 = vadd.f32 %v2173, %v2285
        %2287 = vmatmul.f32.gmra.mxu0 %v1394
        %v2288 = vpop.f32.mrf.mxu0
        %v2289 = vadd.f32 %v2176, %v2288
        %2290 = vmatmul.f32.gmra.mxu0 %v1395
        %v2291 = vpop.f32.mrf.mxu0
        %v2292 = vadd.f32 %v2179, %v2291
        %2293 = vmatmul.f32.gmra.mxu0 %v1396
        %v2294 = vpop.f32.mrf.mxu0
        %v2295 = vadd.f32 %v2182, %v2294
        %2296 = vmatmul.f32.gmra.mxu0 %v1397
        %v2297 = vpop.f32.mrf.mxu0
        %v2298 = vadd.f32 %v2185, %v2297
        %2299 = vmatmul.f32.gmra.mxu0 %v1398
        %v2300 = vpop.f32.mrf.mxu0
        %v2301 = vadd.f32 %v2188, %v2300
        %2302 = vdwg.mxu0
        %2303 = vmatpush.msra.mxu0 %v662
        %2304 = vmatpush.msra.mxu0 %v660
        %2305 = vmatpush.msra.mxu0 %v658
        %2306 = vmatpush.msra.mxu0 %v656
        %2307 = vmatpush.msra.mxu0 %v654
        %2308 = vmatpush.msra.mxu0 %v652
        %2309 = vmatpush.msra.mxu0 %v650
        %2310 = vmatpush.msra.mxu0 %v648
        %2311 = vmatpush.msra.mxu0 %v646
        %2312 = vmatpush.msra.mxu0 %v644
        %2313 = vmatpush.msra.mxu0 %v642
        %2314 = vmatpush.msra.mxu0 %v640
        %2315 = vmatpush.msra.mxu0 %v638
        %2316 = vmatpush.msra.mxu0 %v636
        %2317 = vmatpush.msra.mxu0 %v634
        %2318 = vmatpush.msra.mxu0 %v632
        %2319 = vmatmul.f32.gmra.mxu0 %v903
        %v2320 = vpop.f32.mrf.mxu0
        %v2321 = vadd.f32 0.0, %v2320
        %2322 = vmatmul.f32.gmra.mxu0 %v904
        %v2323 = vpop.f32.mrf.mxu0
        %v2324 = vadd.f32 0.0, %v2323
        %2325 = vmatmul.f32.gmra.mxu0 %v905
        %v2326 = vpop.f32.mrf.mxu0
        %v2327 = vadd.f32 0.0, %v2326
        %2328 = vmatmul.f32.gmra.mxu0 %v906
        %v2329 = vpop.f32.mrf.mxu0
        %v2330 = vadd.f32 0.0, %v2329
        %2331 = vmatmul.f32.gmra.mxu0 %v907
        %v2332 = vpop.f32.mrf.mxu0
        %v2333 = vadd.f32 0.0, %v2332
        %2334 = vmatmul.f32.gmra.mxu0 %v908
        %v2335 = vpop.f32.mrf.mxu0
        %v2336 = vadd.f32 0.0, %v2335
        %2337 = vmatmul.f32.gmra.mxu0 %v909
        %v2338 = vpop.f32.mrf.mxu0
        %v2339 = vadd.f32 0.0, %v2338
        %2340 = vmatmul.f32.gmra.mxu0 %v910
        %v2341 = vpop.f32.mrf.mxu0
        %v2342 = vadd.f32 0.0, %v2341
        %2343 = vmatmul.f32.gmra.mxu0 %v911
        %v2344 = vpop.f32.mrf.mxu0
        %v2345 = vadd.f32 0.0, %v2344
        %2346 = vmatmul.f32.gmra.mxu0 %v912
        %v2347 = vpop.f32.mrf.mxu0
        %v2348 = vadd.f32 0.0, %v2347
        %2349 = vmatmul.f32.gmra.mxu0 %v913
        %v2350 = vpop.f32.mrf.mxu0
        %v2351 = vadd.f32 0.0, %v2350
        %2352 = vmatmul.f32.gmra.mxu0 %v914
        %v2353 = vpop.f32.mrf.mxu0
        %v2354 = vadd.f32 0.0, %v2353
        %2355 = vmatmul.f32.gmra.mxu0 %v915
        %v2356 = vpop.f32.mrf.mxu0
        %v2357 = vadd.f32 0.0, %v2356
        %2358 = vmatmul.f32.gmra.mxu0 %v916
        %v2359 = vpop.f32.mrf.mxu0
        %v2360 = vadd.f32 0.0, %v2359
        %2361 = vmatmul.f32.gmra.mxu0 %v917
        %v2362 = vpop.f32.mrf.mxu0
        %v2363 = vadd.f32 0.0, %v2362
        %2364 = vmatmul.f32.gmra.mxu0 %v918
        %v2365 = vpop.f32.mrf.mxu0
        %v2366 = vadd.f32 0.0, %v2365
        %2367 = vmatmul.f32.gmra.mxu0 %v935
        %v2368 = vpop.f32.mrf.mxu0
        %v2369 = vadd.f32 0.0, %v2368
        %2370 = vmatmul.f32.gmra.mxu0 %v936
        %v2371 = vpop.f32.mrf.mxu0
        %v2372 = vadd.f32 0.0, %v2371
        %2373 = vmatmul.f32.gmra.mxu0 %v937
        %v2374 = vpop.f32.mrf.mxu0
        %v2375 = vadd.f32 0.0, %v2374
        %2376 = vmatmul.f32.gmra.mxu0 %v938
        %v2377 = vpop.f32.mrf.mxu0
        %v2378 = vadd.f32 0.0, %v2377
        %2379 = vmatmul.f32.gmra.mxu0 %v939
        %v2380 = vpop.f32.mrf.mxu0
        %v2381 = vadd.f32 0.0, %v2380
        %2382 = vmatmul.f32.gmra.mxu0 %v940
        %v2383 = vpop.f32.mrf.mxu0
        %v2384 = vadd.f32 0.0, %v2383
        %2385 = vmatmul.f32.gmra.mxu0 %v941
        %v2386 = vpop.f32.mrf.mxu0
        %v2387 = vadd.f32 0.0, %v2386
        %2388 = vmatmul.f32.gmra.mxu0 %v942
        %v2389 = vpop.f32.mrf.mxu0
        %v2390 = vadd.f32 0.0, %v2389
        %2391 = vmatmul.f32.gmra.mxu0 %v943
        %v2392 = vpop.f32.mrf.mxu0
        %v2393 = vadd.f32 0.0, %v2392
        %2394 = vmatmul.f32.gmra.mxu0 %v944
        %v2395 = vpop.f32.mrf.mxu0
        %v2396 = vadd.f32 0.0, %v2395
        %2397 = vmatmul.f32.gmra.mxu0 %v945
        %v2398 = vpop.f32.mrf.mxu0
        %v2399 = vadd.f32 0.0, %v2398
        %2400 = vmatmul.f32.gmra.mxu0 %v946
        %v2401 = vpop.f32.mrf.mxu0
        %v2402 = vadd.f32 0.0, %v2401
        %2403 = vmatmul.f32.gmra.mxu0 %v947
        %v2404 = vpop.f32.mrf.mxu0
        %v2405 = vadd.f32 0.0, %v2404
        %2406 = vmatmul.f32.gmra.mxu0 %v948
        %v2407 = vpop.f32.mrf.mxu0
        %v2408 = vadd.f32 0.0, %v2407
        %2409 = vmatmul.f32.gmra.mxu0 %v949
        %v2410 = vpop.f32.mrf.mxu0
        %v2411 = vadd.f32 0.0, %v2410
        %2412 = vmatmul.f32.gmra.mxu0 %v950
        %v2413 = vpop.f32.mrf.mxu0
        %v2414 = vadd.f32 0.0, %v2413
        %2415 = vdwg.mxu0
        %2416 = vmatpush.msra.mxu0 %v694
        %2417 = vmatpush.msra.mxu0 %v692
        %2418 = vmatpush.msra.mxu0 %v690
        %2419 = vmatpush.msra.mxu0 %v688
        %2420 = vmatpush.msra.mxu0 %v686
        %2421 = vmatpush.msra.mxu0 %v684
        %2422 = vmatpush.msra.mxu0 %v682
        %2423 = vmatpush.msra.mxu0 %v680
        %2424 = vmatpush.msra.mxu0 %v678
        %2425 = vmatpush.msra.mxu0 %v676
        %2426 = vmatpush.msra.mxu0 %v674
        %2427 = vmatpush.msra.mxu0 %v672
        %2428 = vmatpush.msra.mxu0 %v670
        %2429 = vmatpush.msra.mxu0 %v668
        %2430 = vmatpush.msra.mxu0 %v666
        %2431 = vmatpush.msra.mxu0 %v664
        %2432 = vmatmul.f32.gmra.mxu0 %v967
        %v2433 = vpop.f32.mrf.mxu0
        %v2434 = vadd.f32 %v2321, %v2433
        %2435 = vmatmul.f32.gmra.mxu0 %v968
        %v2436 = vpop.f32.mrf.mxu0
        %v2437 = vadd.f32 %v2324, %v2436
        %2438 = vmatmul.f32.gmra.mxu0 %v969
        %v2439 = vpop.f32.mrf.mxu0
        %v2440 = vadd.f32 %v2327, %v2439
        %2441 = vmatmul.f32.gmra.mxu0 %v970
        %v2442 = vpop.f32.mrf.mxu0
        %v2443 = vadd.f32 %v2330, %v2442
        %2444 = vmatmul.f32.gmra.mxu0 %v971
        %v2445 = vpop.f32.mrf.mxu0
        %v2446 = vadd.f32 %v2333, %v2445
        %2447 = vmatmul.f32.gmra.mxu0 %v972
        %v2448 = vpop.f32.mrf.mxu0
        %v2449 = vadd.f32 %v2336, %v2448
        %2450 = vmatmul.f32.gmra.mxu0 %v973
        %v2451 = vpop.f32.mrf.mxu0
        %v2452 = vadd.f32 %v2339, %v2451
        %2453 = vmatmul.f32.gmra.mxu0 %v974
        %v2454 = vpop.f32.mrf.mxu0
        %v2455 = vadd.f32 %v2342, %v2454
        %2456 = vmatmul.f32.gmra.mxu0 %v975
        %v2457 = vpop.f32.mrf.mxu0
        %v2458 = vadd.f32 %v2345, %v2457
        %2459 = vmatmul.f32.gmra.mxu0 %v976
        %v2460 = vpop.f32.mrf.mxu0
        %v2461 = vadd.f32 %v2348, %v2460
        %2462 = vmatmul.f32.gmra.mxu0 %v977
        %v2463 = vpop.f32.mrf.mxu0
        %v2464 = vadd.f32 %v2351, %v2463
        %2465 = vmatmul.f32.gmra.mxu0 %v978
        %v2466 = vpop.f32.mrf.mxu0
        %v2467 = vadd.f32 %v2354, %v2466
        %2468 = vmatmul.f32.gmra.mxu0 %v979
        %v2469 = vpop.f32.mrf.mxu0
        %v2470 = vadd.f32 %v2357, %v2469
        %2471 = vmatmul.f32.gmra.mxu0 %v980
        %v2472 = vpop.f32.mrf.mxu0
        %v2473 = vadd.f32 %v2360, %v2472
        %2474 = vmatmul.f32.gmra.mxu0 %v981
        %v2475 = vpop.f32.mrf.mxu0
        %v2476 = vadd.f32 %v2363, %v2475
        %2477 = vmatmul.f32.gmra.mxu0 %v982
        %v2478 = vpop.f32.mrf.mxu0
        %v2479 = vadd.f32 %v2366, %v2478
        %2480 = vmatmul.f32.gmra.mxu0 %v999
        %v2481 = vpop.f32.mrf.mxu0
        %v2482 = vadd.f32 %v2369, %v2481
        %2483 = vmatmul.f32.gmra.mxu0 %v1000
        %v2484 = vpop.f32.mrf.mxu0
        %v2485 = vadd.f32 %v2372, %v2484
        %2486 = vmatmul.f32.gmra.mxu0 %v1001
        %v2487 = vpop.f32.mrf.mxu0
        %v2488 = vadd.f32 %v2375, %v2487
        %2489 = vmatmul.f32.gmra.mxu0 %v1002
        %v2490 = vpop.f32.mrf.mxu0
        %v2491 = vadd.f32 %v2378, %v2490
        %2492 = vmatmul.f32.gmra.mxu0 %v1003
        %v2493 = vpop.f32.mrf.mxu0
        %v2494 = vadd.f32 %v2381, %v2493
        %2495 = vmatmul.f32.gmra.mxu0 %v1004
        %v2496 = vpop.f32.mrf.mxu0
        %v2497 = vadd.f32 %v2384, %v2496
        %2498 = vmatmul.f32.gmra.mxu0 %v1005
        %v2499 = vpop.f32.mrf.mxu0
        %v2500 = vadd.f32 %v2387, %v2499
        %2501 = vmatmul.f32.gmra.mxu0 %v1006
        %v2502 = vpop.f32.mrf.mxu0
        %v2503 = vadd.f32 %v2390, %v2502
        %2504 = vmatmul.f32.gmra.mxu0 %v1007
        %v2505 = vpop.f32.mrf.mxu0
        %v2506 = vadd.f32 %v2393, %v2505
        %2507 = vmatmul.f32.gmra.mxu0 %v1008
        %v2508 = vpop.f32.mrf.mxu0
        %v2509 = vadd.f32 %v2396, %v2508
        %2510 = vmatmul.f32.gmra.mxu0 %v1009
        %v2511 = vpop.f32.mrf.mxu0
        %v2512 = vadd.f32 %v2399, %v2511
        %2513 = vmatmul.f32.gmra.mxu0 %v1010
        %v2514 = vpop.f32.mrf.mxu0
        %v2515 = vadd.f32 %v2402, %v2514
        %2516 = vmatmul.f32.gmra.mxu0 %v1011
        %v2517 = vpop.f32.mrf.mxu0
        %v2518 = vadd.f32 %v2405, %v2517
        %2519 = vmatmul.f32.gmra.mxu0 %v1012
        %v2520 = vpop.f32.mrf.mxu0
        %v2521 = vadd.f32 %v2408, %v2520
        %2522 = vmatmul.f32.gmra.mxu0 %v1013
        %v2523 = vpop.f32.mrf.mxu0
        %v2524 = vadd.f32 %v2411, %v2523
        %2525 = vmatmul.f32.gmra.mxu0 %v1014
        %v2526 = vpop.f32.mrf.mxu0
        %v2527 = vadd.f32 %v2414, %v2526
        %2528 = vdwg.mxu0
        %2529 = vmatpush.msra.mxu0 %v726
        %2530 = vmatpush.msra.mxu0 %v724
        %2531 = vmatpush.msra.mxu0 %v722
        %2532 = vmatpush.msra.mxu0 %v720
        %2533 = vmatpush.msra.mxu0 %v718
        %2534 = vmatpush.msra.mxu0 %v716
        %2535 = vmatpush.msra.mxu0 %v714
        %2536 = vmatpush.msra.mxu0 %v712
        %2537 = vmatpush.msra.mxu0 %v710
        %2538 = vmatpush.msra.mxu0 %v708
        %2539 = vmatpush.msra.mxu0 %v706
        %2540 = vmatpush.msra.mxu0 %v704
        %2541 = vmatpush.msra.mxu0 %v702
        %2542 = vmatpush.msra.mxu0 %v700
        %2543 = vmatpush.msra.mxu0 %v698
        %2544 = vmatpush.msra.mxu0 %v696
        %2545 = vmatmul.f32.gmra.mxu0 %v1031
        %v2546 = vpop.f32.mrf.mxu0
        %v2547 = vadd.f32 %v2434, %v2546
        %2548 = vmatmul.f32.gmra.mxu0 %v1032
        %v2549 = vpop.f32.mrf.mxu0
        %v2550 = vadd.f32 %v2437, %v2549
        %2551 = vmatmul.f32.gmra.mxu0 %v1033
        %v2552 = vpop.f32.mrf.mxu0
        %v2553 = vadd.f32 %v2440, %v2552
        %2554 = vmatmul.f32.gmra.mxu0 %v1034
        %v2555 = vpop.f32.mrf.mxu0
        %v2556 = vadd.f32 %v2443, %v2555
        %2557 = vmatmul.f32.gmra.mxu0 %v1035
        %v2558 = vpop.f32.mrf.mxu0
        %v2559 = vadd.f32 %v2446, %v2558
        %2560 = vmatmul.f32.gmra.mxu0 %v1036
        %v2561 = vpop.f32.mrf.mxu0
        %v2562 = vadd.f32 %v2449, %v2561
        %2563 = vmatmul.f32.gmra.mxu0 %v1037
        %v2564 = vpop.f32.mrf.mxu0
        %v2565 = vadd.f32 %v2452, %v2564
        %2566 = vmatmul.f32.gmra.mxu0 %v1038
        %v2567 = vpop.f32.mrf.mxu0
        %v2568 = vadd.f32 %v2455, %v2567
        %2569 = vmatmul.f32.gmra.mxu0 %v1039
        %v2570 = vpop.f32.mrf.mxu0
        %v2571 = vadd.f32 %v2458, %v2570
        %2572 = vmatmul.f32.gmra.mxu0 %v1040
        %v2573 = vpop.f32.mrf.mxu0
        %v2574 = vadd.f32 %v2461, %v2573
        %2575 = vmatmul.f32.gmra.mxu0 %v1041
        %v2576 = vpop.f32.mrf.mxu0
        %v2577 = vadd.f32 %v2464, %v2576
        %2578 = vmatmul.f32.gmra.mxu0 %v1042
        %v2579 = vpop.f32.mrf.mxu0
        %v2580 = vadd.f32 %v2467, %v2579
        %2581 = vmatmul.f32.gmra.mxu0 %v1043
        %v2582 = vpop.f32.mrf.mxu0
        %v2583 = vadd.f32 %v2470, %v2582
        %2584 = vmatmul.f32.gmra.mxu0 %v1044
        %v2585 = vpop.f32.mrf.mxu0
        %v2586 = vadd.f32 %v2473, %v2585
        %2587 = vmatmul.f32.gmra.mxu0 %v1045
        %v2588 = vpop.f32.mrf.mxu0
        %v2589 = vadd.f32 %v2476, %v2588
        %2590 = vmatmul.f32.gmra.mxu0 %v1046
        %v2591 = vpop.f32.mrf.mxu0
        %v2592 = vadd.f32 %v2479, %v2591
        %2593 = vmatmul.f32.gmra.mxu0 %v1063
        %v2594 = vpop.f32.mrf.mxu0
        %v2595 = vadd.f32 %v2482, %v2594
        %2596 = vmatmul.f32.gmra.mxu0 %v1064
        %v2597 = vpop.f32.mrf.mxu0
        %v2598 = vadd.f32 %v2485, %v2597
        %2599 = vmatmul.f32.gmra.mxu0 %v1065
        %v2600 = vpop.f32.mrf.mxu0
        %v2601 = vadd.f32 %v2488, %v2600
        %2602 = vmatmul.f32.gmra.mxu0 %v1066
        %v2603 = vpop.f32.mrf.mxu0
        %v2604 = vadd.f32 %v2491, %v2603
        %2605 = vmatmul.f32.gmra.mxu0 %v1067
        %v2606 = vpop.f32.mrf.mxu0
        %v2607 = vadd.f32 %v2494, %v2606
        %2608 = vmatmul.f32.gmra.mxu0 %v1068
        %v2609 = vpop.f32.mrf.mxu0
        %v2610 = vadd.f32 %v2497, %v2609
        %2611 = vmatmul.f32.gmra.mxu0 %v1069
        %v2612 = vpop.f32.mrf.mxu0
        %v2613 = vadd.f32 %v2500, %v2612
        %2614 = vmatmul.f32.gmra.mxu0 %v1070
        %v2615 = vpop.f32.mrf.mxu0
        %v2616 = vadd.f32 %v2503, %v2615
        %2617 = vmatmul.f32.gmra.mxu0 %v1071
        %v2618 = vpop.f32.mrf.mxu0
        %v2619 = vadd.f32 %v2506, %v2618
        %2620 = vmatmul.f32.gmra.mxu0 %v1072
        %v2621 = vpop.f32.mrf.mxu0
        %v2622 = vadd.f32 %v2509, %v2621
        %2623 = vmatmul.f32.gmra.mxu0 %v1073
        %v2624 = vpop.f32.mrf.mxu0
        %v2625 = vadd.f32 %v2512, %v2624
        %2626 = vmatmul.f32.gmra.mxu0 %v1074
        %v2627 = vpop.f32.mrf.mxu0
        %v2628 = vadd.f32 %v2515, %v2627
        %2629 = vmatmul.f32.gmra.mxu0 %v1075
        %v2630 = vpop.f32.mrf.mxu0
        %v2631 = vadd.f32 %v2518, %v2630
        %2632 = vmatmul.f32.gmra.mxu0 %v1076
        %v2633 = vpop.f32.mrf.mxu0
        %v2634 = vadd.f32 %v2521, %v2633
        %2635 = vmatmul.f32.gmra.mxu0 %v1077
        %v2636 = vpop.f32.mrf.mxu0
        %v2637 = vadd.f32 %v2524, %v2636
        %2638 = vmatmul.f32.gmra.mxu0 %v1078
        %v2639 = vpop.f32.mrf.mxu0
        %v2640 = vadd.f32 %v2527, %v2639
        %2641 = vdwg.mxu0
        %2642 = vmatpush.msra.mxu0 %v758
        %2643 = vmatpush.msra.mxu0 %v756
        %2644 = vmatpush.msra.mxu0 %v754
        %2645 = vmatpush.msra.mxu0 %v752
        %2646 = vmatpush.msra.mxu0 %v750
        %2647 = vmatpush.msra.mxu0 %v748
        %2648 = vmatpush.msra.mxu0 %v746
        %2649 = vmatpush.msra.mxu0 %v744
        %2650 = vmatpush.msra.mxu0 %v742
        %2651 = vmatpush.msra.mxu0 %v740
        %2652 = vmatpush.msra.mxu0 %v738
        %2653 = vmatpush.msra.mxu0 %v736
        %2654 = vmatpush.msra.mxu0 %v734
        %2655 = vmatpush.msra.mxu0 %v732
        %2656 = vmatpush.msra.mxu0 %v730
        %2657 = vmatpush.msra.mxu0 %v728
        %2658 = vmatmul.f32.gmra.mxu0 %v1095
        %v2659 = vpop.f32.mrf.mxu0
        %v2660 = vadd.f32 %v2547, %v2659
        %2661 = vmatmul.f32.gmra.mxu0 %v1096
        %v2662 = vpop.f32.mrf.mxu0
        %v2663 = vadd.f32 %v2550, %v2662
        %2664 = vmatmul.f32.gmra.mxu0 %v1097
        %v2665 = vpop.f32.mrf.mxu0
        %v2666 = vadd.f32 %v2553, %v2665
        %2667 = vmatmul.f32.gmra.mxu0 %v1098
        %v2668 = vpop.f32.mrf.mxu0
        %v2669 = vadd.f32 %v2556, %v2668
        %2670 = vmatmul.f32.gmra.mxu0 %v1099
        %v2671 = vpop.f32.mrf.mxu0
        %v2672 = vadd.f32 %v2559, %v2671
        %2673 = vmatmul.f32.gmra.mxu0 %v1100
        %v2674 = vpop.f32.mrf.mxu0
        %v2675 = vadd.f32 %v2562, %v2674
        %2676 = vmatmul.f32.gmra.mxu0 %v1101
        %v2677 = vpop.f32.mrf.mxu0
        %v2678 = vadd.f32 %v2565, %v2677
        %2679 = vmatmul.f32.gmra.mxu0 %v1102
        %v2680 = vpop.f32.mrf.mxu0
        %v2681 = vadd.f32 %v2568, %v2680
        %2682 = vmatmul.f32.gmra.mxu0 %v1103
        %v2683 = vpop.f32.mrf.mxu0
        %v2684 = vadd.f32 %v2571, %v2683
        %2685 = vmatmul.f32.gmra.mxu0 %v1104
        %v2686 = vpop.f32.mrf.mxu0
        %v2687 = vadd.f32 %v2574, %v2686
        %2688 = vmatmul.f32.gmra.mxu0 %v1105
        %v2689 = vpop.f32.mrf.mxu0
        %v2690 = vadd.f32 %v2577, %v2689
        %2691 = vmatmul.f32.gmra.mxu0 %v1106
        %v2692 = vpop.f32.mrf.mxu0
        %v2693 = vadd.f32 %v2580, %v2692
        %2694 = vmatmul.f32.gmra.mxu0 %v1107
        %v2695 = vpop.f32.mrf.mxu0
        %v2696 = vadd.f32 %v2583, %v2695
        %2697 = vmatmul.f32.gmra.mxu0 %v1108
        %v2698 = vpop.f32.mrf.mxu0
        %v2699 = vadd.f32 %v2586, %v2698
        %2700 = vmatmul.f32.gmra.mxu0 %v1109
        %v2701 = vpop.f32.mrf.mxu0
        %v2702 = vadd.f32 %v2589, %v2701
        %2703 = vmatmul.f32.gmra.mxu0 %v1110
        %v2704 = vpop.f32.mrf.mxu0
        %v2705 = vadd.f32 %v2592, %v2704
        %2706 = vmatmul.f32.gmra.mxu0 %v1127
        %v2707 = vpop.f32.mrf.mxu0
        %v2708 = vadd.f32 %v2595, %v2707
        %2709 = vmatmul.f32.gmra.mxu0 %v1128
        %v2710 = vpop.f32.mrf.mxu0
        %v2711 = vadd.f32 %v2598, %v2710
        %2712 = vmatmul.f32.gmra.mxu0 %v1129
        %v2713 = vpop.f32.mrf.mxu0
        %v2714 = vadd.f32 %v2601, %v2713
        %2715 = vmatmul.f32.gmra.mxu0 %v1130
        %v2716 = vpop.f32.mrf.mxu0
        %v2717 = vadd.f32 %v2604, %v2716
        %2718 = vmatmul.f32.gmra.mxu0 %v1131
        %v2719 = vpop.f32.mrf.mxu0
        %v2720 = vadd.f32 %v2607, %v2719
        %2721 = vmatmul.f32.gmra.mxu0 %v1132
        %v2722 = vpop.f32.mrf.mxu0
        %v2723 = vadd.f32 %v2610, %v2722
        %2724 = vmatmul.f32.gmra.mxu0 %v1133
        %v2725 = vpop.f32.mrf.mxu0
        %v2726 = vadd.f32 %v2613, %v2725
        %2727 = vmatmul.f32.gmra.mxu0 %v1134
        %v2728 = vpop.f32.mrf.mxu0
        %v2729 = vadd.f32 %v2616, %v2728
        %2730 = vmatmul.f32.gmra.mxu0 %v1135
        %v2731 = vpop.f32.mrf.mxu0
        %v2732 = vadd.f32 %v2619, %v2731
        %2733 = vmatmul.f32.gmra.mxu0 %v1136
        %v2734 = vpop.f32.mrf.mxu0
        %v2735 = vadd.f32 %v2622, %v2734
        %2736 = vmatmul.f32.gmra.mxu0 %v1137
        %v2737 = vpop.f32.mrf.mxu0
        %v2738 = vadd.f32 %v2625, %v2737
        %2739 = vmatmul.f32.gmra.mxu0 %v1138
        %v2740 = vpop.f32.mrf.mxu0
        %v2741 = vadd.f32 %v2628, %v2740
        %2742 = vmatmul.f32.gmra.mxu0 %v1139
        %v2743 = vpop.f32.mrf.mxu0
        %v2744 = vadd.f32 %v2631, %v2743
        %2745 = vmatmul.f32.gmra.mxu0 %v1140
        %v2746 = vpop.f32.mrf.mxu0
        %v2747 = vadd.f32 %v2634, %v2746
        %2748 = vmatmul.f32.gmra.mxu0 %v1141
        %v2749 = vpop.f32.mrf.mxu0
        %v2750 = vadd.f32 %v2637, %v2749
        %2751 = vmatmul.f32.gmra.mxu0 %v1142
        %v2752 = vpop.f32.mrf.mxu0
        %v2753 = vadd.f32 %v2640, %v2752
        %2754 = vdwg.mxu0
        %2755 = vmatpush.msra.mxu0 %v790
        %2756 = vmatpush.msra.mxu0 %v788
        %2757 = vmatpush.msra.mxu0 %v786
        %2758 = vmatpush.msra.mxu0 %v784
        %2759 = vmatpush.msra.mxu0 %v782
        %2760 = vmatpush.msra.mxu0 %v780
        %2761 = vmatpush.msra.mxu0 %v778
        %2762 = vmatpush.msra.mxu0 %v776
        %2763 = vmatpush.msra.mxu0 %v774
        %2764 = vmatpush.msra.mxu0 %v772
        %2765 = vmatpush.msra.mxu0 %v770
        %2766 = vmatpush.msra.mxu0 %v768
        %2767 = vmatpush.msra.mxu0 %v766
        %2768 = vmatpush.msra.mxu0 %v764
        %2769 = vmatpush.msra.mxu0 %v762
        %2770 = vmatpush.msra.mxu0 %v760
        %2771 = vmatmul.f32.gmra.mxu0 %v1159
        %v2772 = vpop.f32.mrf.mxu0
        %v2773 = vadd.f32 %v2660, %v2772
        %2774 = vmatmul.f32.gmra.mxu0 %v1160
        %v2775 = vpop.f32.mrf.mxu0
        %v2776 = vadd.f32 %v2663, %v2775
        %2777 = vmatmul.f32.gmra.mxu0 %v1161
        %v2778 = vpop.f32.mrf.mxu0
        %v2779 = vadd.f32 %v2666, %v2778
        %2780 = vmatmul.f32.gmra.mxu0 %v1162
        %v2781 = vpop.f32.mrf.mxu0
        %v2782 = vadd.f32 %v2669, %v2781
        %2783 = vmatmul.f32.gmra.mxu0 %v1163
        %v2784 = vpop.f32.mrf.mxu0
        %v2785 = vadd.f32 %v2672, %v2784
        %2786 = vmatmul.f32.gmra.mxu0 %v1164
        %v2787 = vpop.f32.mrf.mxu0
        %v2788 = vadd.f32 %v2675, %v2787
        %2789 = vmatmul.f32.gmra.mxu0 %v1165
        %v2790 = vpop.f32.mrf.mxu0
        %v2791 = vadd.f32 %v2678, %v2790
        %2792 = vmatmul.f32.gmra.mxu0 %v1166
        %v2793 = vpop.f32.mrf.mxu0
        %v2794 = vadd.f32 %v2681, %v2793
        %2795 = vmatmul.f32.gmra.mxu0 %v1167
        %v2796 = vpop.f32.mrf.mxu0
        %v2797 = vadd.f32 %v2684, %v2796
        %2798 = vmatmul.f32.gmra.mxu0 %v1168
        %v2799 = vpop.f32.mrf.mxu0
        %v2800 = vadd.f32 %v2687, %v2799
        %2801 = vmatmul.f32.gmra.mxu0 %v1169
        %v2802 = vpop.f32.mrf.mxu0
        %v2803 = vadd.f32 %v2690, %v2802
        %2804 = vmatmul.f32.gmra.mxu0 %v1170
        %v2805 = vpop.f32.mrf.mxu0
        %v2806 = vadd.f32 %v2693, %v2805
        %2807 = vmatmul.f32.gmra.mxu0 %v1171
        %v2808 = vpop.f32.mrf.mxu0
        %v2809 = vadd.f32 %v2696, %v2808
        %2810 = vmatmul.f32.gmra.mxu0 %v1172
        %v2811 = vpop.f32.mrf.mxu0
        %v2812 = vadd.f32 %v2699, %v2811
        %2813 = vmatmul.f32.gmra.mxu0 %v1173
        %v2814 = vpop.f32.mrf.mxu0
        %v2815 = vadd.f32 %v2702, %v2814
        %2816 = vmatmul.f32.gmra.mxu0 %v1174
        %v2817 = vpop.f32.mrf.mxu0
        %v2818 = vadd.f32 %v2705, %v2817
        %2819 = vmatmul.f32.gmra.mxu0 %v1191
        %v2820 = vpop.f32.mrf.mxu0
        %v2821 = vadd.f32 %v2708, %v2820
        %2822 = vmatmul.f32.gmra.mxu0 %v1192
        %v2823 = vpop.f32.mrf.mxu0
        %v2824 = vadd.f32 %v2711, %v2823
        %2825 = vmatmul.f32.gmra.mxu0 %v1193
        %v2826 = vpop.f32.mrf.mxu0
        %v2827 = vadd.f32 %v2714, %v2826
        %2828 = vmatmul.f32.gmra.mxu0 %v1194
        %v2829 = vpop.f32.mrf.mxu0
        %v2830 = vadd.f32 %v2717, %v2829
        %2831 = vmatmul.f32.gmra.mxu0 %v1195
        %v2832 = vpop.f32.mrf.mxu0
        %v2833 = vadd.f32 %v2720, %v2832
        %2834 = vmatmul.f32.gmra.mxu0 %v1196
        %v2835 = vpop.f32.mrf.mxu0
        %v2836 = vadd.f32 %v2723, %v2835
        %2837 = vmatmul.f32.gmra.mxu0 %v1197
        %v2838 = vpop.f32.mrf.mxu0
        %v2839 = vadd.f32 %v2726, %v2838
        %2840 = vmatmul.f32.gmra.mxu0 %v1198
        %v2841 = vpop.f32.mrf.mxu0
        %v2842 = vadd.f32 %v2729, %v2841
        %2843 = vmatmul.f32.gmra.mxu0 %v1199
        %v2844 = vpop.f32.mrf.mxu0
        %v2845 = vadd.f32 %v2732, %v2844
        %2846 = vmatmul.f32.gmra.mxu0 %v1200
        %v2847 = vpop.f32.mrf.mxu0
        %v2848 = vadd.f32 %v2735, %v2847
        %2849 = vmatmul.f32.gmra.mxu0 %v1201
        %v2850 = vpop.f32.mrf.mxu0
        %v2851 = vadd.f32 %v2738, %v2850
        %2852 = vmatmul.f32.gmra.mxu0 %v1202
        %v2853 = vpop.f32.mrf.mxu0
        %v2854 = vadd.f32 %v2741, %v2853
        %2855 = vmatmul.f32.gmra.mxu0 %v1203
        %v2856 = vpop.f32.mrf.mxu0
        %v2857 = vadd.f32 %v2744, %v2856
        %2858 = vmatmul.f32.gmra.mxu0 %v1204
        %v2859 = vpop.f32.mrf.mxu0
        %v2860 = vadd.f32 %v2747, %v2859
        %2861 = vmatmul.f32.gmra.mxu0 %v1205
        %v2862 = vpop.f32.mrf.mxu0
        %v2863 = vadd.f32 %v2750, %v2862
        %2864 = vmatmul.f32.gmra.mxu0 %v1206
        %v2865 = vpop.f32.mrf.mxu0
        %v2866 = vadd.f32 %v2753, %v2865
        %2867 = vdwg.mxu0
        %2868 = vmatpush.msra.mxu0 %v822
        %2869 = vmatpush.msra.mxu0 %v820
        %2870 = vmatpush.msra.mxu0 %v818
        %2871 = vmatpush.msra.mxu0 %v816
        %2872 = vmatpush.msra.mxu0 %v814
        %2873 = vmatpush.msra.mxu0 %v812
        %2874 = vmatpush.msra.mxu0 %v810
        %2875 = vmatpush.msra.mxu0 %v808
        %2876 = vmatpush.msra.mxu0 %v806
        %2877 = vmatpush.msra.mxu0 %v804
        %2878 = vmatpush.msra.mxu0 %v802
        %2879 = vmatpush.msra.mxu0 %v800
        %2880 = vmatpush.msra.mxu0 %v798
        %2881 = vmatpush.msra.mxu0 %v796
        %2882 = vmatpush.msra.mxu0 %v794
        %2883 = vmatpush.msra.mxu0 %v792
        %2884 = vmatmul.f32.gmra.mxu0 %v1223
        %v2885 = vpop.f32.mrf.mxu0
        %v2886 = vadd.f32 %v2773, %v2885
        %2887 = vmatmul.f32.gmra.mxu0 %v1224
        %v2888 = vpop.f32.mrf.mxu0
        %v2889 = vadd.f32 %v2776, %v2888
        %2890 = vmatmul.f32.gmra.mxu0 %v1225
        %v2891 = vpop.f32.mrf.mxu0
        %v2892 = vadd.f32 %v2779, %v2891
        %2893 = vmatmul.f32.gmra.mxu0 %v1226
        %v2894 = vpop.f32.mrf.mxu0
        %v2895 = vadd.f32 %v2782, %v2894
        %2896 = vmatmul.f32.gmra.mxu0 %v1227
        %v2897 = vpop.f32.mrf.mxu0
        %v2898 = vadd.f32 %v2785, %v2897
        %2899 = vmatmul.f32.gmra.mxu0 %v1228
        %v2900 = vpop.f32.mrf.mxu0
        %v2901 = vadd.f32 %v2788, %v2900
        %2902 = vmatmul.f32.gmra.mxu0 %v1229
        %v2903 = vpop.f32.mrf.mxu0
        %v2904 = vadd.f32 %v2791, %v2903
        %2905 = vmatmul.f32.gmra.mxu0 %v1230
        %v2906 = vpop.f32.mrf.mxu0
        %v2907 = vadd.f32 %v2794, %v2906
        %2908 = vmatmul.f32.gmra.mxu0 %v1231
        %v2909 = vpop.f32.mrf.mxu0
        %v2910 = vadd.f32 %v2797, %v2909
        %2911 = vmatmul.f32.gmra.mxu0 %v1232
        %v2912 = vpop.f32.mrf.mxu0
        %v2913 = vadd.f32 %v2800, %v2912
        %2914 = vmatmul.f32.gmra.mxu0 %v1233
        %v2915 = vpop.f32.mrf.mxu0
        %v2916 = vadd.f32 %v2803, %v2915
        %2917 = vmatmul.f32.gmra.mxu0 %v1234
        %v2918 = vpop.f32.mrf.mxu0
        %v2919 = vadd.f32 %v2806, %v2918
        %2920 = vmatmul.f32.gmra.mxu0 %v1235
        %v2921 = vpop.f32.mrf.mxu0
        %v2922 = vadd.f32 %v2809, %v2921
        %2923 = vmatmul.f32.gmra.mxu0 %v1236
        %v2924 = vpop.f32.mrf.mxu0
        %v2925 = vadd.f32 %v2812, %v2924
        %2926 = vmatmul.f32.gmra.mxu0 %v1237
        %v2927 = vpop.f32.mrf.mxu0
        %v2928 = vadd.f32 %v2815, %v2927
        %2929 = vmatmul.f32.gmra.mxu0 %v1238
        %v2930 = vpop.f32.mrf.mxu0
        %v2931 = vadd.f32 %v2818, %v2930
        %2932 = vmatmul.f32.gmra.mxu0 %v1255
        %v2933 = vpop.f32.mrf.mxu0
        %v2934 = vadd.f32 %v2821, %v2933
        %2935 = vmatmul.f32.gmra.mxu0 %v1256
        %v2936 = vpop.f32.mrf.mxu0
        %v2937 = vadd.f32 %v2824, %v2936
        %2938 = vmatmul.f32.gmra.mxu0 %v1257
        %v2939 = vpop.f32.mrf.mxu0
        %v2940 = vadd.f32 %v2827, %v2939
        %2941 = vmatmul.f32.gmra.mxu0 %v1258
        %v2942 = vpop.f32.mrf.mxu0
        %v2943 = vadd.f32 %v2830, %v2942
        %2944 = vmatmul.f32.gmra.mxu0 %v1259
        %v2945 = vpop.f32.mrf.mxu0
        %v2946 = vadd.f32 %v2833, %v2945
        %2947 = vmatmul.f32.gmra.mxu0 %v1260
        %v2948 = vpop.f32.mrf.mxu0
        %v2949 = vadd.f32 %v2836, %v2948
        %2950 = vmatmul.f32.gmra.mxu0 %v1261
        %v2951 = vpop.f32.mrf.mxu0
        %v2952 = vadd.f32 %v2839, %v2951
        %2953 = vmatmul.f32.gmra.mxu0 %v1262
        %v2954 = vpop.f32.mrf.mxu0
        %v2955 = vadd.f32 %v2842, %v2954
        %2956 = vmatmul.f32.gmra.mxu0 %v1263
        %v2957 = vpop.f32.mrf.mxu0
        %v2958 = vadd.f32 %v2845, %v2957
        %2959 = vmatmul.f32.gmra.mxu0 %v1264
        %v2960 = vpop.f32.mrf.mxu0
        %v2961 = vadd.f32 %v2848, %v2960
        %2962 = vmatmul.f32.gmra.mxu0 %v1265
        %v2963 = vpop.f32.mrf.mxu0
        %v2964 = vadd.f32 %v2851, %v2963
        %2965 = vmatmul.f32.gmra.mxu0 %v1266
        %v2966 = vpop.f32.mrf.mxu0
        %v2967 = vadd.f32 %v2854, %v2966
        %2968 = vmatmul.f32.gmra.mxu0 %v1267
        %v2969 = vpop.f32.mrf.mxu0
        %v2970 = vadd.f32 %v2857, %v2969
        %2971 = vmatmul.f32.gmra.mxu0 %v1268
        %v2972 = vpop.f32.mrf.mxu0
        %v2973 = vadd.f32 %v2860, %v2972
        %2974 = vmatmul.f32.gmra.mxu0 %v1269
        %v2975 = vpop.f32.mrf.mxu0
        %v2976 = vadd.f32 %v2863, %v2975
        %2977 = vmatmul.f32.gmra.mxu0 %v1270
        %v2978 = vpop.f32.mrf.mxu0
        %v2979 = vadd.f32 %v2866, %v2978
        %2980 = vdwg.mxu0
        %2981 = vmatpush.msra.mxu0 %v854
        %2982 = vmatpush.msra.mxu0 %v852
        %2983 = vmatpush.msra.mxu0 %v850
        %2984 = vmatpush.msra.mxu0 %v848
        %2985 = vmatpush.msra.mxu0 %v846
        %2986 = vmatpush.msra.mxu0 %v844
        %2987 = vmatpush.msra.mxu0 %v842
        %2988 = vmatpush.msra.mxu0 %v840
        %2989 = vmatpush.msra.mxu0 %v838
        %2990 = vmatpush.msra.mxu0 %v836
        %2991 = vmatpush.msra.mxu0 %v834
        %2992 = vmatpush.msra.mxu0 %v832
        %2993 = vmatpush.msra.mxu0 %v830
        %2994 = vmatpush.msra.mxu0 %v828
        %2995 = vmatpush.msra.mxu0 %v826
        %2996 = vmatpush.msra.mxu0 %v824
        %2997 = vmatmul.f32.gmra.mxu0 %v1287
        %v2998 = vpop.f32.mrf.mxu0
        %v2999 = vadd.f32 %v2886, %v2998
        %3000 = vmatmul.f32.gmra.mxu0 %v1288
        %v3001 = vpop.f32.mrf.mxu0
        %v3002 = vadd.f32 %v2889, %v3001
        %3003 = vmatmul.f32.gmra.mxu0 %v1289
        %v3004 = vpop.f32.mrf.mxu0
        %v3005 = vadd.f32 %v2892, %v3004
        %3006 = vmatmul.f32.gmra.mxu0 %v1290
        %v3007 = vpop.f32.mrf.mxu0
        %v3008 = vadd.f32 %v2895, %v3007
        %3009 = vmatmul.f32.gmra.mxu0 %v1291
        %v3010 = vpop.f32.mrf.mxu0
        %v3011 = vadd.f32 %v2898, %v3010
        %3012 = vmatmul.f32.gmra.mxu0 %v1292
        %v3013 = vpop.f32.mrf.mxu0
        %v3014 = vadd.f32 %v2901, %v3013
        %3015 = vmatmul.f32.gmra.mxu0 %v1293
        %v3016 = vpop.f32.mrf.mxu0
        %v3017 = vadd.f32 %v2904, %v3016
        %3018 = vmatmul.f32.gmra.mxu0 %v1294
        %v3019 = vpop.f32.mrf.mxu0
        %v3020 = vadd.f32 %v2907, %v3019
        %3021 = vmatmul.f32.gmra.mxu0 %v1295
        %v3022 = vpop.f32.mrf.mxu0
        %v3023 = vadd.f32 %v2910, %v3022
        %3024 = vmatmul.f32.gmra.mxu0 %v1296
        %v3025 = vpop.f32.mrf.mxu0
        %v3026 = vadd.f32 %v2913, %v3025
        %3027 = vmatmul.f32.gmra.mxu0 %v1297
        %v3028 = vpop.f32.mrf.mxu0
        %v3029 = vadd.f32 %v2916, %v3028
        %3030 = vmatmul.f32.gmra.mxu0 %v1298
        %v3031 = vpop.f32.mrf.mxu0
        %v3032 = vadd.f32 %v2919, %v3031
        %3033 = vmatmul.f32.gmra.mxu0 %v1299
        %v3034 = vpop.f32.mrf.mxu0
        %v3035 = vadd.f32 %v2922, %v3034
        %3036 = vmatmul.f32.gmra.mxu0 %v1300
        %v3037 = vpop.f32.mrf.mxu0
        %v3038 = vadd.f32 %v2925, %v3037
        %3039 = vmatmul.f32.gmra.mxu0 %v1301
        %v3040 = vpop.f32.mrf.mxu0
        %v3041 = vadd.f32 %v2928, %v3040
        %3042 = vmatmul.f32.gmra.mxu0 %v1302
        %v3043 = vpop.f32.mrf.mxu0
        %v3044 = vadd.f32 %v2931, %v3043
        %3045 = vmatmul.f32.gmra.mxu0 %v1319
        %v3046 = vpop.f32.mrf.mxu0
        %v3047 = vadd.f32 %v2934, %v3046
        %3048 = vmatmul.f32.gmra.mxu0 %v1320
        %v3049 = vpop.f32.mrf.mxu0
        %v3050 = vadd.f32 %v2937, %v3049
        %3051 = vmatmul.f32.gmra.mxu0 %v1321
        %v3052 = vpop.f32.mrf.mxu0
        %v3053 = vadd.f32 %v2940, %v3052
        %3054 = vmatmul.f32.gmra.mxu0 %v1322
        %v3055 = vpop.f32.mrf.mxu0
        %v3056 = vadd.f32 %v2943, %v3055
        %3057 = vmatmul.f32.gmra.mxu0 %v1323
        %v3058 = vpop.f32.mrf.mxu0
        %v3059 = vadd.f32 %v2946, %v3058
        %3060 = vmatmul.f32.gmra.mxu0 %v1324
        %v3061 = vpop.f32.mrf.mxu0
        %v3062 = vadd.f32 %v2949, %v3061
        %3063 = vmatmul.f32.gmra.mxu0 %v1325
        %v3064 = vpop.f32.mrf.mxu0
        %v3065 = vadd.f32 %v2952, %v3064
        %3066 = vmatmul.f32.gmra.mxu0 %v1326
        %v3067 = vpop.f32.mrf.mxu0
        %v3068 = vadd.f32 %v2955, %v3067
        %3069 = vmatmul.f32.gmra.mxu0 %v1327
        %v3070 = vpop.f32.mrf.mxu0
        %v3071 = vadd.f32 %v2958, %v3070
        %3072 = vmatmul.f32.gmra.mxu0 %v1328
        %v3073 = vpop.f32.mrf.mxu0
        %v3074 = vadd.f32 %v2961, %v3073
        %3075 = vmatmul.f32.gmra.mxu0 %v1329
        %v3076 = vpop.f32.mrf.mxu0
        %v3077 = vadd.f32 %v2964, %v3076
        %3078 = vmatmul.f32.gmra.mxu0 %v1330
        %v3079 = vpop.f32.mrf.mxu0
        %v3080 = vadd.f32 %v2967, %v3079
        %3081 = vmatmul.f32.gmra.mxu0 %v1331
        %v3082 = vpop.f32.mrf.mxu0
        %v3083 = vadd.f32 %v2970, %v3082
        %3084 = vmatmul.f32.gmra.mxu0 %v1332
        %v3085 = vpop.f32.mrf.mxu0
        %v3086 = vadd.f32 %v2973, %v3085
        %3087 = vmatmul.f32.gmra.mxu0 %v1333
        %v3088 = vpop.f32.mrf.mxu0
        %v3089 = vadd.f32 %v2976, %v3088
        %3090 = vmatmul.f32.gmra.mxu0 %v1334
        %v3091 = vpop.f32.mrf.mxu0
        %v3092 = vadd.f32 %v2979, %v3091
        %3093 = vdwg.mxu0
        %3094 = vmatpush.msra.mxu0 %v886
        %3095 = vmatpush.msra.mxu0 %v884
        %3096 = vmatpush.msra.mxu0 %v882
        %3097 = vmatpush.msra.mxu0 %v880
        %3098 = vmatpush.msra.mxu0 %v878
        %3099 = vmatpush.msra.mxu0 %v876
        %3100 = vmatpush.msra.mxu0 %v874
        %3101 = vmatpush.msra.mxu0 %v872
        %3102 = vmatpush.msra.mxu0 %v870
        %3103 = vmatpush.msra.mxu0 %v868
        %3104 = vmatpush.msra.mxu0 %v866
        %3105 = vmatpush.msra.mxu0 %v864
        %3106 = vmatpush.msra.mxu0 %v862
        %3107 = vmatpush.msra.mxu0 %v860
        %3108 = vmatpush.msra.mxu0 %v858
        %3109 = vmatpush.msra.mxu0 %v856
        %3110 = vmatmul.f32.gmra.mxu0 %v1351
        %v3111 = vpop.f32.mrf.mxu0
        %v3112 = vadd.f32 %v2999, %v3111
        %3113 = vmatmul.f32.gmra.mxu0 %v1352
        %v3114 = vpop.f32.mrf.mxu0
        %v3115 = vadd.f32 %v3002, %v3114
        %3116 = vmatmul.f32.gmra.mxu0 %v1353
        %v3117 = vpop.f32.mrf.mxu0
        %v3118 = vadd.f32 %v3005, %v3117
        %3119 = vmatmul.f32.gmra.mxu0 %v1354
        %v3120 = vpop.f32.mrf.mxu0
        %v3121 = vadd.f32 %v3008, %v3120
        %3122 = vmatmul.f32.gmra.mxu0 %v1355
        %v3123 = vpop.f32.mrf.mxu0
        %v3124 = vadd.f32 %v3011, %v3123
        %3125 = vmatmul.f32.gmra.mxu0 %v1356
        %v3126 = vpop.f32.mrf.mxu0
        %v3127 = vadd.f32 %v3014, %v3126
        %3128 = vmatmul.f32.gmra.mxu0 %v1357
        %v3129 = vpop.f32.mrf.mxu0
        %v3130 = vadd.f32 %v3017, %v3129
        %3131 = vmatmul.f32.gmra.mxu0 %v1358
        %v3132 = vpop.f32.mrf.mxu0
        %v3133 = vadd.f32 %v3020, %v3132
        %3134 = vmatmul.f32.gmra.mxu0 %v1359
        %v3135 = vpop.f32.mrf.mxu0
        %v3136 = vadd.f32 %v3023, %v3135
        %3137 = vmatmul.f32.gmra.mxu0 %v1360
        %v3138 = vpop.f32.mrf.mxu0
        %v3139 = vadd.f32 %v3026, %v3138
        %3140 = vmatmul.f32.gmra.mxu0 %v1361
        %v3141 = vpop.f32.mrf.mxu0
        %v3142 = vadd.f32 %v3029, %v3141
        %3143 = vmatmul.f32.gmra.mxu0 %v1362
        %v3144 = vpop.f32.mrf.mxu0
        %v3145 = vadd.f32 %v3032, %v3144
        %3146 = vmatmul.f32.gmra.mxu0 %v1363
        %v3147 = vpop.f32.mrf.mxu0
        %v3148 = vadd.f32 %v3035, %v3147
        %3149 = vmatmul.f32.gmra.mxu0 %v1364
        %v3150 = vpop.f32.mrf.mxu0
        %v3151 = vadd.f32 %v3038, %v3150
        %3152 = vmatmul.f32.gmra.mxu0 %v1365
        %v3153 = vpop.f32.mrf.mxu0
        %v3154 = vadd.f32 %v3041, %v3153
        %3155 = vmatmul.f32.gmra.mxu0 %v1366
        %v3156 = vpop.f32.mrf.mxu0
        %v3157 = vadd.f32 %v3044, %v3156
        %3158 = vmatmul.f32.gmra.mxu0 %v1383
        %v3159 = vpop.f32.mrf.mxu0
        %v3160 = vadd.f32 %v3047, %v3159
        %3161 = vmatmul.f32.gmra.mxu0 %v1384
        %v3162 = vpop.f32.mrf.mxu0
        %v3163 = vadd.f32 %v3050, %v3162
        %3164 = vmatmul.f32.gmra.mxu0 %v1385
        %v3165 = vpop.f32.mrf.mxu0
        %v3166 = vadd.f32 %v3053, %v3165
        %3167 = vmatmul.f32.gmra.mxu0 %v1386
        %v3168 = vpop.f32.mrf.mxu0
        %v3169 = vadd.f32 %v3056, %v3168
        %3170 = vmatmul.f32.gmra.mxu0 %v1387
        %v3171 = vpop.f32.mrf.mxu0
        %v3172 = vadd.f32 %v3059, %v3171
        %3173 = vmatmul.f32.gmra.mxu0 %v1388
        %v3174 = vpop.f32.mrf.mxu0
        %v3175 = vadd.f32 %v3062, %v3174
        %3176 = vmatmul.f32.gmra.mxu0 %v1389
        %v3177 = vpop.f32.mrf.mxu0
        %v3178 = vadd.f32 %v3065, %v3177
        %3179 = vmatmul.f32.gmra.mxu0 %v1390
        %v3180 = vpop.f32.mrf.mxu0
        %v3181 = vadd.f32 %v3068, %v3180
        %3182 = vmatmul.f32.gmra.mxu0 %v1391
        %v3183 = vpop.f32.mrf.mxu0
        %v3184 = vadd.f32 %v3071, %v3183
        %3185 = vmatmul.f32.gmra.mxu0 %v1392
        %v3186 = vpop.f32.mrf.mxu0
        %v3187 = vadd.f32 %v3074, %v3186
        %3188 = vmatmul.f32.gmra.mxu0 %v1393
        %v3189 = vpop.f32.mrf.mxu0
        %v3190 = vadd.f32 %v3077, %v3189
        %3191 = vmatmul.f32.gmra.mxu0 %v1394
        %v3192 = vpop.f32.mrf.mxu0
        %v3193 = vadd.f32 %v3080, %v3192
        %3194 = vmatmul.f32.gmra.mxu0 %v1395
        %v3195 = vpop.f32.mrf.mxu0
        %v3196 = vadd.f32 %v3083, %v3195
        %3197 = vmatmul.f32.gmra.mxu0 %v1396
        %v3198 = vpop.f32.mrf.mxu0
        %v3199 = vadd.f32 %v3086, %v3198
        %3200 = vmatmul.f32.gmra.mxu0 %v1397
        %v3201 = vpop.f32.mrf.mxu0
        %v3202 = vadd.f32 %v3089, %v3201
        %3203 = vmatmul.f32.gmra.mxu0 %v1398
        %v3204 = vpop.f32.mrf.mxu0
        %v3205 = vadd.f32 %v3092, %v3204
        %3206 = vdwg.mxu0
        %v3207 = vadd.f32 %v311, %v2208
        %v3208 = vadd.f32 %v312, %v3112
        %v3209 = vadd.f32 %v313, %v2211
        %v3210 = vadd.f32 %v314, %v3115
        %v3211 = vadd.f32 %v315, %v2214
        %v3212 = vadd.f32 %v316, %v3118
        %v3213 = vadd.f32 %v317, %v2217
        %v3214 = vadd.f32 %v318, %v3121
        %v3215 = vadd.f32 %v319, %v2220
        %v3216 = vadd.f32 %v320, %v3124
        %v3217 = vadd.f32 %v321, %v2223
        %v3218 = vadd.f32 %v322, %v3127
        %v3219 = vadd.f32 %v323, %v2226
        %v3220 = vadd.f32 %v324, %v3130
        %v3221 = vadd.f32 %v325, %v2229
        %v3222 = vadd.f32 %v326, %v3133
        %v3223 = vadd.f32 %v327, %v2232
        %v3224 = vadd.f32 %v328, %v3136
        %v3225 = vadd.f32 %v329, %v2235
        %v3226 = vadd.f32 %v330, %v3139
        %v3227 = vadd.f32 %v331, %v2238
        %v3228 = vadd.f32 %v332, %v3142
        %v3229 = vadd.f32 %v333, %v2241
        %v3230 = vadd.f32 %v334, %v3145
        %v3231 = vadd.f32 %v335, %v2244
        %v3232 = vadd.f32 %v336, %v3148
        %v3233 = vadd.f32 %v337, %v2247
        %v3234 = vadd.f32 %v338, %v3151
        %v3235 = vadd.f32 %v339, %v2250
        %v3236 = vadd.f32 %v340, %v3154
        %v3237 = vadd.f32 %v341, %v2253
        %v3238 = vadd.f32 %v342, %v3157
        %v3239 = vadd.f32 %v343, %v2256
        %v3240 = vadd.f32 %v344, %v3160
        %v3241 = vadd.f32 %v345, %v2259
        %v3242 = vadd.f32 %v346, %v3163
        %v3243 = vadd.f32 %v347, %v2262
        %v3244 = vadd.f32 %v348, %v3166
        %v3245 = vadd.f32 %v349, %v2265
        %v3246 = vadd.f32 %v350, %v3169
        %v3247 = vadd.f32 %v351, %v2268
        %v3248 = vadd.f32 %v352, %v3172
        %v3249 = vadd.f32 %v353, %v2271
        %v3250 = vadd.f32 %v354, %v3175
        %v3251 = vadd.f32 %v355, %v2274
        %v3252 = vadd.f32 %v356, %v3178
        %v3253 = vadd.f32 %v357, %v2277
        %v3254 = vadd.f32 %v358, %v3181
        %v3255 = vadd.f32 %v359, %v2280
        %v3256 = vadd.f32 %v360, %v3184
        %v3257 = vadd.f32 %v361, %v2283
        %v3258 = vadd.f32 %v362, %v3187
        %v3259 = vadd.f32 %v363, %v2286
        %v3260 = vadd.f32 %v364, %v3190
        %v3261 = vadd.f32 %v365, %v2289
        %v3262 = vadd.f32 %v366, %v3193
        %v3263 = vadd.f32 %v367, %v2292
        %v3264 = vadd.f32 %v368, %v3196
        %v3265 = vadd.f32 %v369, %v2295
        %v3266 = vadd.f32 %v370, %v3199
        %v3267 = vadd.f32 %v371, %v2298
        %v3268 = vadd.f32 %v372, %v3202
        %v3269 = vadd.f32 %v373, %v2301
        %v3270 = vadd.f32 %v374, %v3205
        %3271 = vst [vmem:[%s236] sm:$0xff] %v3207
        %3272 = vst [vmem:[%s236 + $0x8] sm:$0xff] %v3208
        %3273 = vst [vmem:[%s236 + $0x10] sm:$0xff] %v3209
        %3274 = vst [vmem:[%s236 + $0x18] sm:$0xff] %v3210
        %3275 = vst [vmem:[%s236 + $0x20] sm:$0xff] %v3211
        %3276 = vst [vmem:[%s236 + $0x28] sm:$0xff] %v3212
        %3277 = vst [vmem:[%s236 + $0x30] sm:$0xff] %v3213
        %3278 = vst [vmem:[%s236 + $0x38] sm:$0xff] %v3214
        %3279 = vst [vmem:[%s236 + $0x40] sm:$0xff] %v3215
        %3280 = vst [vmem:[%s236 + $0x48] sm:$0xff] %v3216
        %3281 = vst [vmem:[%s236 + $0x50] sm:$0xff] %v3217
        %3282 = vst [vmem:[%s236 + $0x58] sm:$0xff] %v3218
        %3283 = vst [vmem:[%s236 + $0x60] sm:$0xff] %v3219
        %3284 = vst [vmem:[%s236 + $0x68] sm:$0xff] %v3220
        %3285 = vst [vmem:[%s236 + $0x70] sm:$0xff] %v3221
        %3286 = vst [vmem:[%s236 + $0x78] sm:$0xff] %v3222
        %3287 = vst [vmem:[%s236 + $0x80] sm:$0xff] %v3223
        %3288 = vst [vmem:[%s236 + $0x88] sm:$0xff] %v3224
        %3289 = vst [vmem:[%s236 + $0x90] sm:$0xff] %v3225
        %3290 = vst [vmem:[%s236 + $0x98] sm:$0xff] %v3226
        %3291 = vst [vmem:[%s236 + $0xa0] sm:$0xff] %v3227
        %3292 = vst [vmem:[%s236 + $0xa8] sm:$0xff] %v3228
        %3293 = vst [vmem:[%s236 + $0xb0] sm:$0xff] %v3229
        %3294 = vst [vmem:[%s236 + $0xb8] sm:$0xff] %v3230
        %3295 = vst [vmem:[%s236 + $0xc0] sm:$0xff] %v3231
        %3296 = vst [vmem:[%s236 + $0xc8] sm:$0xff] %v3232
        %3297 = vst [vmem:[%s236 + $0xd0] sm:$0xff] %v3233
        %3298 = vst [vmem:[%s236 + $0xd8] sm:$0xff] %v3234
        %3299 = vst [vmem:[%s236 + $0xe0] sm:$0xff] %v3235
        %3300 = vst [vmem:[%s236 + $0xe8] sm:$0xff] %v3236
        %3301 = vst [vmem:[%s236 + $0xf0] sm:$0xff] %v3237
        %3302 = vst [vmem:[%s236 + $0xf8] sm:$0xff] %v3238
        %3303 = vst [vmem:[%s236 + $0x100] sm:$0xff] %v3239
        %3304 = vst [vmem:[%s236 + $0x108] sm:$0xff] %v3240
        %3305 = vst [vmem:[%s236 + $0x110] sm:$0xff] %v3241
        %3306 = vst [vmem:[%s236 + $0x118] sm:$0xff] %v3242
        %3307 = vst [vmem:[%s236 + $0x120] sm:$0xff] %v3243
        %3308 = vst [vmem:[%s236 + $0x128] sm:$0xff] %v3244
        %3309 = vst [vmem:[%s236 + $0x130] sm:$0xff] %v3245
        %3310 = vst [vmem:[%s236 + $0x138] sm:$0xff] %v3246
        %3311 = vst [vmem:[%s236 + $0x140] sm:$0xff] %v3247
        %3312 = vst [vmem:[%s236 + $0x148] sm:$0xff] %v3248
        %3313 = vst [vmem:[%s236 + $0x150] sm:$0xff] %v3249
        %3314 = vst [vmem:[%s236 + $0x158] sm:$0xff] %v3250
        %3315 = vst [vmem:[%s236 + $0x160] sm:$0xff] %v3251
        %3316 = vst [vmem:[%s236 + $0x168] sm:$0xff] %v3252
        %3317 = vst [vmem:[%s236 + $0x170] sm:$0xff] %v3253
        %3318 = vst [vmem:[%s236 + $0x178] sm:$0xff] %v3254
        %3319 = vst [vmem:[%s236 + $0x180] sm:$0xff] %v3255
        %3320 = vst [vmem:[%s236 + $0x188] sm:$0xff] %v3256
        %3321 = vst [vmem:[%s236 + $0x190] sm:$0xff] %v3257
        %3322 = vst [vmem:[%s236 + $0x198] sm:$0xff] %v3258
        %3323 = vst [vmem:[%s236 + $0x1a0] sm:$0xff] %v3259
        %3324 = vst [vmem:[%s236 + $0x1a8] sm:$0xff] %v3260
        %3325 = vst [vmem:[%s236 + $0x1b0] sm:$0xff] %v3261
        %3326 = vst [vmem:[%s236 + $0x1b8] sm:$0xff] %v3262
        %3327 = vst [vmem:[%s236 + $0x1c0] sm:$0xff] %v3263
        %3328 = vst [vmem:[%s236 + $0x1c8] sm:$0xff] %v3264
        %3329 = vst [vmem:[%s236 + $0x1d0] sm:$0xff] %v3265
        %3330 = vst [vmem:[%s236 + $0x1d8] sm:$0xff] %v3266
        %3331 = vst [vmem:[%s236 + $0x1e0] sm:$0xff] %v3267
        %3332 = vst [vmem:[%s236 + $0x1e8] sm:$0xff] %v3268
        %3333 = vst [vmem:[%s236 + $0x1f0] sm:$0xff] %v3269
        %3334 = vst [vmem:[%s236 + $0x1f8] sm:$0xff] %v3270
        %s3335 = sand.u32 %s107, 1
        %s3336 = scalar_lea.sflag [#allocation4], %s3335
        %s3337 = sand.u32 %s107, 1
        %s3338 = smul.addr %s3337, 512
        %s3339 = scalar_lea.vmem [#allocation7], %s3338
        // Predicated region
        $region41: #{tpu_custom_call.1} parent=27 // pred_check
          %p3340 = pneg %p117
        $region42: #{tpu_custom_call.1} parent=27 // pred_check_branch
          %3342 = sbr.rel (%p3340) target = $region44
        $region43: #{tpu_custom_call.1} parent=27 // pred_region
          %s3343 = smul.u32 32, %s27
          %s3344 = smul.u32 2, %s28
          %3346 = vsyncadd %s3336, 0
          %s3347 = smul.addr %s3343, 2
          %s3348 = sadd.s32 %s3344, %s3347
          %s3349 = smul.addr %s3348, 8
          %s3350 = scalar_lea.hbm %s2, %s3349
          %s3351 = sshll.u32 %s3339, 4
          %s3352 = int_to_ptr.vmem [resolvable:$true] %s3351
          %s3353 = sshll.u32 %s3350, 4
          %s3354 = int_to_ptr.hbm [resolvable:$true] %s3353
          %3359 = dma.vmem_to_hbm [thread:$0]  %s3352, 8192, %s3354, %s3336, 256, 256, 16
        $region44: #{tpu_custom_call.1} parent=27 // pred_fallthru
          _
      $region28: #{tpu_custom_call.1} parent=5 // pred_fallthru
        _
      %p3360 = scmp.le.s32.totalorder 2, %s17
      // Predicated region
      $region45: #{tpu_custom_call.1} parent=5 // pred_check
        %p3361 = pneg %p3360
      $region46: #{tpu_custom_call.1} parent=5 // pred_check_branch
        %3363 = sbr.rel (%p3361) target = $region48
      $region47: #{tpu_custom_call.1} parent=5 // pred_region
        %s3364 = ssub.s32 %s17, 2
        // Predicated region
        $region49: #{tpu_custom_call.1} parent=47 // pred_check
          %p3365 = pneg %p123
        $region50: #{tpu_custom_call.1} parent=47 // pred_check_branch
          %3367 = sbr.rel (%p3365) target = $region52
        $region51: #{tpu_custom_call.1} parent=47 // pred_region
          %s3368 = sand.u32 %s108, 1
          %s3369 = scalar_lea.sflag [#allocation4], %s3368
          %s3370 = sand.u32 %s108, 1
          %s3371 = smul.addr %s3370, 512
          %s3372 = scalar_lea.vmem [#allocation7], %s3371
          %3374 = dma.done %s3369, 8192
        $region52: #{tpu_custom_call.1} parent=47 // pred_fallthru
          _
      $region48: #{tpu_custom_call.1} parent=5 // pred_fallthru
        _
    $region6: #{tpu_custom_call.1} parent=1 // loop_footer
      %s21 = sadd.s32 1, %s17
    $region7: #{tpu_custom_call.1} parent=1 // loop_footer_branch
      %16 = sbr.rel target = $region3
    $region8: #{tpu_custom_call.1} parent=1 // loop_exit
      _
    %3375 = vsyncpa [#allocation3], 1
    %s3376 = scalar_lea.sflag [#allocation3], 1
    %3377 = vsyncpa %s3376, 1
    %3378 = vsyncpa [#allocation6], 1
    %s3379 = scalar_lea.sflag [#allocation6], 1
    %3380 = vsyncpa %s3379, 1
    %3381 = vsyncpa [#allocation4], 1
    %s3382 = scalar_lea.sflag [#allocation4], 1
    %3383 = vsyncpa %s3382, 1

</llo_original>
